<compile_context>
chip_gen: v7x
topology: tpu7x:2x2x1
jax: 0.10.0
libtpu: 0.0.40
codegen_flags: <defaults>
</compile_context>

<pallas_src>
from functools import partial

import jax
import jax.numpy as jnp
from jax.experimental import pallas as pl
from jax.experimental.pallas import tpu as pltpu


# ----------------------------------------------------------------------------
# Constants of the fused network
# ----------------------------------------------------------------------------
CP = 128                    # all channel dims padded to 128 lanes (vreg width)
K = 5                       # conv taps (1x5 kernels)
PAD = 2                     # conv padding
ACTS = ("tanh", "tanh", "prelu", "tanh", "prelu", "prelu")   # e1,e2,e3,d1,d2,d3
POOLS = ((2, 2), (4, 2), (2, 2))                             # (kernel, stride)


def _pool_chain_lengths(L):
    lens = [L]
    for k, s in POOLS:
        lens.append((lens[-1] - k) // s + 1)
    return lens          # [L, l1, l2, l_enc]


# ----------------------------------------------------------------------------
# Single fused Pallas kernel: whole CNN_AE backbone + cluster heads, per sample
# ----------------------------------------------------------------------------
def _fused_model_kernel(x_ref, linw_ref, linb_ref, convw_ref, s_ref, t_ref,
                        a_ref, headw_ref, headb_ref,
                        enc_ref, dec_ref, logit_ref,
                        sa, sb, sc):
    f32 = jnp.float32
    bf16 = jnp.bfloat16
    scr = (sa, sb, sc)

    # Zero the activation slabs once; halo rows [0,PAD) and [PAD+len, end) then
    # stay zero for the whole kernel (we only ever write rows [PAD, PAD+len)).
    for ref in scr:
        ref[...] = jnp.zeros(ref.shape, ref.dtype)

    # ---- 5-tap conv (+ folded BN + activation) as ONE im2col MXU matmul.
    # The 5 shifted windows are read straight from the padded scratch ref.
    def conv_bn_act(scratch, lc, layer):
        cols = jnp.concatenate(
            [scratch[pl.ds(k, lc), :] for k in range(K)], axis=1)      # (lc, 5*CP)
        y = jnp.dot(cols.astype(bf16), convw_ref[layer],
                    preferred_element_type=f32)                        # MXU, f32 acc
        y = y * s_ref[pl.ds(layer, 1), :] + t_ref[pl.ds(layer, 1), :]  # BN (eval)
        if ACTS[layer] == "tanh":
            return jnp.tanh(y)                                         # EUP
        a = a_ref[pl.ds(layer, 1), :]
        return jnp.where(y >= 0.0, y, a * y)                           # PReLU

    # ---- MaxPool1d(return_indices): one strided ref read per tap, running max
    # and tap-relative argmax (strict '>' keeps the first max, torch-CPU style).
    def max_pool(scratch, lc, kernel, stride):
        p_out = (lc - kernel) // stride + 1
        m = scratch[pl.ds(PAD, p_out, stride=stride), :]
        idx = jnp.zeros((p_out, CP), jnp.int32)
        for j in range(1, kernel):
            wj = scratch[pl.ds(PAD + j, p_out, stride=stride), :]
            gt = wj > m
            idx = jnp.where(gt, jnp.int32(j), idx)
            m = jnp.maximum(m, wj)
        return m, idx

    # ---- MaxUnpool1d: scatter v to each window's winner tap with `kernel`
    # strided masked stores into the next conv's padded scratch.
    def max_unpool(scratch, v, idx, kernel, stride, l_out):
        p_in = v.shape[0]
        if kernel == stride:
            # Non-overlapping windows: the tap row-sets tile [PAD, PAD+l_out).
            for j in range(kernel):
                scratch[pl.ds(PAD + j, p_in, stride=stride), :] = (
                    jnp.where(idx == j, v, 0.0))
        else:
            # Overlapping windows: zero the region, masked RMW per tap; descending
            # tap order makes the later window win at colliding rows (torch-style).
            scratch[pl.ds(PAD, l_out), :] = jnp.zeros((l_out, CP), f32)
            for j in reversed(range(kernel)):
                rows = scratch[pl.ds(PAD + j, p_in, stride=stride), :]
                scratch[pl.ds(PAD + j, p_in, stride=stride), :] = (
                    jnp.where(idx == j, v, rows))

    # ============================ encoder =====================================
    x = x_ref[0]                                                       # (L, cin)
    h = jnp.dot(x, linw_ref[...], preferred_element_type=f32) + linb_ref[...]

    lens, idxs = [], []
    for i in range(3):
        pk, ps = POOLS[i]
        lc = h.shape[0]
        scr[i][pl.ds(PAD, lc), :] = h          # stage conv input (halo already 0)
        h = conv_bn_act(scr[i], lc, i)
        # Dropout(0.35): identity in eval mode.
        scr[i][pl.ds(PAD, lc), :] = h          # stage conv output for the pool
        lens.append(lc)
        h, idx = max_pool(scr[i], lc, pk, ps)
        idxs.append(idx)
    enc = h                                    # (l_enc, CP)
    enc_ref[0] = enc                           # lane-dense (l_enc, 128) store

    # ============================ decoder =====================================
    # NOTE: ConvTranspose2d(k=(1,5), s=1, p=2) == 5-tap conv with pad 2 for these
    # synthetic weights; real torch decoder weights would additionally need a tap
    # flip and an (in,out)-channel transpose when packed into conv_w.
    d = enc
    for i in range(3):
        e = 2 - i                              # encoder stage being inverted
        pk, ps = POOLS[e]
        max_unpool(scr[e], d, idxs[e], pk, ps, lens[e])
        d = conv_bn_act(scr[e], lens[e], 3 + i)
    dec_ref[0] = d                             # lane-dense (L, 128) slab

    # ===================== cluster heads (nn.Linear) ==========================
    # flatten(enc) is a single lane-concat of vreg-aligned rows, then ONE MXU
    # matmul of depth l_enc*CP against the pre-flattened, lane-packed head_w.
    l_enc = enc.shape[0]
    enc_flat = jnp.concatenate([enc[j:j + 1, :] for j in range(l_enc)], axis=1)
    logit_ref[0] = headb_ref[...] + jnp.dot(
        enc_flat.astype(bf16), headw_ref[...], preferred_element_type=f32)


def _fused_model_call(x, params):
    B, L, cin = x.shape
    lens = _pool_chain_lengths(L)
    l_enc = lens[3]
    nhp = params["head_b"].shape[1]
    f32 = jnp.float32

    def rows(l):  # 8-sublane-aligned scratch height for a length-l activation
        return ((l + 2 * PAD + 7) // 8) * 8

    out_shape = (
        jax.ShapeDtypeStruct((B, l_enc, CP), f32),    # encoder features
        jax.ShapeDtypeStruct((B, L, CP), f32),        # decoded (channel-padded slab)
        jax.ShapeDtypeStruct((B, 1, nhp), f32),       # head logits (lane-packed)
    )
    in_specs = [
        pl.BlockSpec((1, L, cin), lambda b: (b, 0, 0)),
        pl.BlockSpec(params["lin_w"].shape, lambda b: (0, 0)),
        pl.BlockSpec(params["lin_b"].shape, lambda b: (0, 0)),
        pl.BlockSpec(params["conv_w"].shape, lambda b: (0, 0, 0)),
        pl.BlockSpec(params["bn_s"].shape, lambda b: (0, 0)),
        pl.BlockSpec(params["bn_t"].shape, lambda b: (0, 0)),
        pl.BlockSpec(params["alpha"].shape, lambda b: (0, 0)),
        pl.BlockSpec(params["head_w"].shape, lambda b: (0, 0)),
        pl.BlockSpec(params["head_b"].shape, lambda b: (0, 0)),
    ]
    out_specs = (
        pl.BlockSpec((1, l_enc, CP), lambda b: (b, 0, 0)),
        pl.BlockSpec((1, L, CP), lambda b: (b, 0, 0)),
        pl.BlockSpec((1, 1, nhp), lambda b: (b, 0, 0)),
    )
    # TODO(synk): for B >> 2, fold several individually-haloed samples into the
    # sublane (M) dim per grid step to fill the 128/256 MXU rows.
    return pl.pallas_call(
        _fused_model_kernel,
        out_shape=out_shape,
        grid=(B,),
        in_specs=in_specs,
        out_specs=out_specs,
        scratch_shapes=[pltpu.VMEM((rows(lens[0]), CP), f32),
                        pltpu.VMEM((rows(lens[1]), CP), f32),
                        pltpu.VMEM((rows(lens[2]), CP), f32)],
        compiler_params=pltpu.CompilerParams(
            dimension_semantics=("parallel",)),       # v7x: one sample per TC
    )(x, params["lin_w"], params["lin_b"], params["conv_w"],
      params["bn_s"], params["bn_t"], params["alpha"],
      params["head_w"], params["head_b"])


# ----------------------------------------------------------------------------
# ClusteringModel forward (forward_pass dispatch as in the PyTorch module)
# ----------------------------------------------------------------------------
@partial(jax.jit, static_argnames=("n_channels", "nclusters", "nheads",
                                   "forward_pass"))
def clustering_model_forward(x, params, *, n_channels=3, nclusters=10,
                             nheads=1, forward_pass="default"):
    if forward_pass == "head":
        # x is already a (B, backbone_dim) feature batch.
        # TODO(synk): head-only mode is one tiny GEMM; left to XLA rather than
        # paying a dedicated Pallas launch.
        logits = x @ params["head_w"].astype(jnp.float32) + params["head_b"]
        return [logits[:, h * 128:h * 128 + nclusters] for h in range(nheads)]

    enc, dec_pad, logits_pad = _fused_model_call(x, params)
    B = x.shape[0]
    # NOTE: features are position-major (L,C) flatten of the padded encoder slab;
    # self-consistent with the synthetic head weights, but real torch checkpoints
    # flatten the (B,C,L) tensor channel-major and would need a permutation.
    features = enc.reshape(B, -1)                              # (B, L_enc*128)
    heads = [logits_pad[:, 0, h * 128:h * 128 + nclusters] for h in range(nheads)]
    x_encoded = jnp.transpose(enc, (0, 2, 1))                  # (B, C, L_enc) torch NCL
    x_decoded = dec_pad[:, :, :n_channels]                     # (B, L, n_channels)

    if forward_pass == "default":
        return heads
    elif forward_pass == "backbone":
        return features
    elif forward_pass == "return_all":
        return {"features": features, "output": heads,
                "x_encoded": x_encoded, "x_decoded": x_decoded}
    else:
        raise ValueError("Invalid forward pass {}".format(forward_pass))


# ----------------------------------------------------------------------------
# Deterministic synthetic parameters (channel-padded to 128 lanes, BN folded,
# MXU operands stored in bf16)
# ----------------------------------------------------------------------------
def init_params(key, n_channels=3, out_channels=128, nclusters=10, nheads=1, L=20):
    assert nclusters <= 128 and nheads >= 1 and out_channels <= CP
    c2 = 2 * n_channels
    cins = (c2, 32, 64, out_channels, 64, 32)
    couts = (32, 64, out_channels, 64, 32, n_channels)
    prelu_layers = (2, 4, 5)                         # e3, d2, d3
    keys = iter(jax.random.split(key, 32))

    def bn_fold(k, c, eps=1e-5):
        k1, k2, k3, k4 = jax.random.split(k, 4)
        gamma = jax.random.uniform(k1, (c,), minval=0.5, maxval=1.5)
        beta = 0.1 * jax.random.normal(k2, (c,))
        mean = 0.1 * jax.random.normal(k3, (c,))
        var = jax.random.uniform(k4, (c,), minval=0.5, maxval=1.5)
        s = gamma / jnp.sqrt(var + eps)
        return s, beta - mean * s

    # Linear(n_channels -> 2*n_channels), output channels padded to 128 lanes.
    lin_w = jnp.zeros((n_channels, CP), jnp.float32)
    lin_b = jnp.zeros((1, CP), jnp.float32)
    lin_w = lin_w.at[:, :c2].set(0.2 * jax.random.normal(next(keys), (n_channels, c2)))
    lin_b = lin_b.at[:, :c2].set(0.1 * jax.random.normal(next(keys), (1, c2)))

    conv_w = jnp.zeros((6, K * CP, CP), jnp.float32)     # im2col-ready (K*CP, CP)
    bn_s = jnp.ones((6, CP), jnp.float32)                # padded channels stay 0
    bn_t = jnp.zeros((6, CP), jnp.float32)
    alpha = jnp.zeros((6, CP), jnp.float32)
    for i, (ci, co) in enumerate(zip(cins, couts)):
        w = 0.1 * jax.random.normal(next(keys), (K, ci, co), jnp.float32)
        w_pad = jnp.zeros((K, CP, CP), jnp.float32).at[:, :ci, :co].set(w)
        conv_w = conv_w.at[i].set(w_pad.reshape(K * CP, CP))
        s, t = bn_fold(next(keys), co)
        bn_s = bn_s.at[i, :co].set(s)
        bn_t = bn_t.at[i, :co].set(t)
        if i in prelu_layers:
            alpha = alpha.at[i, :co].set(0.25)           # torch PReLU default init

    l_enc = _pool_chain_lengths(L)[3]

    # Cluster heads: nn.Linear(backbone_dim -> nclusters) per head, packed along
    # 128-lane output slots and pre-flattened to (l_enc*CP, nheads*128) so the
    # feature flatten + head is ONE matmul in the kernel.
    nhp = nheads * 128
    head_w = jnp.zeros((l_enc, CP, nhp), jnp.float32)
    head_b = jnp.zeros((1, nhp), jnp.float32)
    for hd in range(nheads):
        w = 0.05 * jax.random.normal(next(keys), (l_enc, out_channels, nclusters),
                                     jnp.float32)
        b = 0.05 * jax.random.normal(next(keys), (nclusters,), jnp.float32)
        head_w = head_w.at[:, :out_channels, hd * 128:hd * 128 + nclusters].set(w)
        head_b = head_b.at[0, hd * 128:hd * 128 + nclusters].set(b)

    return {"lin_w": lin_w, "lin_b": lin_b,
            "conv_w": conv_w.astype(jnp.bfloat16),
            "bn_s": bn_s, "bn_t": bn_t, "alpha": alpha,
            "head_w": head_w.reshape(l_enc * CP, nhp).astype(jnp.bfloat16),
            "head_b": head_b}


# ----------------------------------------------------------------------------
if __name__ == "__main__":
    B, L, n_channels, out_channels = 2, 20, 3, 128
    nclusters, nheads = 10, 1

    key = jax.random.PRNGKey(0)
    k_param, k_x = jax.random.split(key)
    params = init_params(k_param, n_channels=n_channels, out_channels=out_channels,
                         nclusters=nclusters, nheads=nheads, L=L)
    x = jax.random.normal(k_x, (B, L, n_channels), jnp.float32)

    out = clustering_model_forward(x, params, n_channels=n_channels,
                                   nclusters=nclusters, nheads=nheads,
                                   forward_pass="return_all")
    jax.block_until_ready(out)

    feats = out["features"]
    heads = out["output"]
    x_encoded = out["x_encoded"]
    x_decoded = out["x_decoded"]

    assert x_encoded.shape == (B, out_channels, 2), x_encoded.shape
    assert x_decoded.shape == (B, L, n_channels), x_decoded.shape
    assert feats.shape == (B, 2 * out_channels), feats.shape
    assert len(heads) == nheads and heads[0].shape == (B, nclusters), heads[0].shape
    ok = all(bool(jnp.all(jnp.isfinite(v)))
             for v in (x_encoded, x_decoded, feats, heads[0]))
    assert ok
    print("KERNEL_OK")
</pallas_src>

<mosaic_0001>
module attributes {stable_mosaic.version = 11 : i64} {
  func.func @_fused_model_kernel(%arg0: i32, %arg1: memref<1x20x3xf32, #tpu.memory_space<vmem>>, %arg2: memref<3x128xf32, #tpu.memory_space<vmem>>, %arg3: memref<1x128xf32, #tpu.memory_space<vmem>>, %arg4: memref<6x640x128xbf16, #tpu.memory_space<vmem>>, %arg5: memref<6x128xf32, #tpu.memory_space<vmem>>, %arg6: memref<6x128xf32, #tpu.memory_space<vmem>>, %arg7: memref<6x128xf32, #tpu.memory_space<vmem>>, %arg8: memref<256x128xbf16, #tpu.memory_space<vmem>>, %arg9: memref<1x128xf32, #tpu.memory_space<vmem>>, %arg10: memref<1x2x128xf32, #tpu.memory_space<vmem>>, %arg11: memref<1x20x128xf32, #tpu.memory_space<vmem>>, %arg12: memref<1x1x128xf32, #tpu.memory_space<vmem>>, %arg13: memref<24x128xf32, #tpu.memory_space<vmem>>, %arg14: memref<16x128xf32, #tpu.memory_space<vmem>>, %arg15: memref<8x128xf32, #tpu.memory_space<vmem>>) attributes {dimension_semantics = [#tpu.dimension_semantics<parallel>], iteration_bounds = array<i64: 2>, scalar_prefetch = 0 : i64, scratch_operands = 3 : i64, tpu.core_type = #tpu.core_type<tc>, window_params = [{transform_indices = @transform_0, window_bounds = array<i64: 1, 20, 3>}, {pipeline_mode = #tpu.pipeline_mode<synchronous>, transform_indices = @transform_1, window_bounds = array<i64: 3, 128>}, {pipeline_mode = #tpu.pipeline_mode<synchronous>, transform_indices = @transform_2, window_bounds = array<i64: 1, 128>}, {pipeline_mode = #tpu.pipeline_mode<synchronous>, transform_indices = @transform_3, window_bounds = array<i64: 6, 640, 128>}, {pipeline_mode = #tpu.pipeline_mode<synchronous>, transform_indices = @transform_4, window_bounds = array<i64: 6, 128>}, {pipeline_mode = #tpu.pipeline_mode<synchronous>, transform_indices = @transform_5, window_bounds = array<i64: 6, 128>}, {pipeline_mode = #tpu.pipeline_mode<synchronous>, transform_indices = @transform_6, window_bounds = array<i64: 6, 128>}, {pipeline_mode = #tpu.pipeline_mode<synchronous>, transform_indices = @transform_7, window_bounds = array<i64: 256, 128>}, {pipeline_mode = #tpu.pipeline_mode<synchronous>, transform_indices = @transform_8, window_bounds = array<i64: 1, 128>}, {transform_indices = @transform_9, window_bounds = array<i64: 1, 2, 128>}, {transform_indices = @transform_10, window_bounds = array<i64: 1, 20, 128>}, {transform_indices = @transform_11, window_bounds = array<i64: 1, 1, 128>}]} {
    %cst = arith.constant 0.000000e+00 : f32
    %0 = vector.broadcast %cst : f32 to vector<24x128xf32>
    %c0 = arith.constant 0 : index
    %c0_0 = arith.constant 0 : index
    %1 = vector.load %arg13[%c0, %c0_0] : memref<24x128xf32, #tpu.memory_space<vmem>>, vector<24x128xf32>
    tpu.vector_store %arg13[%c0, %c0_0], %0 {strides = array<i32>} : memref<24x128xf32, #tpu.memory_space<vmem>>, vector<24x128xf32>,
    %cst_1 = arith.constant 0.000000e+00 : f32
    %2 = vector.broadcast %cst_1 : f32 to vector<16x128xf32>
    %c0_2 = arith.constant 0 : index
    %c0_3 = arith.constant 0 : index
    %3 = vector.load %arg14[%c0_2, %c0_3] : memref<16x128xf32, #tpu.memory_space<vmem>>, vector<16x128xf32>
    tpu.vector_store %arg14[%c0_2, %c0_3], %2 {strides = array<i32>} : memref<16x128xf32, #tpu.memory_space<vmem>>, vector<16x128xf32>,
    %cst_4 = arith.constant 0.000000e+00 : f32
    %4 = vector.broadcast %cst_4 : f32 to vector<8x128xf32>
    %c0_5 = arith.constant 0 : index
    %c0_6 = arith.constant 0 : index
    %5 = vector.load %arg15[%c0_5, %c0_6] : memref<8x128xf32, #tpu.memory_space<vmem>>, vector<8x128xf32>
    tpu.vector_store %arg15[%c0_5, %c0_6], %4 {strides = array<i32>} : memref<8x128xf32, #tpu.memory_space<vmem>>, vector<8x128xf32>,
    %c0_7 = arith.constant 0 : index
    %c0_8 = arith.constant 0 : index
    %c0_9 = arith.constant 0 : index
    %6 = vector.load %arg1[%c0_7, %c0_8, %c0_9] : memref<1x20x3xf32, #tpu.memory_space<vmem>>, vector<1x20x3xf32>
    %7 = vector.shape_cast %6 : vector<1x20x3xf32> to vector<20x3xf32>
    %c0_10 = arith.constant 0 : index
    %c0_11 = arith.constant 0 : index
    %8 = vector.load %arg2[%c0_10, %c0_11] : memref<3x128xf32, #tpu.memory_space<vmem>>, vector<3x128xf32>
    %cst_12 = arith.constant dense<0.000000e+00> : vector<20x128xf32>
    %9 = tpu.matmul %7, %8, %cst_12 {dimension_numbers = #tpu.dot_dimension_numbers<[1], [0], [0], [1], [0, 0, 1, 1], [], []>} : vector<20x3xf32>, vector<3x128xf32>, vector<20x128xf32> -> vector<20x128xf32>
    %c0_13 = arith.constant 0 : index
    %c0_14 = arith.constant 0 : index
    %10 = vector.load %arg3[%c0_13, %c0_14] : memref<1x128xf32, #tpu.memory_space<vmem>>, vector<1x128xf32>
    %11 = vector.broadcast %10 : vector<1x128xf32> to vector<20x128xf32>
    %12 = arith.addf %9, %11 : vector<20x128xf32>
    %c2 = arith.constant 2 : index
    %c0_15 = arith.constant 0 : index
    %13 = vector.load %arg13[%c2, %c0_15] : memref<24x128xf32, #tpu.memory_space<vmem>>, vector<20x128xf32>
    tpu.vector_store %arg13[%c2, %c0_15], %12 {strides = array<i32>} : memref<24x128xf32, #tpu.memory_space<vmem>>, vector<20x128xf32>,
    %c0_16 = arith.constant 0 : index
    %c0_17 = arith.constant 0 : index
    %14 = vector.load %arg13[%c0_16, %c0_17] : memref<24x128xf32, #tpu.memory_space<vmem>>, vector<20x128xf32>
    %c1 = arith.constant 1 : index
    %c0_18 = arith.constant 0 : index
    %15 = vector.load %arg13[%c1, %c0_18] : memref<24x128xf32, #tpu.memory_space<vmem>>, vector<20x128xf32>
    %c2_19 = arith.constant 2 : index
    %c0_20 = arith.constant 0 : index
    %16 = vector.load %arg13[%c2_19, %c0_20] : memref<24x128xf32, #tpu.memory_space<vmem>>, vector<20x128xf32>
    %c3 = arith.constant 3 : index
    %c0_21 = arith.constant 0 : index
    %17 = vector.load %arg13[%c3, %c0_21] : memref<24x128xf32, #tpu.memory_space<vmem>>, vector<20x128xf32>
    %c4 = arith.constant 4 : index
    %c0_22 = arith.constant 0 : index
    %18 = vector.load %arg13[%c4, %c0_22] : memref<24x128xf32, #tpu.memory_space<vmem>>, vector<20x128xf32>
    %19 = tpu.concatenate %14, %15, %16, %17, %18 in 1 : vector<20x128xf32>, vector<20x128xf32>, vector<20x128xf32>, vector<20x128xf32>, vector<20x128xf32> -> vector<20x640xf32>
    %20 = arith.truncf %19 : vector<20x640xf32> to vector<20x640xbf16>
    %c0_23 = arith.constant 0 : index
    %c0_24 = arith.constant 0 : index
    %c0_25 = arith.constant 0 : index
    %21 = vector.load %arg4[%c0_23, %c0_24, %c0_25] : memref<6x640x128xbf16, #tpu.memory_space<vmem>>, vector<1x640x128xbf16>
    %22 = vector.shape_cast %21 : vector<1x640x128xbf16> to vector<640x128xbf16>
    %cst_26 = arith.constant dense<0.000000e+00> : vector<20x128xf32>
    %23 = tpu.matmul %20, %22, %cst_26 {dimension_numbers = #tpu.dot_dimension_numbers<[1], [0], [0], [1], [0, 0, 1, 1], [], []>} : vector<20x640xbf16>, vector<640x128xbf16>, vector<20x128xf32> -> vector<20x128xf32>
    %c0_27 = arith.constant 0 : index
    %c0_28 = arith.constant 0 : index
    %24 = vector.load %arg5[%c0_27, %c0_28] : memref<6x128xf32, #tpu.memory_space<vmem>>, vector<1x128xf32>
    %25 = vector.broadcast %24 : vector<1x128xf32> to vector<20x128xf32>
    %26 = arith.mulf %23, %25 : vector<20x128xf32>
    %c0_29 = arith.constant 0 : index
    %c0_30 = arith.constant 0 : index
    %27 = vector.load %arg6[%c0_29, %c0_30] : memref<6x128xf32, #tpu.memory_space<vmem>>, vector<1x128xf32>
    %28 = vector.broadcast %27 : vector<1x128xf32> to vector<20x128xf32>
    %29 = arith.addf %26, %28 : vector<20x128xf32>
    %30 = math.tanh %29 : vector<20x128xf32>
    %c2_31 = arith.constant 2 : index
    %c0_32 = arith.constant 0 : index
    %31 = vector.load %arg13[%c2_31, %c0_32] : memref<24x128xf32, #tpu.memory_space<vmem>>, vector<20x128xf32>
    tpu.vector_store %arg13[%c2_31, %c0_32], %30 {strides = array<i32>} : memref<24x128xf32, #tpu.memory_space<vmem>>, vector<20x128xf32>,
    %c2_33 = arith.constant 2 : index
    %c0_34 = arith.constant 0 : index
    %32 = tpu.strided_load %arg13[%c2_33, %c0_34] {strides = array<i32: 2, 1>} : memref<24x128xf32, #tpu.memory_space<vmem>>, vector<10x128xf32>
    %c0_i32 = arith.constant 0 : i32
    %33 = vector.broadcast %c0_i32 : i32 to vector<10x128xi32>
    %c3_35 = arith.constant 3 : index
    %c0_36 = arith.constant 0 : index
    %34 = tpu.strided_load %arg13[%c3_35, %c0_36] {strides = array<i32: 2, 1>} : memref<24x128xf32, #tpu.memory_space<vmem>>, vector<10x128xf32>
    %35 = arith.cmpf ogt, %34, %32 : vector<10x128xf32>
    %c1_i32 = arith.constant 1 : i32
    %36 = vector.broadcast %c1_i32 : i32 to vector<10x128xi32>
    %37 = arith.select %35, %36, %33 : vector<10x128xi1>, vector<10x128xi32>
    %38 = arith.maximumf %32, %34 : vector<10x128xf32>
    %c2_37 = arith.constant 2 : index
    %c0_38 = arith.constant 0 : index
    %39 = vector.load %arg14[%c2_37, %c0_38] : memref<16x128xf32, #tpu.memory_space<vmem>>, vector<10x128xf32>
    tpu.vector_store %arg14[%c2_37, %c0_38], %38 {strides = array<i32>} : memref<16x128xf32, #tpu.memory_space<vmem>>, vector<10x128xf32>,
    %c0_39 = arith.constant 0 : index
    %c0_40 = arith.constant 0 : index
    %40 = vector.load %arg14[%c0_39, %c0_40] : memref<16x128xf32, #tpu.memory_space<vmem>>, vector<10x128xf32>
    %c1_41 = arith.constant 1 : index
    %c0_42 = arith.constant 0 : index
    %41 = vector.load %arg14[%c1_41, %c0_42] : memref<16x128xf32, #tpu.memory_space<vmem>>, vector<10x128xf32>
    %c2_43 = arith.constant 2 : index
    %c0_44 = arith.constant 0 : index
    %42 = vector.load %arg14[%c2_43, %c0_44] : memref<16x128xf32, #tpu.memory_space<vmem>>, vector<10x128xf32>
    %c3_45 = arith.constant 3 : index
    %c0_46 = arith.constant 0 : index
    %43 = vector.load %arg14[%c3_45, %c0_46] : memref<16x128xf32, #tpu.memory_space<vmem>>, vector<10x128xf32>
    %c4_47 = arith.constant 4 : index
    %c0_48 = arith.constant 0 : index
    %44 = vector.load %arg14[%c4_47, %c0_48] : memref<16x128xf32, #tpu.memory_space<vmem>>, vector<10x128xf32>
    %45 = tpu.concatenate %40, %41, %42, %43, %44 in 1 : vector<10x128xf32>, vector<10x128xf32>, vector<10x128xf32>, vector<10x128xf32>, vector<10x128xf32> -> vector<10x640xf32>
    %46 = arith.truncf %45 : vector<10x640xf32> to vector<10x640xbf16>
    %c1_49 = arith.constant 1 : index
    %c0_50 = arith.constant 0 : index
    %c0_51 = arith.constant 0 : index
    %47 = vector.load %arg4[%c1_49, %c0_50, %c0_51] : memref<6x640x128xbf16, #tpu.memory_space<vmem>>, vector<1x640x128xbf16>
    %48 = vector.shape_cast %47 : vector<1x640x128xbf16> to vector<640x128xbf16>
    %cst_52 = arith.constant dense<0.000000e+00> : vector<10x128xf32>
    %49 = tpu.matmul %46, %48, %cst_52 {dimension_numbers = #tpu.dot_dimension_numbers<[1], [0], [0], [1], [0, 0, 1, 1], [], []>} : vector<10x640xbf16>, vector<640x128xbf16>, vector<10x128xf32> -> vector<10x128xf32>
    %c1_53 = arith.constant 1 : index
    %c0_54 = arith.constant 0 : index
    %50 = vector.load %arg5[%c1_53, %c0_54] : memref<6x128xf32, #tpu.memory_space<vmem>>, vector<1x128xf32>
    %51 = vector.broadcast %50 : vector<1x128xf32> to vector<10x128xf32>
    %52 = arith.mulf %49, %51 : vector<10x128xf32>
    %c1_55 = arith.constant 1 : index
    %c0_56 = arith.constant 0 : index
    %53 = vector.load %arg6[%c1_55, %c0_56] : memref<6x128xf32, #tpu.memory_space<vmem>>, vector<1x128xf32>
    %54 = vector.broadcast %53 : vector<1x128xf32> to vector<10x128xf32>
    %55 = arith.addf %52, %54 : vector<10x128xf32>
    %56 = math.tanh %55 : vector<10x128xf32>
    %c2_57 = arith.constant 2 : index
    %c0_58 = arith.constant 0 : index
    %57 = vector.load %arg14[%c2_57, %c0_58] : memref<16x128xf32, #tpu.memory_space<vmem>>, vector<10x128xf32>
    tpu.vector_store %arg14[%c2_57, %c0_58], %56 {strides = array<i32>} : memref<16x128xf32, #tpu.memory_space<vmem>>, vector<10x128xf32>,
    %c2_59 = arith.constant 2 : index
    %c0_60 = arith.constant 0 : index
    %58 = tpu.strided_load %arg14[%c2_59, %c0_60] {strides = array<i32: 2, 1>} : memref<16x128xf32, #tpu.memory_space<vmem>>, vector<4x128xf32>
    %c0_i32_61 = arith.constant 0 : i32
    %59 = vector.broadcast %c0_i32_61 : i32 to vector<4x128xi32>
    %c3_62 = arith.constant 3 : index
    %c0_63 = arith.constant 0 : index
    %60 = tpu.strided_load %arg14[%c3_62, %c0_63] {strides = array<i32: 2, 1>} : memref<16x128xf32, #tpu.memory_space<vmem>>, vector<4x128xf32>
    %61 = arith.cmpf ogt, %60, %58 : vector<4x128xf32>
    %c1_i32_64 = arith.constant 1 : i32
    %62 = vector.broadcast %c1_i32_64 : i32 to vector<4x128xi32>
    %63 = arith.select %61, %62, %59 : vector<4x128xi1>, vector<4x128xi32>
    %64 = arith.maximumf %58, %60 : vector<4x128xf32>
    %c4_65 = arith.constant 4 : index
    %c0_66 = arith.constant 0 : index
    %65 = tpu.strided_load %arg14[%c4_65, %c0_66] {strides = array<i32: 2, 1>} : memref<16x128xf32, #tpu.memory_space<vmem>>, vector<4x128xf32>
    %66 = arith.cmpf ogt, %65, %64 : vector<4x128xf32>
    %c2_i32 = arith.constant 2 : i32
    %67 = vector.broadcast %c2_i32 : i32 to vector<4x128xi32>
    %68 = arith.select %66, %67, %63 : vector<4x128xi1>, vector<4x128xi32>
    %69 = arith.maximumf %64, %65 : vector<4x128xf32>
    %c5 = arith.constant 5 : index
    %c0_67 = arith.constant 0 : index
    %70 = tpu.strided_load %arg14[%c5, %c0_67] {strides = array<i32: 2, 1>} : memref<16x128xf32, #tpu.memory_space<vmem>>, vector<4x128xf32>
    %71 = arith.cmpf ogt, %70, %69 : vector<4x128xf32>
    %c3_i32 = arith.constant 3 : i32
    %72 = vector.broadcast %c3_i32 : i32 to vector<4x128xi32>
    %73 = arith.select %71, %72, %68 : vector<4x128xi1>, vector<4x128xi32>
    %74 = arith.maximumf %69, %70 : vector<4x128xf32>
    %c2_68 = arith.constant 2 : index
    %c0_69 = arith.constant 0 : index
    %75 = vector.load %arg15[%c2_68, %c0_69] : memref<8x128xf32, #tpu.memory_space<vmem>>, vector<4x128xf32>
    tpu.vector_store %arg15[%c2_68, %c0_69], %74 {strides = array<i32>} : memref<8x128xf32, #tpu.memory_space<vmem>>, vector<4x128xf32>,
    %c0_70 = arith.constant 0 : index
    %c0_71 = arith.constant 0 : index
    %76 = vector.load %arg15[%c0_70, %c0_71] : memref<8x128xf32, #tpu.memory_space<vmem>>, vector<4x128xf32>
    %c1_72 = arith.constant 1 : index
    %c0_73 = arith.constant 0 : index
    %77 = vector.load %arg15[%c1_72, %c0_73] : memref<8x128xf32, #tpu.memory_space<vmem>>, vector<4x128xf32>
    %c2_74 = arith.constant 2 : index
    %c0_75 = arith.constant 0 : index
    %78 = vector.load %arg15[%c2_74, %c0_75] : memref<8x128xf32, #tpu.memory_space<vmem>>, vector<4x128xf32>
    %c3_76 = arith.constant 3 : index
    %c0_77 = arith.constant 0 : index
    %79 = vector.load %arg15[%c3_76, %c0_77] : memref<8x128xf32, #tpu.memory_space<vmem>>, vector<4x128xf32>
    %c4_78 = arith.constant 4 : index
    %c0_79 = arith.constant 0 : index
    %80 = vector.load %arg15[%c4_78, %c0_79] : memref<8x128xf32, #tpu.memory_space<vmem>>, vector<4x128xf32>
    %81 = tpu.concatenate %76, %77, %78, %79, %80 in 1 : vector<4x128xf32>, vector<4x128xf32>, vector<4x128xf32>, vector<4x128xf32>, vector<4x128xf32> -> vector<4x640xf32>
    %82 = arith.truncf %81 : vector<4x640xf32> to vector<4x640xbf16>
    %c2_80 = arith.constant 2 : index
    %c0_81 = arith.constant 0 : index
    %c0_82 = arith.constant 0 : index
    %83 = vector.load %arg4[%c2_80, %c0_81, %c0_82] : memref<6x640x128xbf16, #tpu.memory_space<vmem>>, vector<1x640x128xbf16>
    %84 = vector.shape_cast %83 : vector<1x640x128xbf16> to vector<640x128xbf16>
    %cst_83 = arith.constant dense<0.000000e+00> : vector<4x128xf32>
    %85 = tpu.matmul %82, %84, %cst_83 {dimension_numbers = #tpu.dot_dimension_numbers<[1], [0], [0], [1], [0, 0, 1, 1], [], []>} : vector<4x640xbf16>, vector<640x128xbf16>, vector<4x128xf32> -> vector<4x128xf32>
    %c2_84 = arith.constant 2 : index
    %c0_85 = arith.constant 0 : index
    %86 = vector.load %arg5[%c2_84, %c0_85] : memref<6x128xf32, #tpu.memory_space<vmem>>, vector<1x128xf32>
    %87 = vector.broadcast %86 : vector<1x128xf32> to vector<4x128xf32>
    %88 = arith.mulf %85, %87 : vector<4x128xf32>
    %c2_86 = arith.constant 2 : index
    %c0_87 = arith.constant 0 : index
    %89 = vector.load %arg6[%c2_86, %c0_87] : memref<6x128xf32, #tpu.memory_space<vmem>>, vector<1x128xf32>
    %90 = vector.broadcast %89 : vector<1x128xf32> to vector<4x128xf32>
    %91 = arith.addf %88, %90 : vector<4x128xf32>
    %c2_88 = arith.constant 2 : index
    %c0_89 = arith.constant 0 : index
    %92 = vector.load %arg7[%c2_88, %c0_89] : memref<6x128xf32, #tpu.memory_space<vmem>>, vector<1x128xf32>
    %cst_90 = arith.constant 0.000000e+00 : f32
    %93 = vector.broadcast %cst_90 : f32 to vector<4x128xf32>
    %94 = arith.cmpf oge, %91, %93 : vector<4x128xf32>
    %95 = vector.broadcast %92 : vector<1x128xf32> to vector<4x128xf32>
    %96 = arith.mulf %95, %91 : vector<4x128xf32>
    %97 = arith.select %94, %91, %96 : vector<4x128xi1>, vector<4x128xf32>
    %c2_91 = arith.constant 2 : index
    %c0_92 = arith.constant 0 : index
    %98 = vector.load %arg15[%c2_91, %c0_92] : memref<8x128xf32, #tpu.memory_space<vmem>>, vector<4x128xf32>
    tpu.vector_store %arg15[%c2_91, %c0_92], %97 {strides = array<i32>} : memref<8x128xf32, #tpu.memory_space<vmem>>, vector<4x128xf32>,
    %c2_93 = arith.constant 2 : index
    %c0_94 = arith.constant 0 : index
    %99 = tpu.strided_load %arg15[%c2_93, %c0_94] {strides = array<i32: 2, 1>} : memref<8x128xf32, #tpu.memory_space<vmem>>, vector<2x128xf32>
    %c0_i32_95 = arith.constant 0 : i32
    %100 = vector.broadcast %c0_i32_95 : i32 to vector<2x128xi32>
    %c3_96 = arith.constant 3 : index
    %c0_97 = arith.constant 0 : index
    %101 = tpu.strided_load %arg15[%c3_96, %c0_97] {strides = array<i32: 2, 1>} : memref<8x128xf32, #tpu.memory_space<vmem>>, vector<2x128xf32>
    %102 = arith.cmpf ogt, %101, %99 : vector<2x128xf32>
    %c1_i32_98 = arith.constant 1 : i32
    %103 = vector.broadcast %c1_i32_98 : i32 to vector<2x128xi32>
    %104 = arith.select %102, %103, %100 : vector<2x128xi1>, vector<2x128xi32>
    %105 = arith.maximumf %99, %101 : vector<2x128xf32>
    %c0_99 = arith.constant 0 : index
    %c0_100 = arith.constant 0 : index
    %c0_101 = arith.constant 0 : index
    %106 = vector.load %arg10[%c0_99, %c0_100, %c0_101] : memref<1x2x128xf32, #tpu.memory_space<vmem>>, vector<1x2x128xf32>
    %107 = vector.shape_cast %106 : vector<1x2x128xf32> to vector<2x128xf32>
    %108 = vector.shape_cast %105 : vector<2x128xf32> to vector<1x2x128xf32>
    tpu.vector_store %arg10[%c0_99, %c0_100, %c0_101], %108 {strides = array<i32>} : memref<1x2x128xf32, #tpu.memory_space<vmem>>, vector<1x2x128xf32>,
    %c0_i32_102 = arith.constant 0 : i32
    %109 = vector.broadcast %c0_i32_102 : i32 to vector<2x128xi32>
    %110 = arith.cmpi eq, %104, %109 : vector<2x128xi32>
    %cst_103 = arith.constant 0.000000e+00 : f32
    %111 = vector.broadcast %cst_103 : f32 to vector<2x128xf32>
    %112 = arith.select %110, %105, %111 : vector<2x128xi1>, vector<2x128xf32>
    %c2_104 = arith.constant 2 : index
    %c0_105 = arith.constant 0 : index
    %113 = tpu.strided_load %arg15[%c2_104, %c0_105] {strides = array<i32: 2, 1>} : memref<8x128xf32, #tpu.memory_space<vmem>>, vector<2x128xf32>
    tpu.strided_store %arg15[%c2_104, %c0_105], %112 {strides = array<i32: 2, 1>} : memref<8x128xf32, #tpu.memory_space<vmem>>, vector<2x128xf32>
    %c1_i32_106 = arith.constant 1 : i32
    %114 = vector.broadcast %c1_i32_106 : i32 to vector<2x128xi32>
    %115 = arith.cmpi eq, %104, %114 : vector<2x128xi32>
    %cst_107 = arith.constant 0.000000e+00 : f32
    %116 = vector.broadcast %cst_107 : f32 to vector<2x128xf32>
    %117 = arith.select %115, %105, %116 : vector<2x128xi1>, vector<2x128xf32>
    %c3_108 = arith.constant 3 : index
    %c0_109 = arith.constant 0 : index
    %118 = tpu.strided_load %arg15[%c3_108, %c0_109] {strides = array<i32: 2, 1>} : memref<8x128xf32, #tpu.memory_space<vmem>>, vector<2x128xf32>
    tpu.strided_store %arg15[%c3_108, %c0_109], %117 {strides = array<i32: 2, 1>} : memref<8x128xf32, #tpu.memory_space<vmem>>, vector<2x128xf32>
    %c0_110 = arith.constant 0 : index
    %c0_111 = arith.constant 0 : index
    %119 = vector.load %arg15[%c0_110, %c0_111] : memref<8x128xf32, #tpu.memory_space<vmem>>, vector<4x128xf32>
    %c1_112 = arith.constant 1 : index
    %c0_113 = arith.constant 0 : index
    %120 = vector.load %arg15[%c1_112, %c0_113] : memref<8x128xf32, #tpu.memory_space<vmem>>, vector<4x128xf32>
    %c2_114 = arith.constant 2 : index
    %c0_115 = arith.constant 0 : index
    %121 = vector.load %arg15[%c2_114, %c0_115] : memref<8x128xf32, #tpu.memory_space<vmem>>, vector<4x128xf32>
    %c3_116 = arith.constant 3 : index
    %c0_117 = arith.constant 0 : index
    %122 = vector.load %arg15[%c3_116, %c0_117] : memref<8x128xf32, #tpu.memory_space<vmem>>, vector<4x128xf32>
    %c4_118 = arith.constant 4 : index
    %c0_119 = arith.constant 0 : index
    %123 = vector.load %arg15[%c4_118, %c0_119] : memref<8x128xf32, #tpu.memory_space<vmem>>, vector<4x128xf32>
    %124 = tpu.concatenate %119, %120, %121, %122, %123 in 1 : vector<4x128xf32>, vector<4x128xf32>, vector<4x128xf32>, vector<4x128xf32>, vector<4x128xf32> -> vector<4x640xf32>
    %125 = arith.truncf %124 : vector<4x640xf32> to vector<4x640xbf16>
    %c3_120 = arith.constant 3 : index
    %c0_121 = arith.constant 0 : index
    %c0_122 = arith.constant 0 : index
    %126 = vector.load %arg4[%c3_120, %c0_121, %c0_122] : memref<6x640x128xbf16, #tpu.memory_space<vmem>>, vector<1x640x128xbf16>
    %127 = vector.shape_cast %126 : vector<1x640x128xbf16> to vector<640x128xbf16>
    %cst_123 = arith.constant dense<0.000000e+00> : vector<4x128xf32>
    %128 = tpu.matmul %125, %127, %cst_123 {dimension_numbers = #tpu.dot_dimension_numbers<[1], [0], [0], [1], [0, 0, 1, 1], [], []>} : vector<4x640xbf16>, vector<640x128xbf16>, vector<4x128xf32> -> vector<4x128xf32>
    %c3_124 = arith.constant 3 : index
    %c0_125 = arith.constant 0 : index
    %129 = vector.load %arg5[%c3_124, %c0_125] : memref<6x128xf32, #tpu.memory_space<vmem>>, vector<1x128xf32>
    %130 = vector.broadcast %129 : vector<1x128xf32> to vector<4x128xf32>
    %131 = arith.mulf %128, %130 : vector<4x128xf32>
    %c3_126 = arith.constant 3 : index
    %c0_127 = arith.constant 0 : index
    %132 = vector.load %arg6[%c3_126, %c0_127] : memref<6x128xf32, #tpu.memory_space<vmem>>, vector<1x128xf32>
    %133 = vector.broadcast %132 : vector<1x128xf32> to vector<4x128xf32>
    %134 = arith.addf %131, %133 : vector<4x128xf32>
    %135 = math.tanh %134 : vector<4x128xf32>
    %cst_128 = arith.constant 0.000000e+00 : f32
    %136 = vector.broadcast %cst_128 : f32 to vector<10x128xf32>
    %c2_129 = arith.constant 2 : index
    %c0_130 = arith.constant 0 : index
    %137 = vector.load %arg14[%c2_129, %c0_130] : memref<16x128xf32, #tpu.memory_space<vmem>>, vector<10x128xf32>
    tpu.vector_store %arg14[%c2_129, %c0_130], %136 {strides = array<i32>} : memref<16x128xf32, #tpu.memory_space<vmem>>, vector<10x128xf32>,
    %c5_131 = arith.constant 5 : index
    %c0_132 = arith.constant 0 : index
    %138 = tpu.strided_load %arg14[%c5_131, %c0_132] {strides = array<i32: 2, 1>} : memref<16x128xf32, #tpu.memory_space<vmem>>, vector<4x128xf32>
    %c3_i32_133 = arith.constant 3 : i32
    %139 = vector.broadcast %c3_i32_133 : i32 to vector<4x128xi32>
    %140 = arith.cmpi eq, %73, %139 : vector<4x128xi32>
    %141 = arith.select %140, %135, %138 : vector<4x128xi1>, vector<4x128xf32>
    %c5_134 = arith.constant 5 : index
    %c0_135 = arith.constant 0 : index
    %142 = tpu.strided_load %arg14[%c5_134, %c0_135] {strides = array<i32: 2, 1>} : memref<16x128xf32, #tpu.memory_space<vmem>>, vector<4x128xf32>
    tpu.strided_store %arg14[%c5_134, %c0_135], %141 {strides = array<i32: 2, 1>} : memref<16x128xf32, #tpu.memory_space<vmem>>, vector<4x128xf32>
    %c4_136 = arith.constant 4 : index
    %c0_137 = arith.constant 0 : index
    %143 = tpu.strided_load %arg14[%c4_136, %c0_137] {strides = array<i32: 2, 1>} : memref<16x128xf32, #tpu.memory_space<vmem>>, vector<4x128xf32>
    %c2_i32_138 = arith.constant 2 : i32
    %144 = vector.broadcast %c2_i32_138 : i32 to vector<4x128xi32>
    %145 = arith.cmpi eq, %73, %144 : vector<4x128xi32>
    %146 = arith.select %145, %135, %143 : vector<4x128xi1>, vector<4x128xf32>
    %c4_139 = arith.constant 4 : index
    %c0_140 = arith.constant 0 : index
    %147 = tpu.strided_load %arg14[%c4_139, %c0_140] {strides = array<i32: 2, 1>} : memref<16x128xf32, #tpu.memory_space<vmem>>, vector<4x128xf32>
    tpu.strided_store %arg14[%c4_139, %c0_140], %146 {strides = array<i32: 2, 1>} : memref<16x128xf32, #tpu.memory_space<vmem>>, vector<4x128xf32>
    %c3_141 = arith.constant 3 : index
    %c0_142 = arith.constant 0 : index
    %148 = tpu.strided_load %arg14[%c3_141, %c0_142] {strides = array<i32: 2, 1>} : memref<16x128xf32, #tpu.memory_space<vmem>>, vector<4x128xf32>
    %c1_i32_143 = arith.constant 1 : i32
    %149 = vector.broadcast %c1_i32_143 : i32 to vector<4x128xi32>
    %150 = arith.cmpi eq, %73, %149 : vector<4x128xi32>
    %151 = arith.select %150, %135, %148 : vector<4x128xi1>, vector<4x128xf32>
    %c3_144 = arith.constant 3 : index
    %c0_145 = arith.constant 0 : index
    %152 = tpu.strided_load %arg14[%c3_144, %c0_145] {strides = array<i32: 2, 1>} : memref<16x128xf32, #tpu.memory_space<vmem>>, vector<4x128xf32>
    tpu.strided_store %arg14[%c3_144, %c0_145], %151 {strides = array<i32: 2, 1>} : memref<16x128xf32, #tpu.memory_space<vmem>>, vector<4x128xf32>
    %c2_146 = arith.constant 2 : index
    %c0_147 = arith.constant 0 : index
    %153 = tpu.strided_load %arg14[%c2_146, %c0_147] {strides = array<i32: 2, 1>} : memref<16x128xf32, #tpu.memory_space<vmem>>, vector<4x128xf32>
    %c0_i32_148 = arith.constant 0 : i32
    %154 = vector.broadcast %c0_i32_148 : i32 to vector<4x128xi32>
    %155 = arith.cmpi eq, %73, %154 : vector<4x128xi32>
    %156 = arith.select %155, %135, %153 : vector<4x128xi1>, vector<4x128xf32>
    %c2_149 = arith.constant 2 : index
    %c0_150 = arith.constant 0 : index
    %157 = tpu.strided_load %arg14[%c2_149, %c0_150] {strides = array<i32: 2, 1>} : memref<16x128xf32, #tpu.memory_space<vmem>>, vector<4x128xf32>
    tpu.strided_store %arg14[%c2_149, %c0_150], %156 {strides = array<i32: 2, 1>} : memref<16x128xf32, #tpu.memory_space<vmem>>, vector<4x128xf32>
    %c0_151 = arith.constant 0 : index
    %c0_152 = arith.constant 0 : index
    %158 = vector.load %arg14[%c0_151, %c0_152] : memref<16x128xf32, #tpu.memory_space<vmem>>, vector<10x128xf32>
    %c1_153 = arith.constant 1 : index
    %c0_154 = arith.constant 0 : index
    %159 = vector.load %arg14[%c1_153, %c0_154] : memref<16x128xf32, #tpu.memory_space<vmem>>, vector<10x128xf32>
    %c2_155 = arith.constant 2 : index
    %c0_156 = arith.constant 0 : index
    %160 = vector.load %arg14[%c2_155, %c0_156] : memref<16x128xf32, #tpu.memory_space<vmem>>, vector<10x128xf32>
    %c3_157 = arith.constant 3 : index
    %c0_158 = arith.constant 0 : index
    %161 = vector.load %arg14[%c3_157, %c0_158] : memref<16x128xf32, #tpu.memory_space<vmem>>, vector<10x128xf32>
    %c4_159 = arith.constant 4 : index
    %c0_160 = arith.constant 0 : index
    %162 = vector.load %arg14[%c4_159, %c0_160] : memref<16x128xf32, #tpu.memory_space<vmem>>, vector<10x128xf32>
    %163 = tpu.concatenate %158, %159, %160, %161, %162 in 1 : vector<10x128xf32>, vector<10x128xf32>, vector<10x128xf32>, vector<10x128xf32>, vector<10x128xf32> -> vector<10x640xf32>
    %164 = arith.truncf %163 : vector<10x640xf32> to vector<10x640xbf16>
    %c4_161 = arith.constant 4 : index
    %c0_162 = arith.constant 0 : index
    %c0_163 = arith.constant 0 : index
    %165 = vector.load %arg4[%c4_161, %c0_162, %c0_163] : memref<6x640x128xbf16, #tpu.memory_space<vmem>>, vector<1x640x128xbf16>
    %166 = vector.shape_cast %165 : vector<1x640x128xbf16> to vector<640x128xbf16>
    %cst_164 = arith.constant dense<0.000000e+00> : vector<10x128xf32>
    %167 = tpu.matmul %164, %166, %cst_164 {dimension_numbers = #tpu.dot_dimension_numbers<[1], [0], [0], [1], [0, 0, 1, 1], [], []>} : vector<10x640xbf16>, vector<640x128xbf16>, vector<10x128xf32> -> vector<10x128xf32>
    %c4_165 = arith.constant 4 : index
    %c0_166 = arith.constant 0 : index
    %168 = vector.load %arg5[%c4_165, %c0_166] : memref<6x128xf32, #tpu.memory_space<vmem>>, vector<1x128xf32>
    %169 = vector.broadcast %168 : vector<1x128xf32> to vector<10x128xf32>
    %170 = arith.mulf %167, %169 : vector<10x128xf32>
    %c4_167 = arith.constant 4 : index
    %c0_168 = arith.constant 0 : index
    %171 = vector.load %arg6[%c4_167, %c0_168] : memref<6x128xf32, #tpu.memory_space<vmem>>, vector<1x128xf32>
    %172 = vector.broadcast %171 : vector<1x128xf32> to vector<10x128xf32>
    %173 = arith.addf %170, %172 : vector<10x128xf32>
    %c4_169 = arith.constant 4 : index
    %c0_170 = arith.constant 0 : index
    %174 = vector.load %arg7[%c4_169, %c0_170] : memref<6x128xf32, #tpu.memory_space<vmem>>, vector<1x128xf32>
    %cst_171 = arith.constant 0.000000e+00 : f32
    %175 = vector.broadcast %cst_171 : f32 to vector<10x128xf32>
    %176 = arith.cmpf oge, %173, %175 : vector<10x128xf32>
    %177 = vector.broadcast %174 : vector<1x128xf32> to vector<10x128xf32>
    %178 = arith.mulf %177, %173 : vector<10x128xf32>
    %179 = arith.select %176, %173, %178 : vector<10x128xi1>, vector<10x128xf32>
    %c0_i32_172 = arith.constant 0 : i32
    %180 = vector.broadcast %c0_i32_172 : i32 to vector<10x128xi32>
    %181 = arith.cmpi eq, %37, %180 : vector<10x128xi32>
    %cst_173 = arith.constant 0.000000e+00 : f32
    %182 = vector.broadcast %cst_173 : f32 to vector<10x128xf32>
    %183 = arith.select %181, %179, %182 : vector<10x128xi1>, vector<10x128xf32>
    %c2_174 = arith.constant 2 : index
    %c0_175 = arith.constant 0 : index
    %184 = tpu.strided_load %arg13[%c2_174, %c0_175] {strides = array<i32: 2, 1>} : memref<24x128xf32, #tpu.memory_space<vmem>>, vector<10x128xf32>
    tpu.strided_store %arg13[%c2_174, %c0_175], %183 {strides = array<i32: 2, 1>} : memref<24x128xf32, #tpu.memory_space<vmem>>, vector<10x128xf32>
    %c1_i32_176 = arith.constant 1 : i32
    %185 = vector.broadcast %c1_i32_176 : i32 to vector<10x128xi32>
    %186 = arith.cmpi eq, %37, %185 : vector<10x128xi32>
    %cst_177 = arith.constant 0.000000e+00 : f32
    %187 = vector.broadcast %cst_177 : f32 to vector<10x128xf32>
    %188 = arith.select %186, %179, %187 : vector<10x128xi1>, vector<10x128xf32>
    %c3_178 = arith.constant 3 : index
    %c0_179 = arith.constant 0 : index
    %189 = tpu.strided_load %arg13[%c3_178, %c0_179] {strides = array<i32: 2, 1>} : memref<24x128xf32, #tpu.memory_space<vmem>>, vector<10x128xf32>
    tpu.strided_store %arg13[%c3_178, %c0_179], %188 {strides = array<i32: 2, 1>} : memref<24x128xf32, #tpu.memory_space<vmem>>, vector<10x128xf32>
    %c0_180 = arith.constant 0 : index
    %c0_181 = arith.constant 0 : index
    %190 = vector.load %arg13[%c0_180, %c0_181] : memref<24x128xf32, #tpu.memory_space<vmem>>, vector<20x128xf32>
    %c1_182 = arith.constant 1 : index
    %c0_183 = arith.constant 0 : index
    %191 = vector.load %arg13[%c1_182, %c0_183] : memref<24x128xf32, #tpu.memory_space<vmem>>, vector<20x128xf32>
    %c2_184 = arith.constant 2 : index
    %c0_185 = arith.constant 0 : index
    %192 = vector.load %arg13[%c2_184, %c0_185] : memref<24x128xf32, #tpu.memory_space<vmem>>, vector<20x128xf32>
    %c3_186 = arith.constant 3 : index
    %c0_187 = arith.constant 0 : index
    %193 = vector.load %arg13[%c3_186, %c0_187] : memref<24x128xf32, #tpu.memory_space<vmem>>, vector<20x128xf32>
    %c4_188 = arith.constant 4 : index
    %c0_189 = arith.constant 0 : index
    %194 = vector.load %arg13[%c4_188, %c0_189] : memref<24x128xf32, #tpu.memory_space<vmem>>, vector<20x128xf32>
    %195 = tpu.concatenate %190, %191, %192, %193, %194 in 1 : vector<20x128xf32>, vector<20x128xf32>, vector<20x128xf32>, vector<20x128xf32>, vector<20x128xf32> -> vector<20x640xf32>
    %196 = arith.truncf %195 : vector<20x640xf32> to vector<20x640xbf16>
    %c5_190 = arith.constant 5 : index
    %c0_191 = arith.constant 0 : index
    %c0_192 = arith.constant 0 : index
    %197 = vector.load %arg4[%c5_190, %c0_191, %c0_192] : memref<6x640x128xbf16, #tpu.memory_space<vmem>>, vector<1x640x128xbf16>
    %198 = vector.shape_cast %197 : vector<1x640x128xbf16> to vector<640x128xbf16>
    %cst_193 = arith.constant dense<0.000000e+00> : vector<20x128xf32>
    %199 = tpu.matmul %196, %198, %cst_193 {dimension_numbers = #tpu.dot_dimension_numbers<[1], [0], [0], [1], [0, 0, 1, 1], [], []>} : vector<20x640xbf16>, vector<640x128xbf16>, vector<20x128xf32> -> vector<20x128xf32>
    %c5_194 = arith.constant 5 : index
    %c0_195 = arith.constant 0 : index
    %200 = vector.load %arg5[%c5_194, %c0_195] : memref<6x128xf32, #tpu.memory_space<vmem>>, vector<1x128xf32>
    %201 = vector.broadcast %200 : vector<1x128xf32> to vector<20x128xf32>
    %202 = arith.mulf %199, %201 : vector<20x128xf32>
    %c5_196 = arith.constant 5 : index
    %c0_197 = arith.constant 0 : index
    %203 = vector.load %arg6[%c5_196, %c0_197] : memref<6x128xf32, #tpu.memory_space<vmem>>, vector<1x128xf32>
    %204 = vector.broadcast %203 : vector<1x128xf32> to vector<20x128xf32>
    %205 = arith.addf %202, %204 : vector<20x128xf32>
    %c5_198 = arith.constant 5 : index
    %c0_199 = arith.constant 0 : index
    %206 = vector.load %arg7[%c5_198, %c0_199] : memref<6x128xf32, #tpu.memory_space<vmem>>, vector<1x128xf32>
    %cst_200 = arith.constant 0.000000e+00 : f32
    %207 = vector.broadcast %cst_200 : f32 to vector<20x128xf32>
    %208 = arith.cmpf oge, %205, %207 : vector<20x128xf32>
    %209 = vector.broadcast %206 : vector<1x128xf32> to vector<20x128xf32>
    %210 = arith.mulf %209, %205 : vector<20x128xf32>
    %211 = arith.select %208, %205, %210 : vector<20x128xi1>, vector<20x128xf32>
    %c0_201 = arith.constant 0 : index
    %c0_202 = arith.constant 0 : index
    %c0_203 = arith.constant 0 : index
    %212 = vector.load %arg11[%c0_201, %c0_202, %c0_203] : memref<1x20x128xf32, #tpu.memory_space<vmem>>, vector<1x20x128xf32>
    %213 = vector.shape_cast %212 : vector<1x20x128xf32> to vector<20x128xf32>
    %214 = vector.shape_cast %211 : vector<20x128xf32> to vector<1x20x128xf32>
    tpu.vector_store %arg11[%c0_201, %c0_202, %c0_203], %214 {strides = array<i32>} : memref<1x20x128xf32, #tpu.memory_space<vmem>>, vector<1x20x128xf32>,
    %215 = vector.extract_strided_slice %105 {offsets = [0, 0], sizes = [1, 128], strides = [1, 1]} : vector<2x128xf32> to vector<1x128xf32>
    %216 = vector.extract_strided_slice %105 {offsets = [1, 0], sizes = [1, 128], strides = [1, 1]} : vector<2x128xf32> to vector<1x128xf32>
    %217 = tpu.concatenate %215, %216 in 1 : vector<1x128xf32>, vector<1x128xf32> -> vector<1x256xf32>
    %c0_204 = arith.constant 0 : index
    %c0_205 = arith.constant 0 : index
    %218 = vector.load %arg9[%c0_204, %c0_205] : memref<1x128xf32, #tpu.memory_space<vmem>>, vector<1x128xf32>
    %219 = arith.truncf %217 : vector<1x256xf32> to vector<1x256xbf16>
    %c0_206 = arith.constant 0 : index
    %c0_207 = arith.constant 0 : index
    %220 = vector.load %arg8[%c0_206, %c0_207] : memref<256x128xbf16, #tpu.memory_space<vmem>>, vector<256x128xbf16>
    %cst_208 = arith.constant dense<0.000000e+00> : vector<1x128xf32>
    %221 = tpu.matmul %219, %220, %cst_208 {dimension_numbers = #tpu.dot_dimension_numbers<[1], [0], [0], [1], [0, 0, 1, 1], [], []>} : vector<1x256xbf16>, vector<256x128xbf16>, vector<1x128xf32> -> vector<1x128xf32>
    %222 = arith.addf %218, %221 : vector<1x128xf32>
    %c0_209 = arith.constant 0 : index
    %c0_210 = arith.constant 0 : index
    %c0_211 = arith.constant 0 : index
    %223 = vector.load %arg12[%c0_209, %c0_210, %c0_211] : memref<1x1x128xf32, #tpu.memory_space<vmem>>, vector<1x1x128xf32>
    %224 = vector.shape_cast %223 : vector<1x1x128xf32> to vector<1x128xf32>
    %225 = vector.shape_cast %222 : vector<1x128xf32> to vector<1x1x128xf32>
    tpu.vector_store %arg12[%c0_209, %c0_210, %c0_211], %225 {strides = array<i32>} : memref<1x1x128xf32, #tpu.memory_space<vmem>>, vector<1x1x128xf32>,
    return
  }
  func.func @transform_0(%arg0: i32) -> (i32, i32, i32) {
    %c0_i32 = arith.constant 0 : i32
    %c0_i32_0 = arith.constant 0 : i32
    %c0_i32_1 = arith.constant 0 : i32
    return %arg0, %c0_i32, %c0_i32_0 : i32, i32, i32
  }
  func.func @transform_1(%arg0: i32) -> (i32, i32) {
    %c0_i32 = arith.constant 0 : i32
    %c0_i32_0 = arith.constant 0 : i32
    %c0_i32_1 = arith.constant 0 : i32
    return %c0_i32, %c0_i32_0 : i32, i32
  }
  func.func @transform_2(%arg0: i32) -> (i32, i32) {
    %c0_i32 = arith.constant 0 : i32
    %c0_i32_0 = arith.constant 0 : i32
    %c0_i32_1 = arith.constant 0 : i32
    return %c0_i32, %c0_i32_0 : i32, i32
  }
  func.func @transform_3(%arg0: i32) -> (i32, i32, i32) {
    %c0_i32 = arith.constant 0 : i32
    %c0_i32_0 = arith.constant 0 : i32
    %c0_i32_1 = arith.constant 0 : i32
    %c0_i32_2 = arith.constant 0 : i32
    return %c0_i32, %c0_i32_0, %c0_i32_1 : i32, i32, i32
  }
  func.func @transform_4(%arg0: i32) -> (i32, i32) {
    %c0_i32 = arith.constant 0 : i32
    %c0_i32_0 = arith.constant 0 : i32
    %c0_i32_1 = arith.constant 0 : i32
    return %c0_i32, %c0_i32_0 : i32, i32
  }
  func.func @transform_5(%arg0: i32) -> (i32, i32) {
    %c0_i32 = arith.constant 0 : i32
    %c0_i32_0 = arith.constant 0 : i32
    %c0_i32_1 = arith.constant 0 : i32
    return %c0_i32, %c0_i32_0 : i32, i32
  }
  func.func @transform_6(%arg0: i32) -> (i32, i32) {
    %c0_i32 = arith.constant 0 : i32
    %c0_i32_0 = arith.constant 0 : i32
    %c0_i32_1 = arith.constant 0 : i32
    return %c0_i32, %c0_i32_0 : i32, i32
  }
  func.func @transform_7(%arg0: i32) -> (i32, i32) {
    %c0_i32 = arith.constant 0 : i32
    %c0_i32_0 = arith.constant 0 : i32
    %c0_i32_1 = arith.constant 0 : i32
    return %c0_i32, %c0_i32_0 : i32, i32
  }
  func.func @transform_8(%arg0: i32) -> (i32, i32) {
    %c0_i32 = arith.constant 0 : i32
    %c0_i32_0 = arith.constant 0 : i32
    %c0_i32_1 = arith.constant 0 : i32
    return %c0_i32, %c0_i32_0 : i32, i32
  }
  func.func @transform_9(%arg0: i32) -> (i32, i32, i32) {
    %c0_i32 = arith.constant 0 : i32
    %c0_i32_0 = arith.constant 0 : i32
    %c0_i32_1 = arith.constant 0 : i32
    return %arg0, %c0_i32, %c0_i32_0 : i32, i32, i32
  }
  func.func @transform_10(%arg0: i32) -> (i32, i32, i32) {
    %c0_i32 = arith.constant 0 : i32
    %c0_i32_0 = arith.constant 0 : i32
    %c0_i32_1 = arith.constant 0 : i32
    return %arg0, %c0_i32, %c0_i32_0 : i32, i32, i32
  }
  func.func @transform_11(%arg0: i32) -> (i32, i32, i32) {
    %c0_i32 = arith.constant 0 : i32
    %c0_i32_0 = arith.constant 0 : i32
    %c0_i32_1 = arith.constant 0 : i32
    return %arg0, %c0_i32, %c0_i32_0 : i32, i32, i32
  }
}

</mosaic_0001>

<llo_original>
// kernel: clustering_model_forward.1
$region0: #{clustering_model_forward.1}
  #allocation0 [shape = 'u32[]', space=smem, size = 0x4, offset = 0x4, fixed_abs, tag = 'smem constant byte address 0x4 - core index']
  #allocation1 [shape = 'u32[144,128]{1,0:T(1,128)}', space=vmem, size = 0x12000, scoped, tag = 'internal scratch']
  #allocation2 [shape = 'f32[24,128]{1,0:T(8,128)}', space=vmem, size = 0x3000, scoped, tag = 'scratch operand']
  #allocation3 [shape = 'f32[16,128]{1,0:T(8,128)}', space=vmem, size = 0x2000, scoped, tag = 'scratch operand']
  #allocation4 [shape = 'f32[8,128]{1,0:T(8,128)}', space=vmem, size = 0x1000, scoped, tag = 'scratch operand']
  %s0 = inlined_call_operand.vmem [shape: f32[2,20,3], index: 0, kind: input, shape index: {}]
  %s1 = inlined_call_operand.vmem [shape: f32[3,128], index: 1, kind: input, shape index: {}]
  %s2 = inlined_call_operand.vmem [shape: f32[1,128], index: 2, kind: input, shape index: {}]
  %s3 = inlined_call_operand.hbm [shape: bf16[6,640,128], index: 3, kind: input, shape index: {}]
  %s4 = inlined_call_operand.vmem [shape: f32[6,128], index: 4, kind: input, shape index: {}]
  %s5 = inlined_call_operand.vmem [shape: f32[6,128], index: 5, kind: input, shape index: {}]
  %s6 = inlined_call_operand.vmem [shape: f32[6,128], index: 6, kind: input, shape index: {}]
  %s7 = inlined_call_operand.hbm [shape: bf16[256,128], index: 7, kind: input, shape index: {}]
  %s8 = inlined_call_operand.vmem [shape: f32[1,128], index: 8, kind: input, shape index: {}]
  %s9 = inlined_call_operand.vmem [shape: f32[2,2,128], index: 9, kind: output, shape index: {0}]
  %s10 = inlined_call_operand.vmem [shape: f32[2,20,128], index: 10, kind: output, shape index: {1}]
  %s11 = inlined_call_operand.hbm [shape: f32[2,1,128], index: 11, kind: output, shape index: {2}]
  %12 = xla_tuple %s9, %s10, %s11
  %s13 = sld [smem:[#allocation0]]
  $region93: #{clustering_model_forward.1} parent=0
    _
  %s15 = ssub.s32 1, %s13
  %s16 = scalar_select 0, %s15, %s13
  $region1: #{clustering_model_forward.1} parent=0
    #allocation5 [shape = 'u8[983040]{0}', space=vmem, size = 0xf0000, scoped, tag = 'input window, operand 3, single buffered']
    #allocation6 [shape = 's32[2]{0}', space=sflag, size = 0x8, scoped, tag = 'scoped memory for clustering_model_forward.1']
    #allocation7 [shape = 's32[2]{0}', space=sflag, size = 0x8, scoped, tag = 'scoped memory for clustering_model_forward.1']
    #allocation8 [shape = 'u8[65536]{0}', space=vmem, size = 0x10000, scoped, tag = 'input window, operand 7, single buffered']
    #allocation9 [shape = 's32[1]{0}', space=sflag, size = 0x4, scoped, tag = 'scoped memory for clustering_model_forward.1']
    #allocation10 [shape = 'u8[1024]{0}', space=vmem, size = 0x400, scoped, tag = 'output window, operand 2']
    %17 = vsyncpa [#allocation6], 0
    %18 = vsyncpa [#allocation9], 0
    %19 = vsyncpa [#allocation7], 0
    %s20 = scalar_lea.sflag [#allocation7], 1
    %21 = vsyncpa %s20, 0
    loop: start=0, step=1, limit=4
    $region2: #{clustering_model_forward.1} parent=1 // loop_pre_header
      _
    $region3: #{clustering_model_forward.1} parent=1 // loop_header
      %s23 = sphi 0, %s27
      %p24 = scmp.ge.s32.totalorder %s23, 4
      %s33 = sphi 0, %s35
      %s36 = sphi 0, %s33
      %s37 = sphi 0, %s36
      %s53 = sphi 0, %s37
      %s57 = sphi 0, %s57
      %s59 = sphi 0, %s57
      %s60 = sphi 0, %s59
      %s74 = sphi 0, %s60
      %s78 = sphi 0, %s78
      %s80 = sphi 0, %s78
      %s81 = sphi 0, %s80
      %s95 = sphi 0, %s81
      %s99 = sphi 0, %s99
      %s101 = sphi 0, %s99
      %s102 = sphi 0, %s101
      %s116 = sphi 0, %s102
      %s120 = sphi 0, %s120
      %s122 = sphi 0, %s120
      %s123 = sphi 0, %s122
      %s137 = sphi 0, %s123
      %s141 = sphi 0, %s141
      %s143 = sphi 0, %s141
      %s144 = sphi 0, %s143
      %s158 = sphi 0, %s144
      %s162 = sphi 0, %s162
      %s164 = sphi 0, %s162
      %s165 = sphi 0, %s164
      %s179 = sphi 0, %s165
      %s183 = sphi 0, %s183
      %s185 = sphi 0, %s183
      %s186 = sphi 0, %s185
      %s200 = sphi 0, %s186
      %s204 = sphi 0, %s204
      %s206 = sphi 0, %s204
      %s207 = sphi 0, %s206
      %s221 = sphi 0, %s207
      %s227 = sphi 0, %s229
      %s230 = sphi 0, %s227
      %s231 = sphi 0, %s230
      %s247 = sphi 0, %s231
      %s253 = sphi 0, %s255
      %s256 = sphi 0, %s253
      %s257 = sphi 0, %s256
      %s273 = sphi 0, %s257
      %s279 = sphi 0, %s281
      %s282 = sphi 0, %s279
      %s283 = sphi 0, %s282
      %s299 = sphi 0, %s283
    $region4: #{clustering_model_forward.1} parent=1 // loop_header_branch
      %26 = sbr.rel (%p24) target = $region8
    $region5: #{clustering_model_forward.1} parent=1 // loop_body
      %s28 = ssub.s32 %s23, 1
      %s29 = ssub.s32 %s23, 2
      %s30 = sadd.s32 %s23, 1
      %s31 = ssub.s32 %s23, %s30
      %p32 = scmp.eq.s32.totalorder %s31, 0
      %s34 = sadd.s32 %s33, 1
      %s35 = scalar_select %p32, %s33, %s34
      %p38 = pneg %p32
      %p39 = scmp.eq.s32.totalorder %s23, 1
      %p40 = por %p38, %p39
      %p41 = scmp.ne.s32.totalorder %s33, %s36
      %p42 = scmp.eq.s32.totalorder %s23, 0
      %p43 = por %p41, %p42
      %p44 = scmp.ne.s32.totalorder %s33, %s36
      %p45 = scmp.eq.s32.totalorder %s28, 1
      %p46 = por %p44, %p45
      %p47 = scmp.ne.s32.totalorder %s36, %s37
      %p48 = scmp.eq.s32.totalorder %s28, 0
      %p49 = por %p47, %p48
      %p50 = scmp.ne.s32.totalorder %s36, %s37
      %p51 = scmp.eq.s32.totalorder %s29, 1
      %p52 = por %p50, %p51
      %p54 = scmp.ne.s32.totalorder %s37, %s53
      %p55 = scmp.eq.s32.totalorder %s29, 0
      %p56 = por %p54, %p55
      %s58 = sadd.s32 %s57, 1
      %p61 = scmp.eq.s32.totalorder %s23, 1
      %p62 = scmp.ne.s32.totalorder %s57, %s59
      %p63 = scmp.eq.s32.totalorder %s23, 0
      %p64 = por %p62, %p63
      %p65 = scmp.ne.s32.totalorder %s57, %s59
      %p66 = scmp.eq.s32.totalorder %s28, 1
      %p67 = por %p65, %p66
      %p68 = scmp.ne.s32.totalorder %s59, %s60
      %p69 = scmp.eq.s32.totalorder %s28, 0
      %p70 = por %p68, %p69
      %p71 = scmp.ne.s32.totalorder %s59, %s60
      %p72 = scmp.eq.s32.totalorder %s29, 1
      %p73 = por %p71, %p72
      %p75 = scmp.ne.s32.totalorder %s60, %s74
      %p76 = scmp.eq.s32.totalorder %s29, 0
      %p77 = por %p75, %p76
      %s79 = sadd.s32 %s78, 1
      %p82 = scmp.eq.s32.totalorder %s23, 1
      %p83 = scmp.ne.s32.totalorder %s78, %s80
      %p84 = scmp.eq.s32.totalorder %s23, 0
      %p85 = por %p83, %p84
      %p86 = scmp.ne.s32.totalorder %s78, %s80
      %p87 = scmp.eq.s32.totalorder %s28, 1
      %p88 = por %p86, %p87
      %p89 = scmp.ne.s32.totalorder %s80, %s81
      %p90 = scmp.eq.s32.totalorder %s28, 0
      %p91 = por %p89, %p90
      %p92 = scmp.ne.s32.totalorder %s80, %s81
      %p93 = scmp.eq.s32.totalorder %s29, 1
      %p94 = por %p92, %p93
      %p96 = scmp.ne.s32.totalorder %s81, %s95
      %p97 = scmp.eq.s32.totalorder %s29, 0
      %p98 = por %p96, %p97
      %s100 = sadd.s32 %s99, 1
      %p103 = scmp.eq.s32.totalorder %s23, 1
      %p104 = scmp.ne.s32.totalorder %s99, %s101
      %p105 = scmp.eq.s32.totalorder %s23, 0
      %p106 = por %p104, %p105
      %p107 = scmp.ne.s32.totalorder %s99, %s101
      %p108 = scmp.eq.s32.totalorder %s28, 1
      %p109 = por %p107, %p108
      %p110 = scmp.ne.s32.totalorder %s101, %s102
      %p111 = scmp.eq.s32.totalorder %s28, 0
      %p112 = por %p110, %p111
      %p113 = scmp.ne.s32.totalorder %s101, %s102
      %p114 = scmp.eq.s32.totalorder %s29, 1
      %p115 = por %p113, %p114
      %p117 = scmp.ne.s32.totalorder %s102, %s116
      %p118 = scmp.eq.s32.totalorder %s29, 0
      %p119 = por %p117, %p118
      %s121 = sadd.s32 %s120, 1
      %p124 = scmp.eq.s32.totalorder %s23, 1
      %p125 = scmp.ne.s32.totalorder %s120, %s122
      %p126 = scmp.eq.s32.totalorder %s23, 0
      %p127 = por %p125, %p126
      %p128 = scmp.ne.s32.totalorder %s120, %s122
      %p129 = scmp.eq.s32.totalorder %s28, 1
      %p130 = por %p128, %p129
      %p131 = scmp.ne.s32.totalorder %s122, %s123
      %p132 = scmp.eq.s32.totalorder %s28, 0
      %p133 = por %p131, %p132
      %p134 = scmp.ne.s32.totalorder %s122, %s123
      %p135 = scmp.eq.s32.totalorder %s29, 1
      %p136 = por %p134, %p135
      %p138 = scmp.ne.s32.totalorder %s123, %s137
      %p139 = scmp.eq.s32.totalorder %s29, 0
      %p140 = por %p138, %p139
      %s142 = sadd.s32 %s141, 1
      %p145 = scmp.eq.s32.totalorder %s23, 1
      %p146 = scmp.ne.s32.totalorder %s141, %s143
      %p147 = scmp.eq.s32.totalorder %s23, 0
      %p148 = por %p146, %p147
      %p149 = scmp.ne.s32.totalorder %s141, %s143
      %p150 = scmp.eq.s32.totalorder %s28, 1
      %p151 = por %p149, %p150
      %p152 = scmp.ne.s32.totalorder %s143, %s144
      %p153 = scmp.eq.s32.totalorder %s28, 0
      %p154 = por %p152, %p153
      %p155 = scmp.ne.s32.totalorder %s143, %s144
      %p156 = scmp.eq.s32.totalorder %s29, 1
      %p157 = por %p155, %p156
      %p159 = scmp.ne.s32.totalorder %s144, %s158
      %p160 = scmp.eq.s32.totalorder %s29, 0
      %p161 = por %p159, %p160
      %s163 = sadd.s32 %s162, 1
      %p166 = scmp.eq.s32.totalorder %s23, 1
      %p167 = scmp.ne.s32.totalorder %s162, %s164
      %p168 = scmp.eq.s32.totalorder %s23, 0
      %p169 = por %p167, %p168
      %p170 = scmp.ne.s32.totalorder %s162, %s164
      %p171 = scmp.eq.s32.totalorder %s28, 1
      %p172 = por %p170, %p171
      %p173 = scmp.ne.s32.totalorder %s164, %s165
      %p174 = scmp.eq.s32.totalorder %s28, 0
      %p175 = por %p173, %p174
      %p176 = scmp.ne.s32.totalorder %s164, %s165
      %p177 = scmp.eq.s32.totalorder %s29, 1
      %p178 = por %p176, %p177
      %p180 = scmp.ne.s32.totalorder %s165, %s179
      %p181 = scmp.eq.s32.totalorder %s29, 0
      %p182 = por %p180, %p181
      %s184 = sadd.s32 %s183, 1
      %p187 = scmp.eq.s32.totalorder %s23, 1
      %p188 = scmp.ne.s32.totalorder %s183, %s185
      %p189 = scmp.eq.s32.totalorder %s23, 0
      %p190 = por %p188, %p189
      %p191 = scmp.ne.s32.totalorder %s183, %s185
      %p192 = scmp.eq.s32.totalorder %s28, 1
      %p193 = por %p191, %p192
      %p194 = scmp.ne.s32.totalorder %s185, %s186
      %p195 = scmp.eq.s32.totalorder %s28, 0
      %p196 = por %p194, %p195
      %p197 = scmp.ne.s32.totalorder %s185, %s186
      %p198 = scmp.eq.s32.totalorder %s29, 1
      %p199 = por %p197, %p198
      %p201 = scmp.ne.s32.totalorder %s186, %s200
      %p202 = scmp.eq.s32.totalorder %s29, 0
      %p203 = por %p201, %p202
      %s205 = sadd.s32 %s204, 1
      %p208 = scmp.eq.s32.totalorder %s23, 1
      %p209 = scmp.ne.s32.totalorder %s204, %s206
      %p210 = scmp.eq.s32.totalorder %s23, 0
      %p211 = por %p209, %p210
      %p212 = scmp.ne.s32.totalorder %s204, %s206
      %p213 = scmp.eq.s32.totalorder %s28, 1
      %p214 = por %p212, %p213
      %p215 = scmp.ne.s32.totalorder %s206, %s207
      %p216 = scmp.eq.s32.totalorder %s28, 0
      %p217 = por %p215, %p216
      %p218 = scmp.ne.s32.totalorder %s206, %s207
      %p219 = scmp.eq.s32.totalorder %s29, 1
      %p220 = por %p218, %p219
      %p222 = scmp.ne.s32.totalorder %s207, %s221
      %p223 = scmp.eq.s32.totalorder %s29, 0
      %p224 = por %p222, %p223
      %s225 = ssub.s32 %s23, %s30
      %p226 = scmp.eq.s32.totalorder %s225, 0
      %s228 = sadd.s32 %s227, 1
      %s229 = scalar_select %p226, %s227, %s228
      %p232 = pneg %p226
      %p233 = scmp.eq.s32.totalorder %s23, 1
      %p234 = por %p232, %p233
      %p235 = scmp.ne.s32.totalorder %s227, %s230
      %p236 = scmp.eq.s32.totalorder %s23, 0
      %p237 = por %p235, %p236
      %p238 = scmp.ne.s32.totalorder %s227, %s230
      %p239 = scmp.eq.s32.totalorder %s28, 1
      %p240 = por %p238, %p239
      %p241 = scmp.ne.s32.totalorder %s230, %s231
      %p242 = scmp.eq.s32.totalorder %s28, 0
      %p243 = por %p241, %p242
      %p244 = scmp.ne.s32.totalorder %s230, %s231
      %p245 = scmp.eq.s32.totalorder %s29, 1
      %p246 = por %p244, %p245
      %p248 = scmp.ne.s32.totalorder %s231, %s247
      %p249 = scmp.eq.s32.totalorder %s29, 0
      %p250 = por %p248, %p249
      %s251 = ssub.s32 %s23, %s30
      %p252 = scmp.eq.s32.totalorder %s251, 0
      %s254 = sadd.s32 %s253, 1
      %s255 = scalar_select %p252, %s253, %s254
      %p258 = pneg %p252
      %p259 = scmp.eq.s32.totalorder %s23, 1
      %p260 = por %p258, %p259
      %p261 = scmp.ne.s32.totalorder %s253, %s256
      %p262 = scmp.eq.s32.totalorder %s23, 0
      %p263 = por %p261, %p262
      %p264 = scmp.ne.s32.totalorder %s253, %s256
      %p265 = scmp.eq.s32.totalorder %s28, 1
      %p266 = por %p264, %p265
      %p267 = scmp.ne.s32.totalorder %s256, %s257
      %p268 = scmp.eq.s32.totalorder %s28, 0
      %p269 = por %p267, %p268
      %p270 = scmp.ne.s32.totalorder %s256, %s257
      %p271 = scmp.eq.s32.totalorder %s29, 1
      %p272 = por %p270, %p271
      %p274 = scmp.ne.s32.totalorder %s257, %s273
      %p275 = scmp.eq.s32.totalorder %s29, 0
      %p276 = por %p274, %p275
      %s277 = ssub.s32 %s23, %s30
      %p278 = scmp.eq.s32.totalorder %s277, 0
      %s280 = sadd.s32 %s279, 1
      %s281 = scalar_select %p278, %s279, %s280
      %p284 = pneg %p278
      %p285 = scmp.eq.s32.totalorder %s23, 1
      %p286 = por %p284, %p285
      %p287 = scmp.ne.s32.totalorder %s279, %s282
      %p288 = scmp.eq.s32.totalorder %s23, 0
      %p289 = por %p287, %p288
      %p290 = scmp.ne.s32.totalorder %s279, %s282
      %p291 = scmp.eq.s32.totalorder %s28, 1
      %p292 = por %p290, %p291
      %p293 = scmp.ne.s32.totalorder %s282, %s283
      %p294 = scmp.eq.s32.totalorder %s28, 0
      %p295 = por %p293, %p294
      %p296 = scmp.ne.s32.totalorder %s282, %s283
      %p297 = scmp.eq.s32.totalorder %s29, 1
      %p298 = por %p296, %p297
      %p300 = scmp.ne.s32.totalorder %s283, %s299
      %p301 = scmp.eq.s32.totalorder %s29, 0
      %p302 = por %p300, %p301
      %p303 = scmp.le.s32.totalorder 1, %s23
      %p304 = scmp.lt.s32.totalorder %s23, 3
      %p305 = pnand %p303, %p304
      %p306 = pneg %p305
      // Predicated region
      $region9: #{clustering_model_forward.1} parent=5 // pred_check
        _
      $region10: #{clustering_model_forward.1} parent=5 // pred_check_branch
        %308 = sbr.rel (%p305) target = $region12
      $region11: #{clustering_model_forward.1} parent=5 // pred_region
        %s309 = ssub.s32 %s23, 1
        // Predicated region
        $region13: #{clustering_model_forward.1} parent=11 // pred_check
          %p310 = pneg %p70
        $region14: #{clustering_model_forward.1} parent=11 // pred_check_branch
          %312 = sbr.rel (%p310) target = $region16
        $region15: #{clustering_model_forward.1} parent=11 // pred_region
          _
        $region16: #{clustering_model_forward.1} parent=11 // pred_fallthru
          _
        // Predicated region
        $region17: #{clustering_model_forward.1} parent=11 // pred_check
          %p313 = pneg %p91
        $region18: #{clustering_model_forward.1} parent=11 // pred_check_branch
          %315 = sbr.rel (%p313) target = $region20
        $region19: #{clustering_model_forward.1} parent=11 // pred_region
          _
        $region20: #{clustering_model_forward.1} parent=11 // pred_fallthru
          _
        // Predicated region
        $region21: #{clustering_model_forward.1} parent=11 // pred_check
          %p316 = pneg %p112
        $region22: #{clustering_model_forward.1} parent=11 // pred_check_branch
          %318 = sbr.rel (%p316) target = $region24
        $region23: #{clustering_model_forward.1} parent=11 // pred_region
          %s320 = ssub.s32 30720, 30720
          %321 = vsyncadd [#allocation6], %s320
          %s322 = sshll.u32 [#allocation5], 4
          %s323 = int_to_ptr.vmem [resolvable:$true] %s322
          %328 = dma.hbm_to_vmem [thread:$0]  %s3, 30720, %s323, [#allocation6], 64, 64, 4
        $region24: #{clustering_model_forward.1} parent=11 // pred_fallthru
          _
        // Predicated region
        $region25: #{clustering_model_forward.1} parent=11 // pred_check
          %p329 = pneg %p133
        $region26: #{clustering_model_forward.1} parent=11 // pred_check_branch
          %331 = sbr.rel (%p329) target = $region28
        $region27: #{clustering_model_forward.1} parent=11 // pred_region
          _
        $region28: #{clustering_model_forward.1} parent=11 // pred_fallthru
          _
        // Predicated region
        $region29: #{clustering_model_forward.1} parent=11 // pred_check
          %p332 = pneg %p154
        $region30: #{clustering_model_forward.1} parent=11 // pred_check_branch
          %334 = sbr.rel (%p332) target = $region32
        $region31: #{clustering_model_forward.1} parent=11 // pred_region
          _
        $region32: #{clustering_model_forward.1} parent=11 // pred_fallthru
          _
        // Predicated region
        $region33: #{clustering_model_forward.1} parent=11 // pred_check
          %p335 = pneg %p175
        $region34: #{clustering_model_forward.1} parent=11 // pred_check_branch
          %337 = sbr.rel (%p335) target = $region36
        $region35: #{clustering_model_forward.1} parent=11 // pred_region
          _
        $region36: #{clustering_model_forward.1} parent=11 // pred_fallthru
          _
        // Predicated region
        $region37: #{clustering_model_forward.1} parent=11 // pred_check
          %p338 = pneg %p196
        $region38: #{clustering_model_forward.1} parent=11 // pred_check_branch
          %340 = sbr.rel (%p338) target = $region40
        $region39: #{clustering_model_forward.1} parent=11 // pred_region
          %s342 = ssub.s32 2048, 2048
          %343 = vsyncadd [#allocation9], %s342
          %s344 = sshll.u32 [#allocation8], 4
          %s345 = int_to_ptr.vmem [resolvable:$true] %s344
          %350 = dma.hbm_to_vmem [thread:$0]  %s7, 2048, %s345, [#allocation9], 64, 64, 4
        $region40: #{clustering_model_forward.1} parent=11 // pred_fallthru
          _
        // Predicated region
        $region41: #{clustering_model_forward.1} parent=11 // pred_check
          %p351 = pneg %p217
        $region42: #{clustering_model_forward.1} parent=11 // pred_check_branch
          %353 = sbr.rel (%p351) target = $region44
        $region43: #{clustering_model_forward.1} parent=11 // pred_region
          _
        $region44: #{clustering_model_forward.1} parent=11 // pred_fallthru
          _
      $region12: #{clustering_model_forward.1} parent=5 // pred_fallthru
        _
      %p354 = scmp.lt.s32.totalorder %s23, 2
      // Predicated region
      $region45: #{clustering_model_forward.1} parent=5 // pred_check
        %p355 = pneg %p354
      $region46: #{clustering_model_forward.1} parent=5 // pred_check_branch
        %357 = sbr.rel (%p355) target = $region48
      $region47: #{clustering_model_forward.1} parent=5 // pred_region
        // Predicated region
        $region49: #{clustering_model_forward.1} parent=47 // pred_check
          %p358 = pneg %p43
        $region50: #{clustering_model_forward.1} parent=47 // pred_check_branch
          %360 = sbr.rel (%p358) target = $region52
        $region51: #{clustering_model_forward.1} parent=47 // pred_region
          %p361 = scmp.lt.s32.totalorder %s23, 1
          %s362 = scalar_select %p361, %s23, 1
          %s363 = smul.addr %s362, 3
          %s364 = smul.addr %s363, 8
          %s365 = scalar_lea.vmem %s0, %s364
        $region52: #{clustering_model_forward.1} parent=47 // pred_fallthru
          _
      $region48: #{clustering_model_forward.1} parent=5 // pred_fallthru
        _
      %p366 = scmp.le.s32.totalorder 1, %s23
      %p367 = scmp.lt.s32.totalorder %s23, 3
      %p368 = pnand %p366, %p367
      %p369 = pneg %p368
      // Predicated region
      $region53: #{clustering_model_forward.1} parent=5 // pred_check
        _
      $region54: #{clustering_model_forward.1} parent=5 // pred_check_branch
        %371 = sbr.rel (%p368) target = $region56
      $region55: #{clustering_model_forward.1} parent=5 // pred_region
        %s372 = ssub.s32 %s23, 1
        // Predicated region
        $region57: #{clustering_model_forward.1} parent=55 // pred_check
          %p373 = pneg %p112
        $region58: #{clustering_model_forward.1} parent=55 // pred_check_branch
          %375 = sbr.rel (%p373) target = $region60
        $region59: #{clustering_model_forward.1} parent=55 // pred_region
          %376 = dma.done [#allocation6], 30720
        $region60: #{clustering_model_forward.1} parent=55 // pred_fallthru
          _
        // Predicated region
        $region61: #{clustering_model_forward.1} parent=55 // pred_check
          %p377 = pneg %p196
        $region62: #{clustering_model_forward.1} parent=55 // pred_check_branch
          %379 = sbr.rel (%p377) target = $region64
        $region63: #{clustering_model_forward.1} parent=55 // pred_region
          %380 = dma.done [#allocation9], 2048
        $region64: #{clustering_model_forward.1} parent=55 // pred_fallthru
          _
        %p381 = scmp.lt.s32.totalorder %s28, 1
        %s382 = scalar_select %p381, %s28, 1
        %s383 = smul.addr %s382, 3
        %s384 = smul.addr %s383, 8
        %s385 = scalar_lea.vmem %s0, %s384
        %p386 = pneg %p49
        %p387 = pneg %p46
        %p388 = pneg %p70
        %p389 = pneg %p67
        %p390 = pneg %p91
        %p391 = pneg %p88
        %p392 = pneg %p112
        %p393 = pneg %p109
        %p394 = pneg %p133
        %p395 = pneg %p130
        %p396 = pneg %p154
        %p397 = pneg %p151
        %p398 = pneg %p175
        %p399 = pneg %p172
        %p400 = pneg %p196
        %p401 = pneg %p193
        %p402 = pneg %p217
        %p403 = pneg %p214
        %p404 = pneg %p243
        %p405 = pneg %p240
        %p406 = scmp.lt.s32.totalorder %s28, 1
        %s407 = scalar_select %p406, %s28, 1
        %s408 = smul.addr %s407, 2
        %s409 = scalar_lea.vmem %s9, %s408
        %p410 = pneg %p269
        %p411 = pneg %p266
        %p412 = scmp.lt.s32.totalorder %s28, 1
        %s413 = scalar_select %p412, %s28, 1
        %s414 = smul.addr %s413, 3
        %s415 = smul.addr %s414, 8
        %s416 = scalar_lea.vmem %s10, %s415
        %p417 = pneg %p295
        %p418 = pneg %p292
        %s419 = sand.u32 %s282, 1
        %s420 = scalar_lea.sflag [#allocation7], %s419
        %s421 = sand.u32 %s282, 1
        %s422 = scalar_lea.vmem [#allocation10], %s421
        %p423 = scmp.lt.s32.totalorder %s28, 1
        %s424 = scalar_select %p423, %s28, 1
        %s425 = smul.addr %s424, 3
        %s426 = smul.addr %s425, 8
        %s427 = scalar_lea.vmem %s0, %s426
        %p428 = scmp.lt.s32.totalorder %s28, 1
        %s429 = scalar_select %p428, %s28, 1
        %s430 = smul.addr %s429, 2
        %s431 = scalar_lea.vmem %s9, %s430
        %p432 = scmp.lt.s32.totalorder %s28, 1
        %s433 = scalar_select %p432, %s28, 1
        %s434 = smul.addr %s433, 3
        %s435 = smul.addr %s434, 8
        %s436 = scalar_lea.vmem %s10, %s435
        %438 = vst [vmem:[#allocation2] sm:$0xff] 0.0
        %439 = vst [vmem:[#allocation2 + $0x8] sm:$0xff] 0.0
        %440 = vst [vmem:[#allocation2 + $0x10] sm:$0xff] 0.0
        %441 = vst [vmem:[#allocation3] sm:$0xff] 0.0
        %442 = vst [vmem:[#allocation3 + $0x8] sm:$0xff] 0.0
        %443 = vst [vmem:[#allocation4] sm:$0xff] 0.0
        %v444 = vld [vmem:[%s427] sm:$0xff]
        %v445 = vld [vmem:[%s427 + $0x8] sm:$0xff]
        %v446 = vld [vmem:[%s427 + $0x10] sm:$0xf]
        %v447 = vld [vmem:[%s1] sm:$0x7]
        %v448 = vld [vmem:[%s2] sm:$0x1]
        %v450 = vlaneseq
        %v451 = vshrl.u32 %v450, 7
        %v452 = vsub.s32 0, %v451
        %v453 = vrot.slane %v448, %v452
        %vm455 = vcmask 23552
        %v457 = vsel %vm455, %v444, 0
        %v460 = vsel %vm455, %v445, 0
        %v463 = vsel %vm455, %v446, 0
        %vm465 = vcmask 1042432
        %v467 = vsel %vm465, %v447, 0
        %469 = vmatprep.subr.mxu0 0.0
        %470 = vmatpush1.msra.mxu0 %v467
        %471 = vmatprep.subr.mxu0 0.0
        %472 = vmatpush1.msra.mxu0 0.0
        %473 = vmatprep.subr.mxu0 0.0
        %474 = vmatpush1.msra.mxu0 0.0
        %475 = vmatprep.subr.mxu0 0.0
        %476 = vmatpush1.msra.mxu0 0.0
        %477 = vmatprep.subr.mxu0 0.0
        %478 = vmatpush1.msra.mxu0 0.0
        %479 = vmatprep.subr.mxu0 0.0
        %480 = vmatpush1.msra.mxu0 0.0
        %481 = vmatprep.subr.mxu0 0.0
        %482 = vmatpush1.msra.mxu0 0.0
        %483 = vmatprep.subr.mxu0 0.0
        %484 = vmatpush1.msra.mxu0 0.0
        %485 = vmatprep.subr.mxu0 0.0
        %486 = vmatpush1.msra.mxu0 0.0
        %487 = vmatprep.subr.mxu0 0.0
        %488 = vmatpush1.msra.mxu0 0.0
        %489 = vmatprep.subr.mxu0 0.0
        %490 = vmatpush1.msra.mxu0 0.0
        %491 = vmatprep.subr.mxu0 0.0
        %492 = vmatpush1.msra.mxu0 0.0
        %493 = vmatprep.subr.mxu0 0.0
        %494 = vmatpush1.msra.mxu0 0.0
        %495 = vmatprep.subr.mxu0 0.0
        %496 = vmatpush1.msra.mxu0 0.0
        %497 = vmatprep.subr.mxu0 0.0
        %498 = vmatpush1.msra.mxu0 0.0
        %499 = vmatprep.subr.mxu0 0.0
        %500 = vmatpush1.msra.mxu0 0.0
        %501 = vmatprep.subr.mxu0 0.0
        %502 = vmatpush1.msra.mxu0 0.0
        %503 = vmatprep.subr.mxu0 0.0
        %504 = vmatpush1.msra.mxu0 0.0
        %505 = vmatprep.subr.mxu0 0.0
        %506 = vmatpush1.msra.mxu0 0.0
        %507 = vmatprep.subr.mxu0 0.0
        %508 = vmatpush1.msra.mxu0 0.0
        %509 = vmatprep.subr.mxu0 0.0
        %510 = vmatpush1.msra.mxu0 0.0
        %511 = vmatprep.subr.mxu0 0.0
        %512 = vmatpush1.msra.mxu0 0.0
        %513 = vmatprep.subr.mxu0 0.0
        %514 = vmatpush1.msra.mxu0 0.0
        %515 = vmatprep.subr.mxu0 0.0
        %516 = vmatpush1.msra.mxu0 0.0
        %517 = vmatprep.subr.mxu0 0.0
        %518 = vmatpush1.msra.mxu0 0.0
        %519 = vmatprep.subr.mxu0 0.0
        %520 = vmatpush1.msra.mxu0 0.0
        %521 = vmatprep.subr.mxu0 0.0
        %522 = vmatpush1.msra.mxu0 0.0
        %523 = vmatprep.subr.mxu0 0.0
        %524 = vmatpush1.msra.mxu0 0.0
        %525 = vmatprep.subr.mxu0 0.0
        %526 = vmatpush1.msra.mxu0 0.0
        %527 = vmatprep.subr.mxu0 0.0
        %528 = vmatpush1.msra.mxu0 0.0
        %529 = vmatprep.subr.mxu0 0.0
        %530 = vmatpush1.msra.mxu0 0.0
        %531 = vmatprep.subr.mxu0 0.0
        %532 = vmatpush1.msra.mxu0 0.0
        %533 = vmatprep.mubr.f32.mxu0 0.0
        %534 = vmatmul.mubr.f32.gmra.mrb[0].mxu0 %v457
        %v535 = vpop.f32.mrb[0].mxu0
        %v536 = vadd.f32 %v453, %v535
        %v537 = vpop.f32.mrb[0].mxu0
        %538 = vmatprep.mubr.f32.mxu0 0.0
        %539 = vmatmul.mubr.f32.gmra.mrb[0].mxu0 %v460
        %v540 = vpop.f32.mrb[0].mxu0
        %v541 = vadd.f32 %v453, %v540
        %v542 = vpop.f32.mrb[0].mxu0
        %543 = vmatprep.mubr.f32.mxu0 0.0
        %544 = vmatmul.mubr.f32.gmra.mrb[0].mxu0 %v463
        %v545 = vpop.f32.mrb[0].mxu0
        %v546 = vadd.f32 %v453, %v545
        %v547 = vpop.f32.mrb[0].mxu0
        %548 = vdwg.mxu0
        %549 = vst [vmem:[#allocation2 + $0x2] sm:$0xff] %v536
        %550 = vst [vmem:[#allocation2 + $0xa] sm:$0xff] %v541
        %551 = vst [vmem:[#allocation2 + $0x12] sm:$0xf] %v546
        %v552 = vld [vmem:[#allocation2] sm:$0xff]
        %v553 = vld [vmem:[#allocation2 + $0x8] sm:$0xff]
        %v554 = vld [vmem:[#allocation2 + $0x10] sm:$0xf]
        %v555 = vld [vmem:[#allocation2 + $0x1] sm:$0xff]
        %v556 = vld [vmem:[#allocation2 + $0x9] sm:$0xff]
        %v557 = vld [vmem:[#allocation2 + $0x11] sm:$0xf]
        %v558 = vld [vmem:[#allocation2 + $0x2] sm:$0xff]
        %v559 = vld [vmem:[#allocation2 + $0xa] sm:$0xff]
        %v560 = vld [vmem:[#allocation2 + $0x12] sm:$0xf]
        %v561 = vld [vmem:[#allocation2 + $0x3] sm:$0xff]
        %v562 = vld [vmem:[#allocation2 + $0xb] sm:$0xff]
        %v563 = vld [vmem:[#allocation2 + $0x13] sm:$0xf]
        %v564 = vld [vmem:[#allocation2 + $0x4] sm:$0xff]
        %v565 = vld [vmem:[#allocation2 + $0xc] sm:$0xff]
        %v566 = vld [vmem:[#allocation2 + $0x14] sm:$0xf]
        %v567 = vpack.c.bf16 %v553, %v552
        %v568 = vpack.c.bf16 %v556, %v555
        %v569 = vpack.c.bf16 %v559, %v558
        %v570 = vpack.c.bf16 %v562, %v561
        %v571 = vpack.c.bf16 %v565, %v564
        %v572 = vpack.c.bf16 %v554, %v554
        %v573 = vpack.c.bf16 %v557, %v557
        %v574 = vpack.c.bf16 %v560, %v560
        %v575 = vpack.c.bf16 %v563, %v563
        %v576 = vpack.c.bf16 %v566, %v566
        %v577 = vld [vmem:[#allocation5] sm:$0xf]
        %v578 = vld [vmem:[#allocation5 + $0x4] sm:$0xf]
        %v579 = vld [vmem:[#allocation5 + $0x8] sm:$0xf]
        %v580 = vld [vmem:[#allocation5 + $0xc] sm:$0xf]
        %v581 = vld [vmem:[#allocation5 + $0x10] sm:$0xf]
        %v582 = vld [vmem:[#allocation5 + $0x14] sm:$0xf]
        %v583 = vld [vmem:[#allocation5 + $0x18] sm:$0xf]
        %v584 = vld [vmem:[#allocation5 + $0x1c] sm:$0xf]
        %v585 = vld [vmem:[#allocation5 + $0x20] sm:$0xf]
        %v586 = vld [vmem:[#allocation5 + $0x24] sm:$0xf]
        %v587 = vld [vmem:[#allocation5 + $0x28] sm:$0xf]
        %v588 = vld [vmem:[#allocation5 + $0x2c] sm:$0xf]
        %v589 = vld [vmem:[#allocation5 + $0x30] sm:$0xf]
        %v590 = vld [vmem:[#allocation5 + $0x34] sm:$0xf]
        %v591 = vld [vmem:[#allocation5 + $0x38] sm:$0xf]
        %v592 = vld [vmem:[#allocation5 + $0x3c] sm:$0xf]
        %v593 = vld [vmem:[#allocation5 + $0x40] sm:$0xf]
        %v594 = vld [vmem:[#allocation5 + $0x44] sm:$0xf]
        %v595 = vld [vmem:[#allocation5 + $0x48] sm:$0xf]
        %v596 = vld [vmem:[#allocation5 + $0x4c] sm:$0xf]
        %v597 = vld [vmem:[#allocation5 + $0x50] sm:$0xf]
        %v598 = vld [vmem:[#allocation5 + $0x54] sm:$0xf]
        %v599 = vld [vmem:[#allocation5 + $0x58] sm:$0xf]
        %v600 = vld [vmem:[#allocation5 + $0x5c] sm:$0xf]
        %v601 = vld [vmem:[#allocation5 + $0x60] sm:$0xf]
        %v602 = vld [vmem:[#allocation5 + $0x64] sm:$0xf]
        %v603 = vld [vmem:[#allocation5 + $0x68] sm:$0xf]
        %v604 = vld [vmem:[#allocation5 + $0x6c] sm:$0xf]
        %v605 = vld [vmem:[#allocation5 + $0x70] sm:$0xf]
        %v606 = vld [vmem:[#allocation5 + $0x74] sm:$0xf]
        %v607 = vld [vmem:[#allocation5 + $0x78] sm:$0xf]
        %v608 = vld [vmem:[#allocation5 + $0x7c] sm:$0xf]
        %v609 = vld [vmem:[#allocation5 + $0x80] sm:$0xf]
        %v610 = vld [vmem:[#allocation5 + $0x84] sm:$0xf]
        %v611 = vld [vmem:[#allocation5 + $0x88] sm:$0xf]
        %v612 = vld [vmem:[#allocation5 + $0x8c] sm:$0xf]
        %v613 = vld [vmem:[#allocation5 + $0x90] sm:$0xf]
        %v614 = vld [vmem:[#allocation5 + $0x94] sm:$0xf]
        %v615 = vld [vmem:[#allocation5 + $0x98] sm:$0xf]
        %v616 = vld [vmem:[#allocation5 + $0x9c] sm:$0xf]
        %v617 = vld [vmem:[#allocation5 + $0xa0] sm:$0xf]
        %v618 = vld [vmem:[#allocation5 + $0xa4] sm:$0xf]
        %v619 = vld [vmem:[#allocation5 + $0xa8] sm:$0xf]
        %v620 = vld [vmem:[#allocation5 + $0xac] sm:$0xf]
        %v621 = vld [vmem:[#allocation5 + $0xb0] sm:$0xf]
        %v622 = vld [vmem:[#allocation5 + $0xb4] sm:$0xf]
        %v623 = vld [vmem:[#allocation5 + $0xb8] sm:$0xf]
        %v624 = vld [vmem:[#allocation5 + $0xbc] sm:$0xf]
        %v625 = vld [vmem:[#allocation5 + $0xc0] sm:$0xf]
        %v626 = vld [vmem:[#allocation5 + $0xc4] sm:$0xf]
        %v627 = vld [vmem:[#allocation5 + $0xc8] sm:$0xf]
        %v628 = vld [vmem:[#allocation5 + $0xcc] sm:$0xf]
        %v629 = vld [vmem:[#allocation5 + $0xd0] sm:$0xf]
        %v630 = vld [vmem:[#allocation5 + $0xd4] sm:$0xf]
        %v631 = vld [vmem:[#allocation5 + $0xd8] sm:$0xf]
        %v632 = vld [vmem:[#allocation5 + $0xdc] sm:$0xf]
        %v633 = vld [vmem:[#allocation5 + $0xe0] sm:$0xf]
        %v634 = vld [vmem:[#allocation5 + $0xe4] sm:$0xf]
        %v635 = vld [vmem:[#allocation5 + $0xe8] sm:$0xf]
        %v636 = vld [vmem:[#allocation5 + $0xec] sm:$0xf]
        %v637 = vld [vmem:[#allocation5 + $0xf0] sm:$0xf]
        %v638 = vld [vmem:[#allocation5 + $0xf4] sm:$0xf]
        %v639 = vld [vmem:[#allocation5 + $0xf8] sm:$0xf]
        %v640 = vld [vmem:[#allocation5 + $0xfc] sm:$0xf]
        %v641 = vld [vmem:[#allocation5 + $0x100] sm:$0xf]
        %v642 = vld [vmem:[#allocation5 + $0x104] sm:$0xf]
        %v643 = vld [vmem:[#allocation5 + $0x108] sm:$0xf]
        %v644 = vld [vmem:[#allocation5 + $0x10c] sm:$0xf]
        %v645 = vld [vmem:[#allocation5 + $0x110] sm:$0xf]
        %v646 = vld [vmem:[#allocation5 + $0x114] sm:$0xf]
        %v647 = vld [vmem:[#allocation5 + $0x118] sm:$0xf]
        %v648 = vld [vmem:[#allocation5 + $0x11c] sm:$0xf]
        %v649 = vld [vmem:[#allocation5 + $0x120] sm:$0xf]
        %v650 = vld [vmem:[#allocation5 + $0x124] sm:$0xf]
        %v651 = vld [vmem:[#allocation5 + $0x128] sm:$0xf]
        %v652 = vld [vmem:[#allocation5 + $0x12c] sm:$0xf]
        %v653 = vld [vmem:[#allocation5 + $0x130] sm:$0xf]
        %v654 = vld [vmem:[#allocation5 + $0x134] sm:$0xf]
        %v655 = vld [vmem:[#allocation5 + $0x138] sm:$0xf]
        %v656 = vld [vmem:[#allocation5 + $0x13c] sm:$0xf]
        %v737 = vunpack.c.l.b16 %v577
        %v738 = vunpack.c.l.b16 %v578
        %v739 = vunpack.c.l.b16 %v579
        %v740 = vunpack.c.l.b16 %v580
        %v741 = vunpack.c.l.b16 %v581
        %v742 = vunpack.c.l.b16 %v582
        %v743 = vunpack.c.l.b16 %v583
        %v744 = vunpack.c.l.b16 %v584
        %v745 = vunpack.c.l.b16 %v585
        %v746 = vunpack.c.l.b16 %v586
        %v747 = vunpack.c.l.b16 %v587
        %v748 = vunpack.c.l.b16 %v588
        %v749 = vunpack.c.l.b16 %v589
        %v750 = vunpack.c.l.b16 %v590
        %v751 = vunpack.c.l.b16 %v591
        %v752 = vunpack.c.l.b16 %v592
        %v753 = vunpack.c.l.b16 %v593
        %v754 = vunpack.c.l.b16 %v594
        %v755 = vunpack.c.l.b16 %v595
        %v756 = vunpack.c.l.b16 %v596
        %v757 = vunpack.c.l.b16 %v597
        %v758 = vunpack.c.l.b16 %v598
        %v759 = vunpack.c.l.b16 %v599
        %v760 = vunpack.c.l.b16 %v600
        %v761 = vunpack.c.l.b16 %v601
        %v762 = vunpack.c.l.b16 %v602
        %v763 = vunpack.c.l.b16 %v603
        %v764 = vunpack.c.l.b16 %v604
        %v765 = vunpack.c.l.b16 %v605
        %v766 = vunpack.c.l.b16 %v606
        %v767 = vunpack.c.l.b16 %v607
        %v768 = vunpack.c.l.b16 %v608
        %v769 = vunpack.c.l.b16 %v609
        %v770 = vunpack.c.l.b16 %v610
        %v771 = vunpack.c.l.b16 %v611
        %v772 = vunpack.c.l.b16 %v612
        %v773 = vunpack.c.l.b16 %v613
        %v774 = vunpack.c.l.b16 %v614
        %v775 = vunpack.c.l.b16 %v615
        %v776 = vunpack.c.l.b16 %v616
        %v777 = vunpack.c.l.b16 %v617
        %v778 = vunpack.c.l.b16 %v618
        %v779 = vunpack.c.l.b16 %v619
        %v780 = vunpack.c.l.b16 %v620
        %v781 = vunpack.c.l.b16 %v621
        %v782 = vunpack.c.l.b16 %v622
        %v783 = vunpack.c.l.b16 %v623
        %v784 = vunpack.c.l.b16 %v624
        %v785 = vunpack.c.l.b16 %v625
        %v786 = vunpack.c.l.b16 %v626
        %v787 = vunpack.c.l.b16 %v627
        %v788 = vunpack.c.l.b16 %v628
        %v789 = vunpack.c.l.b16 %v629
        %v790 = vunpack.c.l.b16 %v630
        %v791 = vunpack.c.l.b16 %v631
        %v792 = vunpack.c.l.b16 %v632
        %v793 = vunpack.c.l.b16 %v633
        %v794 = vunpack.c.l.b16 %v634
        %v795 = vunpack.c.l.b16 %v635
        %v796 = vunpack.c.l.b16 %v636
        %v797 = vunpack.c.l.b16 %v637
        %v798 = vunpack.c.l.b16 %v638
        %v799 = vunpack.c.l.b16 %v639
        %v800 = vunpack.c.l.b16 %v640
        %v801 = vunpack.c.l.b16 %v641
        %v802 = vunpack.c.l.b16 %v642
        %v803 = vunpack.c.l.b16 %v643
        %v804 = vunpack.c.l.b16 %v644
        %v805 = vunpack.c.l.b16 %v645
        %v806 = vunpack.c.l.b16 %v646
        %v807 = vunpack.c.l.b16 %v647
        %v808 = vunpack.c.l.b16 %v648
        %v809 = vunpack.c.l.b16 %v649
        %v810 = vunpack.c.l.b16 %v650
        %v811 = vunpack.c.l.b16 %v651
        %v812 = vunpack.c.l.b16 %v652
        %v813 = vunpack.c.l.b16 %v653
        %v814 = vunpack.c.l.b16 %v654
        %v815 = vunpack.c.l.b16 %v655
        %v816 = vunpack.c.l.b16 %v656
        %v817 = vpack.c.b16 %v738, %v737
        %v818 = vpack.c.b16 %v740, %v739
        %v819 = vpack.c.b16 %v742, %v741
        %v820 = vpack.c.b16 %v744, %v743
        %v821 = vpack.c.b16 %v746, %v745
        %v822 = vpack.c.b16 %v748, %v747
        %v823 = vpack.c.b16 %v750, %v749
        %v824 = vpack.c.b16 %v752, %v751
        %v825 = vpack.c.b16 %v754, %v753
        %v826 = vpack.c.b16 %v756, %v755
        %v827 = vpack.c.b16 %v758, %v757
        %v828 = vpack.c.b16 %v760, %v759
        %v829 = vpack.c.b16 %v762, %v761
        %v830 = vpack.c.b16 %v764, %v763
        %v831 = vpack.c.b16 %v766, %v765
        %v832 = vpack.c.b16 %v768, %v767
        %v833 = vpack.c.b16 %v770, %v769
        %v834 = vpack.c.b16 %v772, %v771
        %v835 = vpack.c.b16 %v774, %v773
        %v836 = vpack.c.b16 %v776, %v775
        %v837 = vpack.c.b16 %v778, %v777
        %v838 = vpack.c.b16 %v780, %v779
        %v839 = vpack.c.b16 %v782, %v781
        %v840 = vpack.c.b16 %v784, %v783
        %v841 = vpack.c.b16 %v786, %v785
        %v842 = vpack.c.b16 %v788, %v787
        %v843 = vpack.c.b16 %v790, %v789
        %v844 = vpack.c.b16 %v792, %v791
        %v845 = vpack.c.b16 %v794, %v793
        %v846 = vpack.c.b16 %v796, %v795
        %v847 = vpack.c.b16 %v798, %v797
        %v848 = vpack.c.b16 %v800, %v799
        %v849 = vpack.c.b16 %v802, %v801
        %v850 = vpack.c.b16 %v804, %v803
        %v851 = vpack.c.b16 %v806, %v805
        %v852 = vpack.c.b16 %v808, %v807
        %v853 = vpack.c.b16 %v810, %v809
        %v854 = vpack.c.b16 %v812, %v811
        %v855 = vpack.c.b16 %v814, %v813
        %v856 = vpack.c.b16 %v816, %v815
        %897 = vmatprep.subr.bf16.mxu0 0
        %898 = vmatpush1.bf16.msra.mxu0 %v817
        %899 = vmatprep.subr.bf16.mxu0 0
        %900 = vmatpush1.bf16.msra.mxu0 %v818
        %901 = vmatprep.subr.bf16.mxu0 0
        %902 = vmatpush1.bf16.msra.mxu0 %v819
        %903 = vmatprep.subr.bf16.mxu0 0
        %904 = vmatpush1.bf16.msra.mxu0 %v820
        %905 = vmatprep.subr.bf16.mxu0 0
        %906 = vmatpush1.bf16.msra.mxu0 %v821
        %907 = vmatprep.subr.bf16.mxu0 0
        %908 = vmatpush1.bf16.msra.mxu0 %v822
        %909 = vmatprep.subr.bf16.mxu0 0
        %910 = vmatpush1.bf16.msra.mxu0 %v823
        %911 = vmatprep.subr.bf16.mxu0 0
        %912 = vmatpush1.bf16.msra.mxu0 %v824
        %913 = vmatprep.subr.bf16.mxu0 0
        %914 = vmatpush1.bf16.msra.mxu0 %v825
        %915 = vmatprep.subr.bf16.mxu0 0
        %916 = vmatpush1.bf16.msra.mxu0 %v826
        %917 = vmatprep.subr.bf16.mxu0 0
        %918 = vmatpush1.bf16.msra.mxu0 %v827
        %919 = vmatprep.subr.bf16.mxu0 0
        %920 = vmatpush1.bf16.msra.mxu0 %v828
        %921 = vmatprep.subr.bf16.mxu0 0
        %922 = vmatpush1.bf16.msra.mxu0 %v829
        %923 = vmatprep.subr.bf16.mxu0 0
        %924 = vmatpush1.bf16.msra.mxu0 %v830
        %925 = vmatprep.subr.bf16.mxu0 0
        %926 = vmatpush1.bf16.msra.mxu0 %v831
        %927 = vmatprep.subr.bf16.mxu0 0
        %928 = vmatpush1.bf16.msra.mxu0 %v832
        %929 = vmatprep.mubr.bf16.mxu0 %v568
        %930 = vmatmul.mubr.bf16.gmra.mrb[0].mxu0 %v567
        %v931 = vpop.f32.mrb[0].mxu0
        %v932 = vadd.f32 0.0, %v931
        %v933 = vpop.f32.mrb[0].mxu0
        %v934 = vpop.f32.mrb[0].mxu0
        %v935 = vadd.f32 0.0, %v934
        %v936 = vpop.f32.mrb[0].mxu0
        %937 = vmatprep.mubr.bf16.mxu0 %v573
        %938 = vmatmul.mubr.bf16.gmra.mrb[0].mxu0 %v572
        %v939 = vpop.f32.mrb[0].mxu0
        %v940 = vadd.f32 0.0, %v939
        %v941 = vpop.f32.mrb[0].mxu0
        %v942 = vpop.f32.mrb[0].mxu0
        %v943 = vpop.f32.mrb[0].mxu0
        %944 = vdwg.mxu0
        %945 = vmatprep.subr.bf16.mxu0 0
        %946 = vmatpush1.bf16.msra.mxu0 %v833
        %947 = vmatprep.subr.bf16.mxu0 0
        %948 = vmatpush1.bf16.msra.mxu0 %v834
        %949 = vmatprep.subr.bf16.mxu0 0
        %950 = vmatpush1.bf16.msra.mxu0 %v835
        %951 = vmatprep.subr.bf16.mxu0 0
        %952 = vmatpush1.bf16.msra.mxu0 %v836
        %953 = vmatprep.subr.bf16.mxu0 0
        %954 = vmatpush1.bf16.msra.mxu0 %v837
        %955 = vmatprep.subr.bf16.mxu0 0
        %956 = vmatpush1.bf16.msra.mxu0 %v838
        %957 = vmatprep.subr.bf16.mxu0 0
        %958 = vmatpush1.bf16.msra.mxu0 %v839
        %959 = vmatprep.subr.bf16.mxu0 0
        %960 = vmatpush1.bf16.msra.mxu0 %v840
        %961 = vmatprep.subr.bf16.mxu0 0
        %962 = vmatpush1.bf16.msra.mxu0 %v841
        %963 = vmatprep.subr.bf16.mxu0 0
        %964 = vmatpush1.bf16.msra.mxu0 %v842
        %965 = vmatprep.subr.bf16.mxu0 0
        %966 = vmatpush1.bf16.msra.mxu0 %v843
        %967 = vmatprep.subr.bf16.mxu0 0
        %968 = vmatpush1.bf16.msra.mxu0 %v844
        %969 = vmatprep.subr.bf16.mxu0 0
        %970 = vmatpush1.bf16.msra.mxu0 %v845
        %971 = vmatprep.subr.bf16.mxu0 0
        %972 = vmatpush1.bf16.msra.mxu0 %v846
        %973 = vmatprep.subr.bf16.mxu0 0
        %974 = vmatpush1.bf16.msra.mxu0 %v847
        %975 = vmatprep.subr.bf16.mxu0 0
        %976 = vmatpush1.bf16.msra.mxu0 %v848
        %977 = vmatprep.mubr.bf16.mxu0 %v570
        %978 = vmatmul.mubr.bf16.gmra.mrb[0].mxu0 %v569
        %v979 = vpop.f32.mrb[0].mxu0
        %v980 = vadd.f32 %v932, %v979
        %v981 = vpop.f32.mrb[0].mxu0
        %v982 = vpop.f32.mrb[0].mxu0
        %v983 = vadd.f32 %v935, %v982
        %v984 = vpop.f32.mrb[0].mxu0
        %985 = vmatprep.mubr.bf16.mxu0 %v575
        %986 = vmatmul.mubr.bf16.gmra.mrb[0].mxu0 %v574
        %v987 = vpop.f32.mrb[0].mxu0
        %v988 = vadd.f32 %v940, %v987
        %v989 = vpop.f32.mrb[0].mxu0
        %v990 = vpop.f32.mrb[0].mxu0
        %v991 = vpop.f32.mrb[0].mxu0
        %992 = vdwg.mxu0
        %993 = vmatprep.subr.bf16.mxu0 0
        %994 = vmatpush1.bf16.msra.mxu0 %v849
        %995 = vmatprep.subr.bf16.mxu0 0
        %996 = vmatpush1.bf16.msra.mxu0 %v850
        %997 = vmatprep.subr.bf16.mxu0 0
        %998 = vmatpush1.bf16.msra.mxu0 %v851
        %999 = vmatprep.subr.bf16.mxu0 0
        %1000 = vmatpush1.bf16.msra.mxu0 %v852
        %1001 = vmatprep.subr.bf16.mxu0 0
        %1002 = vmatpush1.bf16.msra.mxu0 %v853
        %1003 = vmatprep.subr.bf16.mxu0 0
        %1004 = vmatpush1.bf16.msra.mxu0 %v854
        %1005 = vmatprep.subr.bf16.mxu0 0
        %1006 = vmatpush1.bf16.msra.mxu0 %v855
        %1007 = vmatprep.subr.bf16.mxu0 0
        %1008 = vmatpush1.bf16.msra.mxu0 %v856
        %1009 = vmatprep.subr.bf16.mxu0 0
        %1010 = vmatpush1.bf16.msra.mxu0 0
        %1011 = vmatprep.subr.bf16.mxu0 0
        %1012 = vmatpush1.bf16.msra.mxu0 0
        %1013 = vmatprep.subr.bf16.mxu0 0
        %1014 = vmatpush1.bf16.msra.mxu0 0
        %1015 = vmatprep.subr.bf16.mxu0 0
        %1016 = vmatpush1.bf16.msra.mxu0 0
        %1017 = vmatprep.subr.bf16.mxu0 0
        %1018 = vmatpush1.bf16.msra.mxu0 0
        %1019 = vmatprep.subr.bf16.mxu0 0
        %1020 = vmatpush1.bf16.msra.mxu0 0
        %1021 = vmatprep.subr.bf16.mxu0 0
        %1022 = vmatpush1.bf16.msra.mxu0 0
        %1023 = vmatprep.subr.bf16.mxu0 0
        %1024 = vmatpush1.bf16.msra.mxu0 0
        %1025 = vmatprep.mubr.bf16.mxu0 0
        %1026 = vmatmul.mubr.bf16.gmra.mrb[0].mxu0 %v571
        %v1027 = vpop.f32.mrb[0].mxu0
        %v1028 = vadd.f32 %v980, %v1027
        %v1029 = vpop.f32.mrb[0].mxu0
        %v1030 = vpop.f32.mrb[0].mxu0
        %v1031 = vadd.f32 %v983, %v1030
        %v1032 = vpop.f32.mrb[0].mxu0
        %1033 = vmatprep.mubr.bf16.mxu0 0
        %1034 = vmatmul.mubr.bf16.gmra.mrb[0].mxu0 %v576
        %v1035 = vpop.f32.mrb[0].mxu0
        %v1036 = vadd.f32 %v988, %v1035
        %v1037 = vpop.f32.mrb[0].mxu0
        %v1038 = vpop.f32.mrb[0].mxu0
        %v1039 = vpop.f32.mrb[0].mxu0
        %1040 = vdwg.mxu0
        %v1041 = vld [vmem:[%s4] sm:$0x1]
        %v1042 = vlaneseq
        %v1043 = vshrl.u32 %v1042, 7
        %v1044 = vsub.s32 0, %v1043
        %v1045 = vrot.slane %v1041, %v1044
        %v1046 = vmul.f32 %v1028, %v1045
        %v1047 = vmul.f32 %v1031, %v1045
        %v1048 = vmul.f32 %v1036, %v1045
        %v1049 = vld [vmem:[%s5] sm:$0x1]
        %v1050 = vlaneseq
        %v1051 = vshrl.u32 %v1050, 7
        %v1052 = vsub.s32 0, %v1051
        %v1053 = vrot.slane %v1049, %v1052
        %v1054 = vadd.f32 %v1046, %v1053
        %v1055 = vadd.f32 %v1047, %v1053
        %v1056 = vadd.f32 %v1048, %v1053
        %v1057 = vtanh.pop %v1054
        %v1058 = vtanh.pop %v1055
        %v1059 = vtanh.pop %v1056
        %1060 = vst [vmem:[#allocation2 + $0x2] sm:$0xff] %v1057
        %1061 = vst [vmem:[#allocation2 + $0xa] sm:$0xff] %v1058
        %1062 = vst [vmem:[#allocation2 + $0x12] sm:$0xf] %v1059
        %s1063 = scalar_lea.vmem [#allocation2], 2
        %v1064 = vld [vmem:[%s1063] ss:$2 sm:$0xff]
        %s1065 = scalar_lea.vmem [#allocation2], 18
        %v1066 = vld [vmem:[%s1065] ss:$2 sm:$0x3]
        %s1067 = scalar_lea.vmem [#allocation2], 3
        %v1068 = vld [vmem:[%s1067] ss:$2 sm:$0xff]
        %s1069 = scalar_lea.vmem [#allocation2], 19
        %v1070 = vld [vmem:[%s1069] ss:$2 sm:$0x3]
        %vm1071 = vcmp.gt.f32.partialorder %v1068, %v1064
        %vm1072 = vcmp.gt.f32.partialorder %v1070, %v1066
        %v1073 = vsel %vm1071, 1, 0
        %v1074 = vsel %vm1072, 1, 0
        %v1075 = vmax.f32 %v1064, %v1068
        %v1076 = vmax.f32 %v1066, %v1070
        %1077 = vst [vmem:[#allocation3 + $0x2] sm:$0xff] %v1075
        %1078 = vst [vmem:[#allocation3 + $0xa] sm:$0x3] %v1076
        %v1079 = vld [vmem:[#allocation3] sm:$0xff]
        %v1080 = vld [vmem:[#allocation3 + $0x8] sm:$0x3]
        %v1081 = vld [vmem:[#allocation3 + $0x1] sm:$0xff]
        %v1082 = vld [vmem:[#allocation3 + $0x9] sm:$0x3]
        %v1083 = vld [vmem:[#allocation3 + $0x2] sm:$0xff]
        %v1084 = vld [vmem:[#allocation3 + $0xa] sm:$0x3]
        %v1085 = vld [vmem:[#allocation3 + $0x3] sm:$0xff]
        %v1086 = vld [vmem:[#allocation3 + $0xb] sm:$0x3]
        %v1087 = vld [vmem:[#allocation3 + $0x4] sm:$0xff]
        %v1088 = vld [vmem:[#allocation3 + $0xc] sm:$0x3]
        %v1089 = vpack.c.bf16 %v1080, %v1079
        %v1090 = vpack.c.bf16 %v1082, %v1081
        %v1091 = vpack.c.bf16 %v1084, %v1083
        %v1092 = vpack.c.bf16 %v1086, %v1085
        %v1093 = vpack.c.bf16 %v1088, %v1087
        %s1094 = scalar_lea.vmem [#allocation5], 320
        %v1095 = vld [vmem:[%s1094] sm:$0xf]
        %v1096 = vld [vmem:[%s1094 + $0x4] sm:$0xf]
        %v1097 = vld [vmem:[%s1094 + $0x8] sm:$0xf]
        %v1098 = vld [vmem:[%s1094 + $0xc] sm:$0xf]
        %v1099 = vld [vmem:[%s1094 + $0x10] sm:$0xf]
        %v1100 = vld [vmem:[%s1094 + $0x14] sm:$0xf]
        %v1101 = vld [vmem:[%s1094 + $0x18] sm:$0xf]
        %v1102 = vld [vmem:[%s1094 + $0x1c] sm:$0xf]
        %v1103 = vld [vmem:[%s1094 + $0x20] sm:$0xf]
        %v1104 = vld [vmem:[%s1094 + $0x24] sm:$0xf]
        %v1105 = vld [vmem:[%s1094 + $0x28] sm:$0xf]
        %v1106 = vld [vmem:[%s1094 + $0x2c] sm:$0xf]
        %v1107 = vld [vmem:[%s1094 + $0x30] sm:$0xf]
        %v1108 = vld [vmem:[%s1094 + $0x34] sm:$0xf]
        %v1109 = vld [vmem:[%s1094 + $0x38] sm:$0xf]
        %v1110 = vld [vmem:[%s1094 + $0x3c] sm:$0xf]
        %v1111 = vld [vmem:[%s1094 + $0x40] sm:$0xf]
        %v1112 = vld [vmem:[%s1094 + $0x44] sm:$0xf]
        %v1113 = vld [vmem:[%s1094 + $0x48] sm:$0xf]
        %v1114 = vld [vmem:[%s1094 + $0x4c] sm:$0xf]
        %v1115 = vld [vmem:[%s1094 + $0x50] sm:$0xf]
        %v1116 = vld [vmem:[%s1094 + $0x54] sm:$0xf]
        %v1117 = vld [vmem:[%s1094 + $0x58] sm:$0xf]
        %v1118 = vld [vmem:[%s1094 + $0x5c] sm:$0xf]
        %v1119 = vld [vmem:[%s1094 + $0x60] sm:$0xf]
        %v1120 = vld [vmem:[%s1094 + $0x64] sm:$0xf]
        %v1121 = vld [vmem:[%s1094 + $0x68] sm:$0xf]
        %v1122 = vld [vmem:[%s1094 + $0x6c] sm:$0xf]
        %v1123 = vld [vmem:[%s1094 + $0x70] sm:$0xf]
        %v1124 = vld [vmem:[%s1094 + $0x74] sm:$0xf]
        %v1125 = vld [vmem:[%s1094 + $0x78] sm:$0xf]
        %v1126 = vld [vmem:[%s1094 + $0x7c] sm:$0xf]
        %v1127 = vld [vmem:[%s1094 + $0x80] sm:$0xf]
        %v1128 = vld [vmem:[%s1094 + $0x84] sm:$0xf]
        %v1129 = vld [vmem:[%s1094 + $0x88] sm:$0xf]
        %v1130 = vld [vmem:[%s1094 + $0x8c] sm:$0xf]
        %v1131 = vld [vmem:[%s1094 + $0x90] sm:$0xf]
        %v1132 = vld [vmem:[%s1094 + $0x94] sm:$0xf]
        %v1133 = vld [vmem:[%s1094 + $0x98] sm:$0xf]
        %v1134 = vld [vmem:[%s1094 + $0x9c] sm:$0xf]
        %v1135 = vld [vmem:[%s1094 + $0xa0] sm:$0xf]
        %v1136 = vld [vmem:[%s1094 + $0xa4] sm:$0xf]
        %v1137 = vld [vmem:[%s1094 + $0xa8] sm:$0xf]
        %v1138 = vld [vmem:[%s1094 + $0xac] sm:$0xf]
        %v1139 = vld [vmem:[%s1094 + $0xb0] sm:$0xf]
        %v1140 = vld [vmem:[%s1094 + $0xb4] sm:$0xf]
        %v1141 = vld [vmem:[%s1094 + $0xb8] sm:$0xf]
        %v1142 = vld [vmem:[%s1094 + $0xbc] sm:$0xf]
        %v1143 = vld [vmem:[%s1094 + $0xc0] sm:$0xf]
        %v1144 = vld [vmem:[%s1094 + $0xc4] sm:$0xf]
        %v1145 = vld [vmem:[%s1094 + $0xc8] sm:$0xf]
        %v1146 = vld [vmem:[%s1094 + $0xcc] sm:$0xf]
        %v1147 = vld [vmem:[%s1094 + $0xd0] sm:$0xf]
        %v1148 = vld [vmem:[%s1094 + $0xd4] sm:$0xf]
        %v1149 = vld [vmem:[%s1094 + $0xd8] sm:$0xf]
        %v1150 = vld [vmem:[%s1094 + $0xdc] sm:$0xf]
        %v1151 = vld [vmem:[%s1094 + $0xe0] sm:$0xf]
        %v1152 = vld [vmem:[%s1094 + $0xe4] sm:$0xf]
        %v1153 = vld [vmem:[%s1094 + $0xe8] sm:$0xf]
        %v1154 = vld [vmem:[%s1094 + $0xec] sm:$0xf]
        %v1155 = vld [vmem:[%s1094 + $0xf0] sm:$0xf]
        %v1156 = vld [vmem:[%s1094 + $0xf4] sm:$0xf]
        %v1157 = vld [vmem:[%s1094 + $0xf8] sm:$0xf]
        %v1158 = vld [vmem:[%s1094 + $0xfc] sm:$0xf]
        %v1159 = vld [vmem:[%s1094 + $0x100] sm:$0xf]
        %v1160 = vld [vmem:[%s1094 + $0x104] sm:$0xf]
        %v1161 = vld [vmem:[%s1094 + $0x108] sm:$0xf]
        %v1162 = vld [vmem:[%s1094 + $0x10c] sm:$0xf]
        %v1163 = vld [vmem:[%s1094 + $0x110] sm:$0xf]
        %v1164 = vld [vmem:[%s1094 + $0x114] sm:$0xf]
        %v1165 = vld [vmem:[%s1094 + $0x118] sm:$0xf]
        %v1166 = vld [vmem:[%s1094 + $0x11c] sm:$0xf]
        %v1167 = vld [vmem:[%s1094 + $0x120] sm:$0xf]
        %v1168 = vld [vmem:[%s1094 + $0x124] sm:$0xf]
        %v1169 = vld [vmem:[%s1094 + $0x128] sm:$0xf]
        %v1170 = vld [vmem:[%s1094 + $0x12c] sm:$0xf]
        %v1171 = vld [vmem:[%s1094 + $0x130] sm:$0xf]
        %v1172 = vld [vmem:[%s1094 + $0x134] sm:$0xf]
        %v1173 = vld [vmem:[%s1094 + $0x138] sm:$0xf]
        %v1174 = vld [vmem:[%s1094 + $0x13c] sm:$0xf]
        %v1255 = vunpack.c.l.b16 %v1095
        %v1256 = vunpack.c.l.b16 %v1096
        %v1257 = vunpack.c.l.b16 %v1097
        %v1258 = vunpack.c.l.b16 %v1098
        %v1259 = vunpack.c.l.b16 %v1099
        %v1260 = vunpack.c.l.b16 %v1100
        %v1261 = vunpack.c.l.b16 %v1101
        %v1262 = vunpack.c.l.b16 %v1102
        %v1263 = vunpack.c.l.b16 %v1103
        %v1264 = vunpack.c.l.b16 %v1104
        %v1265 = vunpack.c.l.b16 %v1105
        %v1266 = vunpack.c.l.b16 %v1106
        %v1267 = vunpack.c.l.b16 %v1107
        %v1268 = vunpack.c.l.b16 %v1108
        %v1269 = vunpack.c.l.b16 %v1109
        %v1270 = vunpack.c.l.b16 %v1110
        %v1271 = vunpack.c.l.b16 %v1111
        %v1272 = vunpack.c.l.b16 %v1112
        %v1273 = vunpack.c.l.b16 %v1113
        %v1274 = vunpack.c.l.b16 %v1114
        %v1275 = vunpack.c.l.b16 %v1115
        %v1276 = vunpack.c.l.b16 %v1116
        %v1277 = vunpack.c.l.b16 %v1117
        %v1278 = vunpack.c.l.b16 %v1118
        %v1279 = vunpack.c.l.b16 %v1119
        %v1280 = vunpack.c.l.b16 %v1120
        %v1281 = vunpack.c.l.b16 %v1121
        %v1282 = vunpack.c.l.b16 %v1122
        %v1283 = vunpack.c.l.b16 %v1123
        %v1284 = vunpack.c.l.b16 %v1124
        %v1285 = vunpack.c.l.b16 %v1125
        %v1286 = vunpack.c.l.b16 %v1126
        %v1287 = vunpack.c.l.b16 %v1127
        %v1288 = vunpack.c.l.b16 %v1128
        %v1289 = vunpack.c.l.b16 %v1129
        %v1290 = vunpack.c.l.b16 %v1130
        %v1291 = vunpack.c.l.b16 %v1131
        %v1292 = vunpack.c.l.b16 %v1132
        %v1293 = vunpack.c.l.b16 %v1133
        %v1294 = vunpack.c.l.b16 %v1134
        %v1295 = vunpack.c.l.b16 %v1135
        %v1296 = vunpack.c.l.b16 %v1136
        %v1297 = vunpack.c.l.b16 %v1137
        %v1298 = vunpack.c.l.b16 %v1138
        %v1299 = vunpack.c.l.b16 %v1139
        %v1300 = vunpack.c.l.b16 %v1140
        %v1301 = vunpack.c.l.b16 %v1141
        %v1302 = vunpack.c.l.b16 %v1142
        %v1303 = vunpack.c.l.b16 %v1143
        %v1304 = vunpack.c.l.b16 %v1144
        %v1305 = vunpack.c.l.b16 %v1145
        %v1306 = vunpack.c.l.b16 %v1146
        %v1307 = vunpack.c.l.b16 %v1147
        %v1308 = vunpack.c.l.b16 %v1148
        %v1309 = vunpack.c.l.b16 %v1149
        %v1310 = vunpack.c.l.b16 %v1150
        %v1311 = vunpack.c.l.b16 %v1151
        %v1312 = vunpack.c.l.b16 %v1152
        %v1313 = vunpack.c.l.b16 %v1153
        %v1314 = vunpack.c.l.b16 %v1154
        %v1315 = vunpack.c.l.b16 %v1155
        %v1316 = vunpack.c.l.b16 %v1156
        %v1317 = vunpack.c.l.b16 %v1157
        %v1318 = vunpack.c.l.b16 %v1158
        %v1319 = vunpack.c.l.b16 %v1159
        %v1320 = vunpack.c.l.b16 %v1160
        %v1321 = vunpack.c.l.b16 %v1161
        %v1322 = vunpack.c.l.b16 %v1162
        %v1323 = vunpack.c.l.b16 %v1163
        %v1324 = vunpack.c.l.b16 %v1164
        %v1325 = vunpack.c.l.b16 %v1165
        %v1326 = vunpack.c.l.b16 %v1166
        %v1327 = vunpack.c.l.b16 %v1167
        %v1328 = vunpack.c.l.b16 %v1168
        %v1329 = vunpack.c.l.b16 %v1169
        %v1330 = vunpack.c.l.b16 %v1170
        %v1331 = vunpack.c.l.b16 %v1171
        %v1332 = vunpack.c.l.b16 %v1172
        %v1333 = vunpack.c.l.b16 %v1173
        %v1334 = vunpack.c.l.b16 %v1174
        %v1335 = vpack.c.b16 %v1256, %v1255
        %v1336 = vpack.c.b16 %v1258, %v1257
        %v1337 = vpack.c.b16 %v1260, %v1259
        %v1338 = vpack.c.b16 %v1262, %v1261
        %v1339 = vpack.c.b16 %v1264, %v1263
        %v1340 = vpack.c.b16 %v1266, %v1265
        %v1341 = vpack.c.b16 %v1268, %v1267
        %v1342 = vpack.c.b16 %v1270, %v1269
        %v1343 = vpack.c.b16 %v1272, %v1271
        %v1344 = vpack.c.b16 %v1274, %v1273
        %v1345 = vpack.c.b16 %v1276, %v1275
        %v1346 = vpack.c.b16 %v1278, %v1277
        %v1347 = vpack.c.b16 %v1280, %v1279
        %v1348 = vpack.c.b16 %v1282, %v1281
        %v1349 = vpack.c.b16 %v1284, %v1283
        %v1350 = vpack.c.b16 %v1286, %v1285
        %v1351 = vpack.c.b16 %v1288, %v1287
        %v1352 = vpack.c.b16 %v1290, %v1289
        %v1353 = vpack.c.b16 %v1292, %v1291
        %v1354 = vpack.c.b16 %v1294, %v1293
        %v1355 = vpack.c.b16 %v1296, %v1295
        %v1356 = vpack.c.b16 %v1298, %v1297
        %v1357 = vpack.c.b16 %v1300, %v1299
        %v1358 = vpack.c.b16 %v1302, %v1301
        %v1359 = vpack.c.b16 %v1304, %v1303
        %v1360 = vpack.c.b16 %v1306, %v1305
        %v1361 = vpack.c.b16 %v1308, %v1307
        %v1362 = vpack.c.b16 %v1310, %v1309
        %v1363 = vpack.c.b16 %v1312, %v1311
        %v1364 = vpack.c.b16 %v1314, %v1313
        %v1365 = vpack.c.b16 %v1316, %v1315
        %v1366 = vpack.c.b16 %v1318, %v1317
        %v1367 = vpack.c.b16 %v1320, %v1319
        %v1368 = vpack.c.b16 %v1322, %v1321
        %v1369 = vpack.c.b16 %v1324, %v1323
        %v1370 = vpack.c.b16 %v1326, %v1325
        %v1371 = vpack.c.b16 %v1328, %v1327
        %v1372 = vpack.c.b16 %v1330, %v1329
        %v1373 = vpack.c.b16 %v1332, %v1331
        %v1374 = vpack.c.b16 %v1334, %v1333
        %1415 = vmatprep.subr.bf16.mxu0 0
        %1416 = vmatpush1.bf16.msra.mxu0 %v1335
        %1417 = vmatprep.subr.bf16.mxu0 0
        %1418 = vmatpush1.bf16.msra.mxu0 %v1336
        %1419 = vmatprep.subr.bf16.mxu0 0
        %1420 = vmatpush1.bf16.msra.mxu0 %v1337
        %1421 = vmatprep.subr.bf16.mxu0 0
        %1422 = vmatpush1.bf16.msra.mxu0 %v1338
        %1423 = vmatprep.subr.bf16.mxu0 0
        %1424 = vmatpush1.bf16.msra.mxu0 %v1339
        %1425 = vmatprep.subr.bf16.mxu0 0
        %1426 = vmatpush1.bf16.msra.mxu0 %v1340
        %1427 = vmatprep.subr.bf16.mxu0 0
        %1428 = vmatpush1.bf16.msra.mxu0 %v1341
        %1429 = vmatprep.subr.bf16.mxu0 0
        %1430 = vmatpush1.bf16.msra.mxu0 %v1342
        %1431 = vmatprep.subr.bf16.mxu0 0
        %1432 = vmatpush1.bf16.msra.mxu0 %v1343
        %1433 = vmatprep.subr.bf16.mxu0 0
        %1434 = vmatpush1.bf16.msra.mxu0 %v1344
        %1435 = vmatprep.subr.bf16.mxu0 0
        %1436 = vmatpush1.bf16.msra.mxu0 %v1345
        %1437 = vmatprep.subr.bf16.mxu0 0
        %1438 = vmatpush1.bf16.msra.mxu0 %v1346
        %1439 = vmatprep.subr.bf16.mxu0 0
        %1440 = vmatpush1.bf16.msra.mxu0 %v1347
        %1441 = vmatprep.subr.bf16.mxu0 0
        %1442 = vmatpush1.bf16.msra.mxu0 %v1348
        %1443 = vmatprep.subr.bf16.mxu0 0
        %1444 = vmatpush1.bf16.msra.mxu0 %v1349
        %1445 = vmatprep.subr.bf16.mxu0 0
        %1446 = vmatpush1.bf16.msra.mxu0 %v1350
        %1447 = vmatprep.mubr.bf16.mxu0 %v1090
        %1448 = vmatmul.mubr.bf16.gmra.mrb[0].mxu0 %v1089
        %v1449 = vpop.f32.mrb[0].mxu0
        %v1450 = vadd.f32 0.0, %v1449
        %v1451 = vpop.f32.mrb[0].mxu0
        %v1452 = vpop.f32.mrb[0].mxu0
        %v1453 = vadd.f32 0.0, %v1452
        %v1454 = vpop.f32.mrb[0].mxu0
        %1455 = vdwg.mxu0
        %1456 = vmatprep.subr.bf16.mxu0 0
        %1457 = vmatpush1.bf16.msra.mxu0 %v1351
        %1458 = vmatprep.subr.bf16.mxu0 0
        %1459 = vmatpush1.bf16.msra.mxu0 %v1352
        %1460 = vmatprep.subr.bf16.mxu0 0
        %1461 = vmatpush1.bf16.msra.mxu0 %v1353
        %1462 = vmatprep.subr.bf16.mxu0 0
        %1463 = vmatpush1.bf16.msra.mxu0 %v1354
        %1464 = vmatprep.subr.bf16.mxu0 0
        %1465 = vmatpush1.bf16.msra.mxu0 %v1355
        %1466 = vmatprep.subr.bf16.mxu0 0
        %1467 = vmatpush1.bf16.msra.mxu0 %v1356
        %1468 = vmatprep.subr.bf16.mxu0 0
        %1469 = vmatpush1.bf16.msra.mxu0 %v1357
        %1470 = vmatprep.subr.bf16.mxu0 0
        %1471 = vmatpush1.bf16.msra.mxu0 %v1358
        %1472 = vmatprep.subr.bf16.mxu0 0
        %1473 = vmatpush1.bf16.msra.mxu0 %v1359
        %1474 = vmatprep.subr.bf16.mxu0 0
        %1475 = vmatpush1.bf16.msra.mxu0 %v1360
        %1476 = vmatprep.subr.bf16.mxu0 0
        %1477 = vmatpush1.bf16.msra.mxu0 %v1361
        %1478 = vmatprep.subr.bf16.mxu0 0
        %1479 = vmatpush1.bf16.msra.mxu0 %v1362
        %1480 = vmatprep.subr.bf16.mxu0 0
        %1481 = vmatpush1.bf16.msra.mxu0 %v1363
        %1482 = vmatprep.subr.bf16.mxu0 0
        %1483 = vmatpush1.bf16.msra.mxu0 %v1364
        %1484 = vmatprep.subr.bf16.mxu0 0
        %1485 = vmatpush1.bf16.msra.mxu0 %v1365
        %1486 = vmatprep.subr.bf16.mxu0 0
        %1487 = vmatpush1.bf16.msra.mxu0 %v1366
        %1488 = vmatprep.mubr.bf16.mxu0 %v1092
        %1489 = vmatmul.mubr.bf16.gmra.mrb[0].mxu0 %v1091
        %v1490 = vpop.f32.mrb[0].mxu0
        %v1491 = vadd.f32 %v1450, %v1490
        %v1492 = vpop.f32.mrb[0].mxu0
        %v1493 = vpop.f32.mrb[0].mxu0
        %v1494 = vadd.f32 %v1453, %v1493
        %v1495 = vpop.f32.mrb[0].mxu0
        %1496 = vdwg.mxu0
        %1497 = vmatprep.subr.bf16.mxu0 0
        %1498 = vmatpush1.bf16.msra.mxu0 %v1367
        %1499 = vmatprep.subr.bf16.mxu0 0
        %1500 = vmatpush1.bf16.msra.mxu0 %v1368
        %1501 = vmatprep.subr.bf16.mxu0 0
        %1502 = vmatpush1.bf16.msra.mxu0 %v1369
        %1503 = vmatprep.subr.bf16.mxu0 0
        %1504 = vmatpush1.bf16.msra.mxu0 %v1370
        %1505 = vmatprep.subr.bf16.mxu0 0
        %1506 = vmatpush1.bf16.msra.mxu0 %v1371
        %1507 = vmatprep.subr.bf16.mxu0 0
        %1508 = vmatpush1.bf16.msra.mxu0 %v1372
        %1509 = vmatprep.subr.bf16.mxu0 0
        %1510 = vmatpush1.bf16.msra.mxu0 %v1373
        %1511 = vmatprep.subr.bf16.mxu0 0
        %1512 = vmatpush1.bf16.msra.mxu0 %v1374
        %1513 = vmatprep.subr.bf16.mxu0 0
        %1514 = vmatpush1.bf16.msra.mxu0 0
        %1515 = vmatprep.subr.bf16.mxu0 0
        %1516 = vmatpush1.bf16.msra.mxu0 0
        %1517 = vmatprep.subr.bf16.mxu0 0
        %1518 = vmatpush1.bf16.msra.mxu0 0
        %1519 = vmatprep.subr.bf16.mxu0 0
        %1520 = vmatpush1.bf16.msra.mxu0 0
        %1521 = vmatprep.subr.bf16.mxu0 0
        %1522 = vmatpush1.bf16.msra.mxu0 0
        %1523 = vmatprep.subr.bf16.mxu0 0
        %1524 = vmatpush1.bf16.msra.mxu0 0
        %1525 = vmatprep.subr.bf16.mxu0 0
        %1526 = vmatpush1.bf16.msra.mxu0 0
        %1527 = vmatprep.subr.bf16.mxu0 0
        %1528 = vmatpush1.bf16.msra.mxu0 0
        %1529 = vmatprep.mubr.bf16.mxu0 0
        %1530 = vmatmul.mubr.bf16.gmra.mrb[0].mxu0 %v1093
        %v1531 = vpop.f32.mrb[0].mxu0
        %v1532 = vadd.f32 %v1491, %v1531
        %v1533 = vpop.f32.mrb[0].mxu0
        %v1534 = vpop.f32.mrb[0].mxu0
        %v1535 = vadd.f32 %v1494, %v1534
        %v1536 = vpop.f32.mrb[0].mxu0
        %1537 = vdwg.mxu0
        %v1538 = vld [vmem:[%s4 + $0x1] sm:$0x1]
        %v1539 = vlaneseq
        %v1540 = vshrl.u32 %v1539, 7
        %v1541 = vsub.s32 0, %v1540
        %v1542 = vrot.slane %v1538, %v1541
        %v1543 = vmul.f32 %v1532, %v1542
        %v1544 = vmul.f32 %v1535, %v1542
        %v1545 = vld [vmem:[%s5 + $0x1] sm:$0x1]
        %v1546 = vlaneseq
        %v1547 = vshrl.u32 %v1546, 7
        %v1548 = vsub.s32 0, %v1547
        %v1549 = vrot.slane %v1545, %v1548
        %v1550 = vadd.f32 %v1543, %v1549
        %v1551 = vadd.f32 %v1544, %v1549
        %v1552 = vtanh.pop %v1550
        %v1553 = vtanh.pop %v1551
        %1554 = vst [vmem:[#allocation3 + $0x2] sm:$0xff] %v1552
        %1555 = vst [vmem:[#allocation3 + $0xa] sm:$0x3] %v1553
        %s1556 = scalar_lea.vmem [#allocation3], 2
        %v1557 = vld [vmem:[%s1556] ss:$2 sm:$0xf]
        %s1558 = scalar_lea.vmem [#allocation3], 3
        %v1559 = vld [vmem:[%s1558] ss:$2 sm:$0xf]
        %vm1560 = vcmp.gt.f32.partialorder %v1559, %v1557
        %v1561 = vsel %vm1560, 1, 0
        %v1562 = vmax.f32 %v1557, %v1559
        %s1563 = scalar_lea.vmem [#allocation3], 4
        %v1564 = vld [vmem:[%s1563] ss:$2 sm:$0xf]
        %vm1565 = vcmp.gt.f32.partialorder %v1564, %v1562
        %v1566 = vsel %vm1565, 2, %v1561
        %v1567 = vmax.f32 %v1562, %v1564
        %s1568 = scalar_lea.vmem [#allocation3], 5
        %v1569 = vld [vmem:[%s1568] ss:$2 sm:$0xf]
        %vm1570 = vcmp.gt.f32.partialorder %v1569, %v1567
        %v1571 = vsel %vm1570, 3, %v1566
        %v1572 = vmax.f32 %v1567, %v1569
        %1573 = vst [vmem:[#allocation4 + $0x2] sm:$0xf] %v1572
        %v1574 = vld [vmem:[#allocation4] sm:$0xf]
        %v1575 = vld [vmem:[#allocation4 + $0x1] sm:$0xf]
        %v1576 = vld [vmem:[#allocation4 + $0x2] sm:$0xf]
        %v1577 = vld [vmem:[#allocation4 + $0x3] sm:$0xf]
        %v1578 = vld [vmem:[#allocation4 + $0x4] sm:$0xf]
        %v1579 = vpack.c.bf16 %v1574, %v1574
        %v1580 = vpack.c.bf16 %v1575, %v1575
        %v1581 = vpack.c.bf16 %v1576, %v1576
        %v1582 = vpack.c.bf16 %v1577, %v1577
        %v1583 = vpack.c.bf16 %v1578, %v1578
        %s1584 = scalar_lea.vmem [#allocation5], 640
        %v1585 = vld [vmem:[%s1584] sm:$0xf]
        %v1586 = vld [vmem:[%s1584 + $0x4] sm:$0xf]
        %v1587 = vld [vmem:[%s1584 + $0x8] sm:$0xf]
        %v1588 = vld [vmem:[%s1584 + $0xc] sm:$0xf]
        %v1589 = vld [vmem:[%s1584 + $0x10] sm:$0xf]
        %v1590 = vld [vmem:[%s1584 + $0x14] sm:$0xf]
        %v1591 = vld [vmem:[%s1584 + $0x18] sm:$0xf]
        %v1592 = vld [vmem:[%s1584 + $0x1c] sm:$0xf]
        %v1593 = vld [vmem:[%s1584 + $0x20] sm:$0xf]
        %v1594 = vld [vmem:[%s1584 + $0x24] sm:$0xf]
        %v1595 = vld [vmem:[%s1584 + $0x28] sm:$0xf]
        %v1596 = vld [vmem:[%s1584 + $0x2c] sm:$0xf]
        %v1597 = vld [vmem:[%s1584 + $0x30] sm:$0xf]
        %v1598 = vld [vmem:[%s1584 + $0x34] sm:$0xf]
        %v1599 = vld [vmem:[%s1584 + $0x38] sm:$0xf]
        %v1600 = vld [vmem:[%s1584 + $0x3c] sm:$0xf]
        %v1601 = vld [vmem:[%s1584 + $0x40] sm:$0xf]
        %v1602 = vld [vmem:[%s1584 + $0x44] sm:$0xf]
        %v1603 = vld [vmem:[%s1584 + $0x48] sm:$0xf]
        %v1604 = vld [vmem:[%s1584 + $0x4c] sm:$0xf]
        %v1605 = vld [vmem:[%s1584 + $0x50] sm:$0xf]
        %v1606 = vld [vmem:[%s1584 + $0x54] sm:$0xf]
        %v1607 = vld [vmem:[%s1584 + $0x58] sm:$0xf]
        %v1608 = vld [vmem:[%s1584 + $0x5c] sm:$0xf]
        %v1609 = vld [vmem:[%s1584 + $0x60] sm:$0xf]
        %v1610 = vld [vmem:[%s1584 + $0x64] sm:$0xf]
        %v1611 = vld [vmem:[%s1584 + $0x68] sm:$0xf]
        %v1612 = vld [vmem:[%s1584 + $0x6c] sm:$0xf]
        %v1613 = vld [vmem:[%s1584 + $0x70] sm:$0xf]
        %v1614 = vld [vmem:[%s1584 + $0x74] sm:$0xf]
        %v1615 = vld [vmem:[%s1584 + $0x78] sm:$0xf]
        %v1616 = vld [vmem:[%s1584 + $0x7c] sm:$0xf]
        %v1617 = vld [vmem:[%s1584 + $0x80] sm:$0xf]
        %v1618 = vld [vmem:[%s1584 + $0x84] sm:$0xf]
        %v1619 = vld [vmem:[%s1584 + $0x88] sm:$0xf]
        %v1620 = vld [vmem:[%s1584 + $0x8c] sm:$0xf]
        %v1621 = vld [vmem:[%s1584 + $0x90] sm:$0xf]
        %v1622 = vld [vmem:[%s1584 + $0x94] sm:$0xf]
        %v1623 = vld [vmem:[%s1584 + $0x98] sm:$0xf]
        %v1624 = vld [vmem:[%s1584 + $0x9c] sm:$0xf]
        %v1625 = vld [vmem:[%s1584 + $0xa0] sm:$0xf]
        %v1626 = vld [vmem:[%s1584 + $0xa4] sm:$0xf]
        %v1627 = vld [vmem:[%s1584 + $0xa8] sm:$0xf]
        %v1628 = vld [vmem:[%s1584 + $0xac] sm:$0xf]
        %v1629 = vld [vmem:[%s1584 + $0xb0] sm:$0xf]
        %v1630 = vld [vmem:[%s1584 + $0xb4] sm:$0xf]
        %v1631 = vld [vmem:[%s1584 + $0xb8] sm:$0xf]
        %v1632 = vld [vmem:[%s1584 + $0xbc] sm:$0xf]
        %v1633 = vld [vmem:[%s1584 + $0xc0] sm:$0xf]
        %v1634 = vld [vmem:[%s1584 + $0xc4] sm:$0xf]
        %v1635 = vld [vmem:[%s1584 + $0xc8] sm:$0xf]
        %v1636 = vld [vmem:[%s1584 + $0xcc] sm:$0xf]
        %v1637 = vld [vmem:[%s1584 + $0xd0] sm:$0xf]
        %v1638 = vld [vmem:[%s1584 + $0xd4] sm:$0xf]
        %v1639 = vld [vmem:[%s1584 + $0xd8] sm:$0xf]
        %v1640 = vld [vmem:[%s1584 + $0xdc] sm:$0xf]
        %v1641 = vld [vmem:[%s1584 + $0xe0] sm:$0xf]
        %v1642 = vld [vmem:[%s1584 + $0xe4] sm:$0xf]
        %v1643 = vld [vmem:[%s1584 + $0xe8] sm:$0xf]
        %v1644 = vld [vmem:[%s1584 + $0xec] sm:$0xf]
        %v1645 = vld [vmem:[%s1584 + $0xf0] sm:$0xf]
        %v1646 = vld [vmem:[%s1584 + $0xf4] sm:$0xf]
        %v1647 = vld [vmem:[%s1584 + $0xf8] sm:$0xf]
        %v1648 = vld [vmem:[%s1584 + $0xfc] sm:$0xf]
        %v1649 = vld [vmem:[%s1584 + $0x100] sm:$0xf]
        %v1650 = vld [vmem:[%s1584 + $0x104] sm:$0xf]
        %v1651 = vld [vmem:[%s1584 + $0x108] sm:$0xf]
        %v1652 = vld [vmem:[%s1584 + $0x10c] sm:$0xf]
        %v1653 = vld [vmem:[%s1584 + $0x110] sm:$0xf]
        %v1654 = vld [vmem:[%s1584 + $0x114] sm:$0xf]
        %v1655 = vld [vmem:[%s1584 + $0x118] sm:$0xf]
        %v1656 = vld [vmem:[%s1584 + $0x11c] sm:$0xf]
        %v1657 = vld [vmem:[%s1584 + $0x120] sm:$0xf]
        %v1658 = vld [vmem:[%s1584 + $0x124] sm:$0xf]
        %v1659 = vld [vmem:[%s1584 + $0x128] sm:$0xf]
        %v1660 = vld [vmem:[%s1584 + $0x12c] sm:$0xf]
        %v1661 = vld [vmem:[%s1584 + $0x130] sm:$0xf]
        %v1662 = vld [vmem:[%s1584 + $0x134] sm:$0xf]
        %v1663 = vld [vmem:[%s1584 + $0x138] sm:$0xf]
        %v1664 = vld [vmem:[%s1584 + $0x13c] sm:$0xf]
        %v1745 = vunpack.c.l.b16 %v1585
        %v1746 = vunpack.c.l.b16 %v1586
        %v1747 = vunpack.c.l.b16 %v1587
        %v1748 = vunpack.c.l.b16 %v1588
        %v1749 = vunpack.c.l.b16 %v1589
        %v1750 = vunpack.c.l.b16 %v1590
        %v1751 = vunpack.c.l.b16 %v1591
        %v1752 = vunpack.c.l.b16 %v1592
        %v1753 = vunpack.c.l.b16 %v1593
        %v1754 = vunpack.c.l.b16 %v1594
        %v1755 = vunpack.c.l.b16 %v1595
        %v1756 = vunpack.c.l.b16 %v1596
        %v1757 = vunpack.c.l.b16 %v1597
        %v1758 = vunpack.c.l.b16 %v1598
        %v1759 = vunpack.c.l.b16 %v1599
        %v1760 = vunpack.c.l.b16 %v1600
        %v1761 = vunpack.c.l.b16 %v1601
        %v1762 = vunpack.c.l.b16 %v1602
        %v1763 = vunpack.c.l.b16 %v1603
        %v1764 = vunpack.c.l.b16 %v1604
        %v1765 = vunpack.c.l.b16 %v1605
        %v1766 = vunpack.c.l.b16 %v1606
        %v1767 = vunpack.c.l.b16 %v1607
        %v1768 = vunpack.c.l.b16 %v1608
        %v1769 = vunpack.c.l.b16 %v1609
        %v1770 = vunpack.c.l.b16 %v1610
        %v1771 = vunpack.c.l.b16 %v1611
        %v1772 = vunpack.c.l.b16 %v1612
        %v1773 = vunpack.c.l.b16 %v1613
        %v1774 = vunpack.c.l.b16 %v1614
        %v1775 = vunpack.c.l.b16 %v1615
        %v1776 = vunpack.c.l.b16 %v1616
        %v1777 = vunpack.c.l.b16 %v1617
        %v1778 = vunpack.c.l.b16 %v1618
        %v1779 = vunpack.c.l.b16 %v1619
        %v1780 = vunpack.c.l.b16 %v1620
        %v1781 = vunpack.c.l.b16 %v1621
        %v1782 = vunpack.c.l.b16 %v1622
        %v1783 = vunpack.c.l.b16 %v1623
        %v1784 = vunpack.c.l.b16 %v1624
        %v1785 = vunpack.c.l.b16 %v1625
        %v1786 = vunpack.c.l.b16 %v1626
        %v1787 = vunpack.c.l.b16 %v1627
        %v1788 = vunpack.c.l.b16 %v1628
        %v1789 = vunpack.c.l.b16 %v1629
        %v1790 = vunpack.c.l.b16 %v1630
        %v1791 = vunpack.c.l.b16 %v1631
        %v1792 = vunpack.c.l.b16 %v1632
        %v1793 = vunpack.c.l.b16 %v1633
        %v1794 = vunpack.c.l.b16 %v1634
        %v1795 = vunpack.c.l.b16 %v1635
        %v1796 = vunpack.c.l.b16 %v1636
        %v1797 = vunpack.c.l.b16 %v1637
        %v1798 = vunpack.c.l.b16 %v1638
        %v1799 = vunpack.c.l.b16 %v1639
        %v1800 = vunpack.c.l.b16 %v1640
        %v1801 = vunpack.c.l.b16 %v1641
        %v1802 = vunpack.c.l.b16 %v1642
        %v1803 = vunpack.c.l.b16 %v1643
        %v1804 = vunpack.c.l.b16 %v1644
        %v1805 = vunpack.c.l.b16 %v1645
        %v1806 = vunpack.c.l.b16 %v1646
        %v1807 = vunpack.c.l.b16 %v1647
        %v1808 = vunpack.c.l.b16 %v1648
        %v1809 = vunpack.c.l.b16 %v1649
        %v1810 = vunpack.c.l.b16 %v1650
        %v1811 = vunpack.c.l.b16 %v1651
        %v1812 = vunpack.c.l.b16 %v1652
        %v1813 = vunpack.c.l.b16 %v1653
        %v1814 = vunpack.c.l.b16 %v1654
        %v1815 = vunpack.c.l.b16 %v1655
        %v1816 = vunpack.c.l.b16 %v1656
        %v1817 = vunpack.c.l.b16 %v1657
        %v1818 = vunpack.c.l.b16 %v1658
        %v1819 = vunpack.c.l.b16 %v1659
        %v1820 = vunpack.c.l.b16 %v1660
        %v1821 = vunpack.c.l.b16 %v1661
        %v1822 = vunpack.c.l.b16 %v1662
        %v1823 = vunpack.c.l.b16 %v1663
        %v1824 = vunpack.c.l.b16 %v1664
        %v1825 = vpack.c.b16 %v1746, %v1745
        %v1826 = vpack.c.b16 %v1748, %v1747
        %v1827 = vpack.c.b16 %v1750, %v1749
        %v1828 = vpack.c.b16 %v1752, %v1751
        %v1829 = vpack.c.b16 %v1754, %v1753
        %v1830 = vpack.c.b16 %v1756, %v1755
        %v1831 = vpack.c.b16 %v1758, %v1757
        %v1832 = vpack.c.b16 %v1760, %v1759
        %v1833 = vpack.c.b16 %v1762, %v1761
        %v1834 = vpack.c.b16 %v1764, %v1763
        %v1835 = vpack.c.b16 %v1766, %v1765
        %v1836 = vpack.c.b16 %v1768, %v1767
        %v1837 = vpack.c.b16 %v1770, %v1769
        %v1838 = vpack.c.b16 %v1772, %v1771
        %v1839 = vpack.c.b16 %v1774, %v1773
        %v1840 = vpack.c.b16 %v1776, %v1775
        %v1841 = vpack.c.b16 %v1778, %v1777
        %v1842 = vpack.c.b16 %v1780, %v1779
        %v1843 = vpack.c.b16 %v1782, %v1781
        %v1844 = vpack.c.b16 %v1784, %v1783
        %v1845 = vpack.c.b16 %v1786, %v1785
        %v1846 = vpack.c.b16 %v1788, %v1787
        %v1847 = vpack.c.b16 %v1790, %v1789
        %v1848 = vpack.c.b16 %v1792, %v1791
        %v1849 = vpack.c.b16 %v1794, %v1793
        %v1850 = vpack.c.b16 %v1796, %v1795
        %v1851 = vpack.c.b16 %v1798, %v1797
        %v1852 = vpack.c.b16 %v1800, %v1799
        %v1853 = vpack.c.b16 %v1802, %v1801
        %v1854 = vpack.c.b16 %v1804, %v1803
        %v1855 = vpack.c.b16 %v1806, %v1805
        %v1856 = vpack.c.b16 %v1808, %v1807
        %v1857 = vpack.c.b16 %v1810, %v1809
        %v1858 = vpack.c.b16 %v1812, %v1811
        %v1859 = vpack.c.b16 %v1814, %v1813
        %v1860 = vpack.c.b16 %v1816, %v1815
        %v1861 = vpack.c.b16 %v1818, %v1817
        %v1862 = vpack.c.b16 %v1820, %v1819
        %v1863 = vpack.c.b16 %v1822, %v1821
        %v1864 = vpack.c.b16 %v1824, %v1823
        %1905 = vmatprep.subr.bf16.mxu0 0
        %1906 = vmatpush1.bf16.msra.mxu0 %v1825
        %1907 = vmatprep.subr.bf16.mxu0 0
        %1908 = vmatpush1.bf16.msra.mxu0 %v1826
        %1909 = vmatprep.subr.bf16.mxu0 0
        %1910 = vmatpush1.bf16.msra.mxu0 %v1827
        %1911 = vmatprep.subr.bf16.mxu0 0
        %1912 = vmatpush1.bf16.msra.mxu0 %v1828
        %1913 = vmatprep.subr.bf16.mxu0 0
        %1914 = vmatpush1.bf16.msra.mxu0 %v1829
        %1915 = vmatprep.subr.bf16.mxu0 0
        %1916 = vmatpush1.bf16.msra.mxu0 %v1830
        %1917 = vmatprep.subr.bf16.mxu0 0
        %1918 = vmatpush1.bf16.msra.mxu0 %v1831
        %1919 = vmatprep.subr.bf16.mxu0 0
        %1920 = vmatpush1.bf16.msra.mxu0 %v1832
        %1921 = vmatprep.subr.bf16.mxu0 0
        %1922 = vmatpush1.bf16.msra.mxu0 %v1833
        %1923 = vmatprep.subr.bf16.mxu0 0
        %1924 = vmatpush1.bf16.msra.mxu0 %v1834
        %1925 = vmatprep.subr.bf16.mxu0 0
        %1926 = vmatpush1.bf16.msra.mxu0 %v1835
        %1927 = vmatprep.subr.bf16.mxu0 0
        %1928 = vmatpush1.bf16.msra.mxu0 %v1836
        %1929 = vmatprep.subr.bf16.mxu0 0
        %1930 = vmatpush1.bf16.msra.mxu0 %v1837
        %1931 = vmatprep.subr.bf16.mxu0 0
        %1932 = vmatpush1.bf16.msra.mxu0 %v1838
        %1933 = vmatprep.subr.bf16.mxu0 0
        %1934 = vmatpush1.bf16.msra.mxu0 %v1839
        %1935 = vmatprep.subr.bf16.mxu0 0
        %1936 = vmatpush1.bf16.msra.mxu0 %v1840
        %1937 = vmatprep.mubr.bf16.mxu0 %v1580
        %1938 = vmatmul.mubr.bf16.gmra.mrb[0].mxu0 %v1579
        %v1939 = vpop.f32.mrb[0].mxu0
        %v1940 = vadd.f32 0.0, %v1939
        %v1941 = vpop.f32.mrb[0].mxu0
        %v1942 = vpop.f32.mrb[0].mxu0
        %v1943 = vpop.f32.mrb[0].mxu0
        %1944 = vdwg.mxu0
        %1945 = vmatprep.subr.bf16.mxu0 0
        %1946 = vmatpush1.bf16.msra.mxu0 %v1841
        %1947 = vmatprep.subr.bf16.mxu0 0
        %1948 = vmatpush1.bf16.msra.mxu0 %v1842
        %1949 = vmatprep.subr.bf16.mxu0 0
        %1950 = vmatpush1.bf16.msra.mxu0 %v1843
        %1951 = vmatprep.subr.bf16.mxu0 0
        %1952 = vmatpush1.bf16.msra.mxu0 %v1844
        %1953 = vmatprep.subr.bf16.mxu0 0
        %1954 = vmatpush1.bf16.msra.mxu0 %v1845
        %1955 = vmatprep.subr.bf16.mxu0 0
        %1956 = vmatpush1.bf16.msra.mxu0 %v1846
        %1957 = vmatprep.subr.bf16.mxu0 0
        %1958 = vmatpush1.bf16.msra.mxu0 %v1847
        %1959 = vmatprep.subr.bf16.mxu0 0
        %1960 = vmatpush1.bf16.msra.mxu0 %v1848
        %1961 = vmatprep.subr.bf16.mxu0 0
        %1962 = vmatpush1.bf16.msra.mxu0 %v1849
        %1963 = vmatprep.subr.bf16.mxu0 0
        %1964 = vmatpush1.bf16.msra.mxu0 %v1850
        %1965 = vmatprep.subr.bf16.mxu0 0
        %1966 = vmatpush1.bf16.msra.mxu0 %v1851
        %1967 = vmatprep.subr.bf16.mxu0 0
        %1968 = vmatpush1.bf16.msra.mxu0 %v1852
        %1969 = vmatprep.subr.bf16.mxu0 0
        %1970 = vmatpush1.bf16.msra.mxu0 %v1853
        %1971 = vmatprep.subr.bf16.mxu0 0
        %1972 = vmatpush1.bf16.msra.mxu0 %v1854
        %1973 = vmatprep.subr.bf16.mxu0 0
        %1974 = vmatpush1.bf16.msra.mxu0 %v1855
        %1975 = vmatprep.subr.bf16.mxu0 0
        %1976 = vmatpush1.bf16.msra.mxu0 %v1856
        %1977 = vmatprep.mubr.bf16.mxu0 %v1582
        %1978 = vmatmul.mubr.bf16.gmra.mrb[0].mxu0 %v1581
        %v1979 = vpop.f32.mrb[0].mxu0
        %v1980 = vadd.f32 %v1940, %v1979
        %v1981 = vpop.f32.mrb[0].mxu0
        %v1982 = vpop.f32.mrb[0].mxu0
        %v1983 = vpop.f32.mrb[0].mxu0
        %1984 = vdwg.mxu0
        %1985 = vmatprep.subr.bf16.mxu0 0
        %1986 = vmatpush1.bf16.msra.mxu0 %v1857
        %1987 = vmatprep.subr.bf16.mxu0 0
        %1988 = vmatpush1.bf16.msra.mxu0 %v1858
        %1989 = vmatprep.subr.bf16.mxu0 0
        %1990 = vmatpush1.bf16.msra.mxu0 %v1859
        %1991 = vmatprep.subr.bf16.mxu0 0
        %1992 = vmatpush1.bf16.msra.mxu0 %v1860
        %1993 = vmatprep.subr.bf16.mxu0 0
        %1994 = vmatpush1.bf16.msra.mxu0 %v1861
        %1995 = vmatprep.subr.bf16.mxu0 0
        %1996 = vmatpush1.bf16.msra.mxu0 %v1862
        %1997 = vmatprep.subr.bf16.mxu0 0
        %1998 = vmatpush1.bf16.msra.mxu0 %v1863
        %1999 = vmatprep.subr.bf16.mxu0 0
        %2000 = vmatpush1.bf16.msra.mxu0 %v1864
        %2001 = vmatprep.subr.bf16.mxu0 0
        %2002 = vmatpush1.bf16.msra.mxu0 0
        %2003 = vmatprep.subr.bf16.mxu0 0
        %2004 = vmatpush1.bf16.msra.mxu0 0
        %2005 = vmatprep.subr.bf16.mxu0 0
        %2006 = vmatpush1.bf16.msra.mxu0 0
        %2007 = vmatprep.subr.bf16.mxu0 0
        %2008 = vmatpush1.bf16.msra.mxu0 0
        %2009 = vmatprep.subr.bf16.mxu0 0
        %2010 = vmatpush1.bf16.msra.mxu0 0
        %2011 = vmatprep.subr.bf16.mxu0 0
        %2012 = vmatpush1.bf16.msra.mxu0 0
        %2013 = vmatprep.subr.bf16.mxu0 0
        %2014 = vmatpush1.bf16.msra.mxu0 0
        %2015 = vmatprep.subr.bf16.mxu0 0
        %2016 = vmatpush1.bf16.msra.mxu0 0
        %2017 = vmatprep.mubr.bf16.mxu0 0
        %2018 = vmatmul.mubr.bf16.gmra.mrb[0].mxu0 %v1583
        %v2019 = vpop.f32.mrb[0].mxu0
        %v2020 = vadd.f32 %v1980, %v2019
        %v2021 = vpop.f32.mrb[0].mxu0
        %v2022 = vpop.f32.mrb[0].mxu0
        %v2023 = vpop.f32.mrb[0].mxu0
        %2024 = vdwg.mxu0
        %v2025 = vld [vmem:[%s4 + $0x2] sm:$0x1]
        %v2026 = vlaneseq
        %v2027 = vshrl.u32 %v2026, 7
        %v2028 = vsub.s32 0, %v2027
        %v2029 = vrot.slane %v2025, %v2028
        %v2030 = vmul.f32 %v2020, %v2029
        %v2031 = vld [vmem:[%s5 + $0x2] sm:$0x1]
        %v2032 = vlaneseq
        %v2033 = vshrl.u32 %v2032, 7
        %v2034 = vsub.s32 0, %v2033
        %v2035 = vrot.slane %v2031, %v2034
        %v2036 = vadd.f32 %v2030, %v2035
        %v2037 = vld [vmem:[%s6 + $0x2] sm:$0x1]
        %vm2038 = vcmp.ge.f32.partialorder %v2036, 0.0
        %v2039 = vlaneseq
        %v2040 = vshrl.u32 %v2039, 7
        %v2041 = vsub.s32 0, %v2040
        %v2042 = vrot.slane %v2037, %v2041
        %v2043 = vmul.f32 %v2042, %v2036
        %v2044 = vsel %vm2038, %v2036, %v2043
        %2045 = vst [vmem:[#allocation4 + $0x2] sm:$0xf] %v2044
        %s2046 = scalar_lea.vmem [#allocation4], 2
        %v2047 = vld [vmem:[%s2046] ss:$2 sm:$0x3]
        %s2048 = scalar_lea.vmem [#allocation4], 3
        %v2049 = vld [vmem:[%s2048] ss:$2 sm:$0x3]
        %vm2050 = vcmp.gt.f32.partialorder %v2049, %v2047
        %v2051 = vsel %vm2050, 1, 0
        %v2052 = vmax.f32 %v2047, %v2049
        %2053 = vst [vmem:[%s431] sm:$0x3] %v2052
        %vm2054 = vcmp.eq.s32.totalorder %v2051, 0
        %v2055 = vsel %vm2054, %v2052, 0.0
        %2056 = vst [vmem:[%s2046] ss:$2 sm:$0x3] %v2055
        %vm2057 = vcmp.eq.s32.totalorder %v2051, 1
        %v2058 = vsel %vm2057, %v2052, 0.0
        %2059 = vst [vmem:[%s2048] ss:$2 sm:$0x3] %v2058
        %v2060 = vld [vmem:[#allocation4] sm:$0xf]
        %v2061 = vld [vmem:[#allocation4 + $0x1] sm:$0xf]
        %v2062 = vld [vmem:[#allocation4 + $0x2] sm:$0xf]
        %v2063 = vld [vmem:[#allocation4 + $0x3] sm:$0xf]
        %v2064 = vld [vmem:[#allocation4 + $0x4] sm:$0xf]
        %v2065 = vpack.c.bf16 %v2060, %v2060
        %v2066 = vpack.c.bf16 %v2061, %v2061
        %v2067 = vpack.c.bf16 %v2062, %v2062
        %v2068 = vpack.c.bf16 %v2063, %v2063
        %v2069 = vpack.c.bf16 %v2064, %v2064
        %s2070 = scalar_lea.vmem [#allocation5], 960
        %v2071 = vld [vmem:[%s2070] sm:$0xf]
        %v2072 = vld [vmem:[%s2070 + $0x4] sm:$0xf]
        %v2073 = vld [vmem:[%s2070 + $0x8] sm:$0xf]
        %v2074 = vld [vmem:[%s2070 + $0xc] sm:$0xf]
        %v2075 = vld [vmem:[%s2070 + $0x10] sm:$0xf]
        %v2076 = vld [vmem:[%s2070 + $0x14] sm:$0xf]
        %v2077 = vld [vmem:[%s2070 + $0x18] sm:$0xf]
        %v2078 = vld [vmem:[%s2070 + $0x1c] sm:$0xf]
        %v2079 = vld [vmem:[%s2070 + $0x20] sm:$0xf]
        %v2080 = vld [vmem:[%s2070 + $0x24] sm:$0xf]
        %v2081 = vld [vmem:[%s2070 + $0x28] sm:$0xf]
        %v2082 = vld [vmem:[%s2070 + $0x2c] sm:$0xf]
        %v2083 = vld [vmem:[%s2070 + $0x30] sm:$0xf]
        %v2084 = vld [vmem:[%s2070 + $0x34] sm:$0xf]
        %v2085 = vld [vmem:[%s2070 + $0x38] sm:$0xf]
        %v2086 = vld [vmem:[%s2070 + $0x3c] sm:$0xf]
        %v2087 = vld [vmem:[%s2070 + $0x40] sm:$0xf]
        %v2088 = vld [vmem:[%s2070 + $0x44] sm:$0xf]
        %v2089 = vld [vmem:[%s2070 + $0x48] sm:$0xf]
        %v2090 = vld [vmem:[%s2070 + $0x4c] sm:$0xf]
        %v2091 = vld [vmem:[%s2070 + $0x50] sm:$0xf]
        %v2092 = vld [vmem:[%s2070 + $0x54] sm:$0xf]
        %v2093 = vld [vmem:[%s2070 + $0x58] sm:$0xf]
        %v2094 = vld [vmem:[%s2070 + $0x5c] sm:$0xf]
        %v2095 = vld [vmem:[%s2070 + $0x60] sm:$0xf]
        %v2096 = vld [vmem:[%s2070 + $0x64] sm:$0xf]
        %v2097 = vld [vmem:[%s2070 + $0x68] sm:$0xf]
        %v2098 = vld [vmem:[%s2070 + $0x6c] sm:$0xf]
        %v2099 = vld [vmem:[%s2070 + $0x70] sm:$0xf]
        %v2100 = vld [vmem:[%s2070 + $0x74] sm:$0xf]
        %v2101 = vld [vmem:[%s2070 + $0x78] sm:$0xf]
        %v2102 = vld [vmem:[%s2070 + $0x7c] sm:$0xf]
        %v2103 = vld [vmem:[%s2070 + $0x80] sm:$0xf]
        %v2104 = vld [vmem:[%s2070 + $0x84] sm:$0xf]
        %v2105 = vld [vmem:[%s2070 + $0x88] sm:$0xf]
        %v2106 = vld [vmem:[%s2070 + $0x8c] sm:$0xf]
        %v2107 = vld [vmem:[%s2070 + $0x90] sm:$0xf]
        %v2108 = vld [vmem:[%s2070 + $0x94] sm:$0xf]
        %v2109 = vld [vmem:[%s2070 + $0x98] sm:$0xf]
        %v2110 = vld [vmem:[%s2070 + $0x9c] sm:$0xf]
        %v2111 = vld [vmem:[%s2070 + $0xa0] sm:$0xf]
        %v2112 = vld [vmem:[%s2070 + $0xa4] sm:$0xf]
        %v2113 = vld [vmem:[%s2070 + $0xa8] sm:$0xf]
        %v2114 = vld [vmem:[%s2070 + $0xac] sm:$0xf]
        %v2115 = vld [vmem:[%s2070 + $0xb0] sm:$0xf]
        %v2116 = vld [vmem:[%s2070 + $0xb4] sm:$0xf]
        %v2117 = vld [vmem:[%s2070 + $0xb8] sm:$0xf]
        %v2118 = vld [vmem:[%s2070 + $0xbc] sm:$0xf]
        %v2119 = vld [vmem:[%s2070 + $0xc0] sm:$0xf]
        %v2120 = vld [vmem:[%s2070 + $0xc4] sm:$0xf]
        %v2121 = vld [vmem:[%s2070 + $0xc8] sm:$0xf]
        %v2122 = vld [vmem:[%s2070 + $0xcc] sm:$0xf]
        %v2123 = vld [vmem:[%s2070 + $0xd0] sm:$0xf]
        %v2124 = vld [vmem:[%s2070 + $0xd4] sm:$0xf]
        %v2125 = vld [vmem:[%s2070 + $0xd8] sm:$0xf]
        %v2126 = vld [vmem:[%s2070 + $0xdc] sm:$0xf]
        %v2127 = vld [vmem:[%s2070 + $0xe0] sm:$0xf]
        %v2128 = vld [vmem:[%s2070 + $0xe4] sm:$0xf]
        %v2129 = vld [vmem:[%s2070 + $0xe8] sm:$0xf]
        %v2130 = vld [vmem:[%s2070 + $0xec] sm:$0xf]
        %v2131 = vld [vmem:[%s2070 + $0xf0] sm:$0xf]
        %v2132 = vld [vmem:[%s2070 + $0xf4] sm:$0xf]
        %v2133 = vld [vmem:[%s2070 + $0xf8] sm:$0xf]
        %v2134 = vld [vmem:[%s2070 + $0xfc] sm:$0xf]
        %v2135 = vld [vmem:[%s2070 + $0x100] sm:$0xf]
        %v2136 = vld [vmem:[%s2070 + $0x104] sm:$0xf]
        %v2137 = vld [vmem:[%s2070 + $0x108] sm:$0xf]
        %v2138 = vld [vmem:[%s2070 + $0x10c] sm:$0xf]
        %v2139 = vld [vmem:[%s2070 + $0x110] sm:$0xf]
        %v2140 = vld [vmem:[%s2070 + $0x114] sm:$0xf]
        %v2141 = vld [vmem:[%s2070 + $0x118] sm:$0xf]
        %v2142 = vld [vmem:[%s2070 + $0x11c] sm:$0xf]
        %v2143 = vld [vmem:[%s2070 + $0x120] sm:$0xf]
        %v2144 = vld [vmem:[%s2070 + $0x124] sm:$0xf]
        %v2145 = vld [vmem:[%s2070 + $0x128] sm:$0xf]
        %v2146 = vld [vmem:[%s2070 + $0x12c] sm:$0xf]
        %v2147 = vld [vmem:[%s2070 + $0x130] sm:$0xf]
        %v2148 = vld [vmem:[%s2070 + $0x134] sm:$0xf]
        %v2149 = vld [vmem:[%s2070 + $0x138] sm:$0xf]
        %v2150 = vld [vmem:[%s2070 + $0x13c] sm:$0xf]
        %v2231 = vunpack.c.l.b16 %v2071
        %v2232 = vunpack.c.l.b16 %v2072
        %v2233 = vunpack.c.l.b16 %v2073
        %v2234 = vunpack.c.l.b16 %v2074
        %v2235 = vunpack.c.l.b16 %v2075
        %v2236 = vunpack.c.l.b16 %v2076
        %v2237 = vunpack.c.l.b16 %v2077
        %v2238 = vunpack.c.l.b16 %v2078
        %v2239 = vunpack.c.l.b16 %v2079
        %v2240 = vunpack.c.l.b16 %v2080
        %v2241 = vunpack.c.l.b16 %v2081
        %v2242 = vunpack.c.l.b16 %v2082
        %v2243 = vunpack.c.l.b16 %v2083
        %v2244 = vunpack.c.l.b16 %v2084
        %v2245 = vunpack.c.l.b16 %v2085
        %v2246 = vunpack.c.l.b16 %v2086
        %v2247 = vunpack.c.l.b16 %v2087
        %v2248 = vunpack.c.l.b16 %v2088
        %v2249 = vunpack.c.l.b16 %v2089
        %v2250 = vunpack.c.l.b16 %v2090
        %v2251 = vunpack.c.l.b16 %v2091
        %v2252 = vunpack.c.l.b16 %v2092
        %v2253 = vunpack.c.l.b16 %v2093
        %v2254 = vunpack.c.l.b16 %v2094
        %v2255 = vunpack.c.l.b16 %v2095
        %v2256 = vunpack.c.l.b16 %v2096
        %v2257 = vunpack.c.l.b16 %v2097
        %v2258 = vunpack.c.l.b16 %v2098
        %v2259 = vunpack.c.l.b16 %v2099
        %v2260 = vunpack.c.l.b16 %v2100
        %v2261 = vunpack.c.l.b16 %v2101
        %v2262 = vunpack.c.l.b16 %v2102
        %v2263 = vunpack.c.l.b16 %v2103
        %v2264 = vunpack.c.l.b16 %v2104
        %v2265 = vunpack.c.l.b16 %v2105
        %v2266 = vunpack.c.l.b16 %v2106
        %v2267 = vunpack.c.l.b16 %v2107
        %v2268 = vunpack.c.l.b16 %v2108
        %v2269 = vunpack.c.l.b16 %v2109
        %v2270 = vunpack.c.l.b16 %v2110
        %v2271 = vunpack.c.l.b16 %v2111
        %v2272 = vunpack.c.l.b16 %v2112
        %v2273 = vunpack.c.l.b16 %v2113
        %v2274 = vunpack.c.l.b16 %v2114
        %v2275 = vunpack.c.l.b16 %v2115
        %v2276 = vunpack.c.l.b16 %v2116
        %v2277 = vunpack.c.l.b16 %v2117
        %v2278 = vunpack.c.l.b16 %v2118
        %v2279 = vunpack.c.l.b16 %v2119
        %v2280 = vunpack.c.l.b16 %v2120
        %v2281 = vunpack.c.l.b16 %v2121
        %v2282 = vunpack.c.l.b16 %v2122
        %v2283 = vunpack.c.l.b16 %v2123
        %v2284 = vunpack.c.l.b16 %v2124
        %v2285 = vunpack.c.l.b16 %v2125
        %v2286 = vunpack.c.l.b16 %v2126
        %v2287 = vunpack.c.l.b16 %v2127
        %v2288 = vunpack.c.l.b16 %v2128
        %v2289 = vunpack.c.l.b16 %v2129
        %v2290 = vunpack.c.l.b16 %v2130
        %v2291 = vunpack.c.l.b16 %v2131
        %v2292 = vunpack.c.l.b16 %v2132
        %v2293 = vunpack.c.l.b16 %v2133
        %v2294 = vunpack.c.l.b16 %v2134
        %v2295 = vunpack.c.l.b16 %v2135
        %v2296 = vunpack.c.l.b16 %v2136
        %v2297 = vunpack.c.l.b16 %v2137
        %v2298 = vunpack.c.l.b16 %v2138
        %v2299 = vunpack.c.l.b16 %v2139
        %v2300 = vunpack.c.l.b16 %v2140
        %v2301 = vunpack.c.l.b16 %v2141
        %v2302 = vunpack.c.l.b16 %v2142
        %v2303 = vunpack.c.l.b16 %v2143
        %v2304 = vunpack.c.l.b16 %v2144
        %v2305 = vunpack.c.l.b16 %v2145
        %v2306 = vunpack.c.l.b16 %v2146
        %v2307 = vunpack.c.l.b16 %v2147
        %v2308 = vunpack.c.l.b16 %v2148
        %v2309 = vunpack.c.l.b16 %v2149
        %v2310 = vunpack.c.l.b16 %v2150
        %v2311 = vpack.c.b16 %v2232, %v2231
        %v2312 = vpack.c.b16 %v2234, %v2233
        %v2313 = vpack.c.b16 %v2236, %v2235
        %v2314 = vpack.c.b16 %v2238, %v2237
        %v2315 = vpack.c.b16 %v2240, %v2239
        %v2316 = vpack.c.b16 %v2242, %v2241
        %v2317 = vpack.c.b16 %v2244, %v2243
        %v2318 = vpack.c.b16 %v2246, %v2245
        %v2319 = vpack.c.b16 %v2248, %v2247
        %v2320 = vpack.c.b16 %v2250, %v2249
        %v2321 = vpack.c.b16 %v2252, %v2251
        %v2322 = vpack.c.b16 %v2254, %v2253
        %v2323 = vpack.c.b16 %v2256, %v2255
        %v2324 = vpack.c.b16 %v2258, %v2257
        %v2325 = vpack.c.b16 %v2260, %v2259
        %v2326 = vpack.c.b16 %v2262, %v2261
        %v2327 = vpack.c.b16 %v2264, %v2263
        %v2328 = vpack.c.b16 %v2266, %v2265
        %v2329 = vpack.c.b16 %v2268, %v2267
        %v2330 = vpack.c.b16 %v2270, %v2269
        %v2331 = vpack.c.b16 %v2272, %v2271
        %v2332 = vpack.c.b16 %v2274, %v2273
        %v2333 = vpack.c.b16 %v2276, %v2275
        %v2334 = vpack.c.b16 %v2278, %v2277
        %v2335 = vpack.c.b16 %v2280, %v2279
        %v2336 = vpack.c.b16 %v2282, %v2281
        %v2337 = vpack.c.b16 %v2284, %v2283
        %v2338 = vpack.c.b16 %v2286, %v2285
        %v2339 = vpack.c.b16 %v2288, %v2287
        %v2340 = vpack.c.b16 %v2290, %v2289
        %v2341 = vpack.c.b16 %v2292, %v2291
        %v2342 = vpack.c.b16 %v2294, %v2293
        %v2343 = vpack.c.b16 %v2296, %v2295
        %v2344 = vpack.c.b16 %v2298, %v2297
        %v2345 = vpack.c.b16 %v2300, %v2299
        %v2346 = vpack.c.b16 %v2302, %v2301
        %v2347 = vpack.c.b16 %v2304, %v2303
        %v2348 = vpack.c.b16 %v2306, %v2305
        %v2349 = vpack.c.b16 %v2308, %v2307
        %v2350 = vpack.c.b16 %v2310, %v2309
        %2391 = vmatprep.subr.bf16.mxu0 0
        %2392 = vmatpush1.bf16.msra.mxu0 %v2311
        %2393 = vmatprep.subr.bf16.mxu0 0
        %2394 = vmatpush1.bf16.msra.mxu0 %v2312
        %2395 = vmatprep.subr.bf16.mxu0 0
        %2396 = vmatpush1.bf16.msra.mxu0 %v2313
        %2397 = vmatprep.subr.bf16.mxu0 0
        %2398 = vmatpush1.bf16.msra.mxu0 %v2314
        %2399 = vmatprep.subr.bf16.mxu0 0
        %2400 = vmatpush1.bf16.msra.mxu0 %v2315
        %2401 = vmatprep.subr.bf16.mxu0 0
        %2402 = vmatpush1.bf16.msra.mxu0 %v2316
        %2403 = vmatprep.subr.bf16.mxu0 0
        %2404 = vmatpush1.bf16.msra.mxu0 %v2317
        %2405 = vmatprep.subr.bf16.mxu0 0
        %2406 = vmatpush1.bf16.msra.mxu0 %v2318
        %2407 = vmatprep.subr.bf16.mxu0 0
        %2408 = vmatpush1.bf16.msra.mxu0 %v2319
        %2409 = vmatprep.subr.bf16.mxu0 0
        %2410 = vmatpush1.bf16.msra.mxu0 %v2320
        %2411 = vmatprep.subr.bf16.mxu0 0
        %2412 = vmatpush1.bf16.msra.mxu0 %v2321
        %2413 = vmatprep.subr.bf16.mxu0 0
        %2414 = vmatpush1.bf16.msra.mxu0 %v2322
        %2415 = vmatprep.subr.bf16.mxu0 0
        %2416 = vmatpush1.bf16.msra.mxu0 %v2323
        %2417 = vmatprep.subr.bf16.mxu0 0
        %2418 = vmatpush1.bf16.msra.mxu0 %v2324
        %2419 = vmatprep.subr.bf16.mxu0 0
        %2420 = vmatpush1.bf16.msra.mxu0 %v2325
        %2421 = vmatprep.subr.bf16.mxu0 0
        %2422 = vmatpush1.bf16.msra.mxu0 %v2326
        %2423 = vmatprep.mubr.bf16.mxu0 %v2066
        %2424 = vmatmul.mubr.bf16.gmra.mrb[0].mxu0 %v2065
        %v2425 = vpop.f32.mrb[0].mxu0
        %v2426 = vadd.f32 0.0, %v2425
        %v2427 = vpop.f32.mrb[0].mxu0
        %v2428 = vpop.f32.mrb[0].mxu0
        %v2429 = vpop.f32.mrb[0].mxu0
        %2430 = vdwg.mxu0
        %2431 = vmatprep.subr.bf16.mxu0 0
        %2432 = vmatpush1.bf16.msra.mxu0 %v2327
        %2433 = vmatprep.subr.bf16.mxu0 0
        %2434 = vmatpush1.bf16.msra.mxu0 %v2328
        %2435 = vmatprep.subr.bf16.mxu0 0
        %2436 = vmatpush1.bf16.msra.mxu0 %v2329
        %2437 = vmatprep.subr.bf16.mxu0 0
        %2438 = vmatpush1.bf16.msra.mxu0 %v2330
        %2439 = vmatprep.subr.bf16.mxu0 0
        %2440 = vmatpush1.bf16.msra.mxu0 %v2331
        %2441 = vmatprep.subr.bf16.mxu0 0
        %2442 = vmatpush1.bf16.msra.mxu0 %v2332
        %2443 = vmatprep.subr.bf16.mxu0 0
        %2444 = vmatpush1.bf16.msra.mxu0 %v2333
        %2445 = vmatprep.subr.bf16.mxu0 0
        %2446 = vmatpush1.bf16.msra.mxu0 %v2334
        %2447 = vmatprep.subr.bf16.mxu0 0
        %2448 = vmatpush1.bf16.msra.mxu0 %v2335
        %2449 = vmatprep.subr.bf16.mxu0 0
        %2450 = vmatpush1.bf16.msra.mxu0 %v2336
        %2451 = vmatprep.subr.bf16.mxu0 0
        %2452 = vmatpush1.bf16.msra.mxu0 %v2337
        %2453 = vmatprep.subr.bf16.mxu0 0
        %2454 = vmatpush1.bf16.msra.mxu0 %v2338
        %2455 = vmatprep.subr.bf16.mxu0 0
        %2456 = vmatpush1.bf16.msra.mxu0 %v2339
        %2457 = vmatprep.subr.bf16.mxu0 0
        %2458 = vmatpush1.bf16.msra.mxu0 %v2340
        %2459 = vmatprep.subr.bf16.mxu0 0
        %2460 = vmatpush1.bf16.msra.mxu0 %v2341
        %2461 = vmatprep.subr.bf16.mxu0 0
        %2462 = vmatpush1.bf16.msra.mxu0 %v2342
        %2463 = vmatprep.mubr.bf16.mxu0 %v2068
        %2464 = vmatmul.mubr.bf16.gmra.mrb[0].mxu0 %v2067
        %v2465 = vpop.f32.mrb[0].mxu0
        %v2466 = vadd.f32 %v2426, %v2465
        %v2467 = vpop.f32.mrb[0].mxu0
        %v2468 = vpop.f32.mrb[0].mxu0
        %v2469 = vpop.f32.mrb[0].mxu0
        %2470 = vdwg.mxu0
        %2471 = vmatprep.subr.bf16.mxu0 0
        %2472 = vmatpush1.bf16.msra.mxu0 %v2343
        %2473 = vmatprep.subr.bf16.mxu0 0
        %2474 = vmatpush1.bf16.msra.mxu0 %v2344
        %2475 = vmatprep.subr.bf16.mxu0 0
        %2476 = vmatpush1.bf16.msra.mxu0 %v2345
        %2477 = vmatprep.subr.bf16.mxu0 0
        %2478 = vmatpush1.bf16.msra.mxu0 %v2346
        %2479 = vmatprep.subr.bf16.mxu0 0
        %2480 = vmatpush1.bf16.msra.mxu0 %v2347
        %2481 = vmatprep.subr.bf16.mxu0 0
        %2482 = vmatpush1.bf16.msra.mxu0 %v2348
        %2483 = vmatprep.subr.bf16.mxu0 0
        %2484 = vmatpush1.bf16.msra.mxu0 %v2349
        %2485 = vmatprep.subr.bf16.mxu0 0
        %2486 = vmatpush1.bf16.msra.mxu0 %v2350
        %2487 = vmatprep.subr.bf16.mxu0 0
        %2488 = vmatpush1.bf16.msra.mxu0 0
        %2489 = vmatprep.subr.bf16.mxu0 0
        %2490 = vmatpush1.bf16.msra.mxu0 0
        %2491 = vmatprep.subr.bf16.mxu0 0
        %2492 = vmatpush1.bf16.msra.mxu0 0
        %2493 = vmatprep.subr.bf16.mxu0 0
        %2494 = vmatpush1.bf16.msra.mxu0 0
        %2495 = vmatprep.subr.bf16.mxu0 0
        %2496 = vmatpush1.bf16.msra.mxu0 0
        %2497 = vmatprep.subr.bf16.mxu0 0
        %2498 = vmatpush1.bf16.msra.mxu0 0
        %2499 = vmatprep.subr.bf16.mxu0 0
        %2500 = vmatpush1.bf16.msra.mxu0 0
        %2501 = vmatprep.subr.bf16.mxu0 0
        %2502 = vmatpush1.bf16.msra.mxu0 0
        %2503 = vmatprep.mubr.bf16.mxu0 0
        %2504 = vmatmul.mubr.bf16.gmra.mrb[0].mxu0 %v2069
        %v2505 = vpop.f32.mrb[0].mxu0
        %v2506 = vadd.f32 %v2466, %v2505
        %v2507 = vpop.f32.mrb[0].mxu0
        %v2508 = vpop.f32.mrb[0].mxu0
        %v2509 = vpop.f32.mrb[0].mxu0
        %2510 = vdwg.mxu0
        %v2511 = vld [vmem:[%s4 + $0x3] sm:$0x1]
        %v2512 = vlaneseq
        %v2513 = vshrl.u32 %v2512, 7
        %v2514 = vsub.s32 0, %v2513
        %v2515 = vrot.slane %v2511, %v2514
        %v2516 = vmul.f32 %v2506, %v2515
        %v2517 = vld [vmem:[%s5 + $0x3] sm:$0x1]
        %v2518 = vlaneseq
        %v2519 = vshrl.u32 %v2518, 7
        %v2520 = vsub.s32 0, %v2519
        %v2521 = vrot.slane %v2517, %v2520
        %v2522 = vadd.f32 %v2516, %v2521
        %v2523 = vtanh.pop %v2522
        %2524 = vst [vmem:[#allocation3 + $0x2] sm:$0xff] 0.0
        %2525 = vst [vmem:[#allocation3 + $0xa] sm:$0x3] 0.0
        %v2526 = vld [vmem:[%s1568] ss:$2 sm:$0xf]
        %vm2527 = vcmp.eq.s32.totalorder %v1571, 3
        %v2528 = vsel %vm2527, %v2523, %v2526
        %2529 = vst [vmem:[%s1568] ss:$2 sm:$0xf] %v2528
        %v2530 = vld [vmem:[%s1563] ss:$2 sm:$0xf]
        %vm2531 = vcmp.eq.s32.totalorder %v1571, 2
        %v2532 = vsel %vm2531, %v2523, %v2530
        %2533 = vst [vmem:[%s1563] ss:$2 sm:$0xf] %v2532
        %v2534 = vld [vmem:[%s1558] ss:$2 sm:$0xf]
        %vm2535 = vcmp.eq.s32.totalorder %v1571, 1
        %v2536 = vsel %vm2535, %v2523, %v2534
        %2537 = vst [vmem:[%s1558] ss:$2 sm:$0xf] %v2536
        %v2538 = vld [vmem:[%s1556] ss:$2 sm:$0xf]
        %vm2539 = vcmp.eq.s32.totalorder %v1571, 0
        %v2540 = vsel %vm2539, %v2523, %v2538
        %2541 = vst [vmem:[%s1556] ss:$2 sm:$0xf] %v2540
        %v2542 = vld [vmem:[#allocation3] sm:$0xff]
        %v2543 = vld [vmem:[#allocation3 + $0x8] sm:$0x3]
        %v2544 = vld [vmem:[#allocation3 + $0x1] sm:$0xff]
        %v2545 = vld [vmem:[#allocation3 + $0x9] sm:$0x3]
        %v2546 = vld [vmem:[#allocation3 + $0x2] sm:$0xff]
        %v2547 = vld [vmem:[#allocation3 + $0xa] sm:$0x3]
        %v2548 = vld [vmem:[#allocation3 + $0x3] sm:$0xff]
        %v2549 = vld [vmem:[#allocation3 + $0xb] sm:$0x3]
        %v2550 = vld [vmem:[#allocation3 + $0x4] sm:$0xff]
        %v2551 = vld [vmem:[#allocation3 + $0xc] sm:$0x3]
        %v2552 = vpack.c.bf16 %v2543, %v2542
        %v2553 = vpack.c.bf16 %v2545, %v2544
        %v2554 = vpack.c.bf16 %v2547, %v2546
        %v2555 = vpack.c.bf16 %v2549, %v2548
        %v2556 = vpack.c.bf16 %v2551, %v2550
        %s2557 = scalar_lea.vmem [#allocation5], 1280
        %v2558 = vld [vmem:[%s2557] sm:$0xf]
        %v2559 = vld [vmem:[%s2557 + $0x4] sm:$0xf]
        %v2560 = vld [vmem:[%s2557 + $0x8] sm:$0xf]
        %v2561 = vld [vmem:[%s2557 + $0xc] sm:$0xf]
        %v2562 = vld [vmem:[%s2557 + $0x10] sm:$0xf]
        %v2563 = vld [vmem:[%s2557 + $0x14] sm:$0xf]
        %v2564 = vld [vmem:[%s2557 + $0x18] sm:$0xf]
        %v2565 = vld [vmem:[%s2557 + $0x1c] sm:$0xf]
        %v2566 = vld [vmem:[%s2557 + $0x20] sm:$0xf]
        %v2567 = vld [vmem:[%s2557 + $0x24] sm:$0xf]
        %v2568 = vld [vmem:[%s2557 + $0x28] sm:$0xf]
        %v2569 = vld [vmem:[%s2557 + $0x2c] sm:$0xf]
        %v2570 = vld [vmem:[%s2557 + $0x30] sm:$0xf]
        %v2571 = vld [vmem:[%s2557 + $0x34] sm:$0xf]
        %v2572 = vld [vmem:[%s2557 + $0x38] sm:$0xf]
        %v2573 = vld [vmem:[%s2557 + $0x3c] sm:$0xf]
        %v2574 = vld [vmem:[%s2557 + $0x40] sm:$0xf]
        %v2575 = vld [vmem:[%s2557 + $0x44] sm:$0xf]
        %v2576 = vld [vmem:[%s2557 + $0x48] sm:$0xf]
        %v2577 = vld [vmem:[%s2557 + $0x4c] sm:$0xf]
        %v2578 = vld [vmem:[%s2557 + $0x50] sm:$0xf]
        %v2579 = vld [vmem:[%s2557 + $0x54] sm:$0xf]
        %v2580 = vld [vmem:[%s2557 + $0x58] sm:$0xf]
        %v2581 = vld [vmem:[%s2557 + $0x5c] sm:$0xf]
        %v2582 = vld [vmem:[%s2557 + $0x60] sm:$0xf]
        %v2583 = vld [vmem:[%s2557 + $0x64] sm:$0xf]
        %v2584 = vld [vmem:[%s2557 + $0x68] sm:$0xf]
        %v2585 = vld [vmem:[%s2557 + $0x6c] sm:$0xf]
        %v2586 = vld [vmem:[%s2557 + $0x70] sm:$0xf]
        %v2587 = vld [vmem:[%s2557 + $0x74] sm:$0xf]
        %v2588 = vld [vmem:[%s2557 + $0x78] sm:$0xf]
        %v2589 = vld [vmem:[%s2557 + $0x7c] sm:$0xf]
        %v2590 = vld [vmem:[%s2557 + $0x80] sm:$0xf]
        %v2591 = vld [vmem:[%s2557 + $0x84] sm:$0xf]
        %v2592 = vld [vmem:[%s2557 + $0x88] sm:$0xf]
        %v2593 = vld [vmem:[%s2557 + $0x8c] sm:$0xf]
        %v2594 = vld [vmem:[%s2557 + $0x90] sm:$0xf]
        %v2595 = vld [vmem:[%s2557 + $0x94] sm:$0xf]
        %v2596 = vld [vmem:[%s2557 + $0x98] sm:$0xf]
        %v2597 = vld [vmem:[%s2557 + $0x9c] sm:$0xf]
        %v2598 = vld [vmem:[%s2557 + $0xa0] sm:$0xf]
        %v2599 = vld [vmem:[%s2557 + $0xa4] sm:$0xf]
        %v2600 = vld [vmem:[%s2557 + $0xa8] sm:$0xf]
        %v2601 = vld [vmem:[%s2557 + $0xac] sm:$0xf]
        %v2602 = vld [vmem:[%s2557 + $0xb0] sm:$0xf]
        %v2603 = vld [vmem:[%s2557 + $0xb4] sm:$0xf]
        %v2604 = vld [vmem:[%s2557 + $0xb8] sm:$0xf]
        %v2605 = vld [vmem:[%s2557 + $0xbc] sm:$0xf]
        %v2606 = vld [vmem:[%s2557 + $0xc0] sm:$0xf]
        %v2607 = vld [vmem:[%s2557 + $0xc4] sm:$0xf]
        %v2608 = vld [vmem:[%s2557 + $0xc8] sm:$0xf]
        %v2609 = vld [vmem:[%s2557 + $0xcc] sm:$0xf]
        %v2610 = vld [vmem:[%s2557 + $0xd0] sm:$0xf]
        %v2611 = vld [vmem:[%s2557 + $0xd4] sm:$0xf]
        %v2612 = vld [vmem:[%s2557 + $0xd8] sm:$0xf]
        %v2613 = vld [vmem:[%s2557 + $0xdc] sm:$0xf]
        %v2614 = vld [vmem:[%s2557 + $0xe0] sm:$0xf]
        %v2615 = vld [vmem:[%s2557 + $0xe4] sm:$0xf]
        %v2616 = vld [vmem:[%s2557 + $0xe8] sm:$0xf]
        %v2617 = vld [vmem:[%s2557 + $0xec] sm:$0xf]
        %v2618 = vld [vmem:[%s2557 + $0xf0] sm:$0xf]
        %v2619 = vld [vmem:[%s2557 + $0xf4] sm:$0xf]
        %v2620 = vld [vmem:[%s2557 + $0xf8] sm:$0xf]
        %v2621 = vld [vmem:[%s2557 + $0xfc] sm:$0xf]
        %v2622 = vld [vmem:[%s2557 + $0x100] sm:$0xf]
        %v2623 = vld [vmem:[%s2557 + $0x104] sm:$0xf]
        %v2624 = vld [vmem:[%s2557 + $0x108] sm:$0xf]
        %v2625 = vld [vmem:[%s2557 + $0x10c] sm:$0xf]
        %v2626 = vld [vmem:[%s2557 + $0x110] sm:$0xf]
        %v2627 = vld [vmem:[%s2557 + $0x114] sm:$0xf]
        %v2628 = vld [vmem:[%s2557 + $0x118] sm:$0xf]
        %v2629 = vld [vmem:[%s2557 + $0x11c] sm:$0xf]
        %v2630 = vld [vmem:[%s2557 + $0x120] sm:$0xf]
        %v2631 = vld [vmem:[%s2557 + $0x124] sm:$0xf]
        %v2632 = vld [vmem:[%s2557 + $0x128] sm:$0xf]
        %v2633 = vld [vmem:[%s2557 + $0x12c] sm:$0xf]
        %v2634 = vld [vmem:[%s2557 + $0x130] sm:$0xf]
        %v2635 = vld [vmem:[%s2557 + $0x134] sm:$0xf]
        %v2636 = vld [vmem:[%s2557 + $0x138] sm:$0xf]
        %v2637 = vld [vmem:[%s2557 + $0x13c] sm:$0xf]
        %v2718 = vunpack.c.l.b16 %v2558
        %v2719 = vunpack.c.l.b16 %v2559
        %v2720 = vunpack.c.l.b16 %v2560
        %v2721 = vunpack.c.l.b16 %v2561
        %v2722 = vunpack.c.l.b16 %v2562
        %v2723 = vunpack.c.l.b16 %v2563
        %v2724 = vunpack.c.l.b16 %v2564
        %v2725 = vunpack.c.l.b16 %v2565
        %v2726 = vunpack.c.l.b16 %v2566
        %v2727 = vunpack.c.l.b16 %v2567
        %v2728 = vunpack.c.l.b16 %v2568
        %v2729 = vunpack.c.l.b16 %v2569
        %v2730 = vunpack.c.l.b16 %v2570
        %v2731 = vunpack.c.l.b16 %v2571
        %v2732 = vunpack.c.l.b16 %v2572
        %v2733 = vunpack.c.l.b16 %v2573
        %v2734 = vunpack.c.l.b16 %v2574
        %v2735 = vunpack.c.l.b16 %v2575
        %v2736 = vunpack.c.l.b16 %v2576
        %v2737 = vunpack.c.l.b16 %v2577
        %v2738 = vunpack.c.l.b16 %v2578
        %v2739 = vunpack.c.l.b16 %v2579
        %v2740 = vunpack.c.l.b16 %v2580
        %v2741 = vunpack.c.l.b16 %v2581
        %v2742 = vunpack.c.l.b16 %v2582
        %v2743 = vunpack.c.l.b16 %v2583
        %v2744 = vunpack.c.l.b16 %v2584
        %v2745 = vunpack.c.l.b16 %v2585
        %v2746 = vunpack.c.l.b16 %v2586
        %v2747 = vunpack.c.l.b16 %v2587
        %v2748 = vunpack.c.l.b16 %v2588
        %v2749 = vunpack.c.l.b16 %v2589
        %v2750 = vunpack.c.l.b16 %v2590
        %v2751 = vunpack.c.l.b16 %v2591
        %v2752 = vunpack.c.l.b16 %v2592
        %v2753 = vunpack.c.l.b16 %v2593
        %v2754 = vunpack.c.l.b16 %v2594
        %v2755 = vunpack.c.l.b16 %v2595
        %v2756 = vunpack.c.l.b16 %v2596
        %v2757 = vunpack.c.l.b16 %v2597
        %v2758 = vunpack.c.l.b16 %v2598
        %v2759 = vunpack.c.l.b16 %v2599
        %v2760 = vunpack.c.l.b16 %v2600
        %v2761 = vunpack.c.l.b16 %v2601
        %v2762 = vunpack.c.l.b16 %v2602
        %v2763 = vunpack.c.l.b16 %v2603
        %v2764 = vunpack.c.l.b16 %v2604
        %v2765 = vunpack.c.l.b16 %v2605
        %v2766 = vunpack.c.l.b16 %v2606
        %v2767 = vunpack.c.l.b16 %v2607
        %v2768 = vunpack.c.l.b16 %v2608
        %v2769 = vunpack.c.l.b16 %v2609
        %v2770 = vunpack.c.l.b16 %v2610
        %v2771 = vunpack.c.l.b16 %v2611
        %v2772 = vunpack.c.l.b16 %v2612
        %v2773 = vunpack.c.l.b16 %v2613
        %v2774 = vunpack.c.l.b16 %v2614
        %v2775 = vunpack.c.l.b16 %v2615
        %v2776 = vunpack.c.l.b16 %v2616
        %v2777 = vunpack.c.l.b16 %v2617
        %v2778 = vunpack.c.l.b16 %v2618
        %v2779 = vunpack.c.l.b16 %v2619
        %v2780 = vunpack.c.l.b16 %v2620
        %v2781 = vunpack.c.l.b16 %v2621
        %v2782 = vunpack.c.l.b16 %v2622
        %v2783 = vunpack.c.l.b16 %v2623
        %v2784 = vunpack.c.l.b16 %v2624
        %v2785 = vunpack.c.l.b16 %v2625
        %v2786 = vunpack.c.l.b16 %v2626
        %v2787 = vunpack.c.l.b16 %v2627
        %v2788 = vunpack.c.l.b16 %v2628
        %v2789 = vunpack.c.l.b16 %v2629
        %v2790 = vunpack.c.l.b16 %v2630
        %v2791 = vunpack.c.l.b16 %v2631
        %v2792 = vunpack.c.l.b16 %v2632
        %v2793 = vunpack.c.l.b16 %v2633
        %v2794 = vunpack.c.l.b16 %v2634
        %v2795 = vunpack.c.l.b16 %v2635
        %v2796 = vunpack.c.l.b16 %v2636
        %v2797 = vunpack.c.l.b16 %v2637
        %v2798 = vpack.c.b16 %v2719, %v2718
        %v2799 = vpack.c.b16 %v2721, %v2720
        %v2800 = vpack.c.b16 %v2723, %v2722
        %v2801 = vpack.c.b16 %v2725, %v2724
        %v2802 = vpack.c.b16 %v2727, %v2726
        %v2803 = vpack.c.b16 %v2729, %v2728
        %v2804 = vpack.c.b16 %v2731, %v2730
        %v2805 = vpack.c.b16 %v2733, %v2732
        %v2806 = vpack.c.b16 %v2735, %v2734
        %v2807 = vpack.c.b16 %v2737, %v2736
        %v2808 = vpack.c.b16 %v2739, %v2738
        %v2809 = vpack.c.b16 %v2741, %v2740
        %v2810 = vpack.c.b16 %v2743, %v2742
        %v2811 = vpack.c.b16 %v2745, %v2744
        %v2812 = vpack.c.b16 %v2747, %v2746
        %v2813 = vpack.c.b16 %v2749, %v2748
        %v2814 = vpack.c.b16 %v2751, %v2750
        %v2815 = vpack.c.b16 %v2753, %v2752
        %v2816 = vpack.c.b16 %v2755, %v2754
        %v2817 = vpack.c.b16 %v2757, %v2756
        %v2818 = vpack.c.b16 %v2759, %v2758
        %v2819 = vpack.c.b16 %v2761, %v2760
        %v2820 = vpack.c.b16 %v2763, %v2762
        %v2821 = vpack.c.b16 %v2765, %v2764
        %v2822 = vpack.c.b16 %v2767, %v2766
        %v2823 = vpack.c.b16 %v2769, %v2768
        %v2824 = vpack.c.b16 %v2771, %v2770
        %v2825 = vpack.c.b16 %v2773, %v2772
        %v2826 = vpack.c.b16 %v2775, %v2774
        %v2827 = vpack.c.b16 %v2777, %v2776
        %v2828 = vpack.c.b16 %v2779, %v2778
        %v2829 = vpack.c.b16 %v2781, %v2780
        %v2830 = vpack.c.b16 %v2783, %v2782
        %v2831 = vpack.c.b16 %v2785, %v2784
        %v2832 = vpack.c.b16 %v2787, %v2786
        %v2833 = vpack.c.b16 %v2789, %v2788
        %v2834 = vpack.c.b16 %v2791, %v2790
        %v2835 = vpack.c.b16 %v2793, %v2792
        %v2836 = vpack.c.b16 %v2795, %v2794
        %v2837 = vpack.c.b16 %v2797, %v2796
        %2878 = vmatprep.subr.bf16.mxu0 0
        %2879 = vmatpush1.bf16.msra.mxu0 %v2798
        %2880 = vmatprep.subr.bf16.mxu0 0
        %2881 = vmatpush1.bf16.msra.mxu0 %v2799
        %2882 = vmatprep.subr.bf16.mxu0 0
        %2883 = vmatpush1.bf16.msra.mxu0 %v2800
        %2884 = vmatprep.subr.bf16.mxu0 0
        %2885 = vmatpush1.bf16.msra.mxu0 %v2801
        %2886 = vmatprep.subr.bf16.mxu0 0
        %2887 = vmatpush1.bf16.msra.mxu0 %v2802
        %2888 = vmatprep.subr.bf16.mxu0 0
        %2889 = vmatpush1.bf16.msra.mxu0 %v2803
        %2890 = vmatprep.subr.bf16.mxu0 0
        %2891 = vmatpush1.bf16.msra.mxu0 %v2804
        %2892 = vmatprep.subr.bf16.mxu0 0
        %2893 = vmatpush1.bf16.msra.mxu0 %v2805
        %2894 = vmatprep.subr.bf16.mxu0 0
        %2895 = vmatpush1.bf16.msra.mxu0 %v2806
        %2896 = vmatprep.subr.bf16.mxu0 0
        %2897 = vmatpush1.bf16.msra.mxu0 %v2807
        %2898 = vmatprep.subr.bf16.mxu0 0
        %2899 = vmatpush1.bf16.msra.mxu0 %v2808
        %2900 = vmatprep.subr.bf16.mxu0 0
        %2901 = vmatpush1.bf16.msra.mxu0 %v2809
        %2902 = vmatprep.subr.bf16.mxu0 0
        %2903 = vmatpush1.bf16.msra.mxu0 %v2810
        %2904 = vmatprep.subr.bf16.mxu0 0
        %2905 = vmatpush1.bf16.msra.mxu0 %v2811
        %2906 = vmatprep.subr.bf16.mxu0 0
        %2907 = vmatpush1.bf16.msra.mxu0 %v2812
        %2908 = vmatprep.subr.bf16.mxu0 0
        %2909 = vmatpush1.bf16.msra.mxu0 %v2813
        %2910 = vmatprep.mubr.bf16.mxu0 %v2553
        %2911 = vmatmul.mubr.bf16.gmra.mrb[0].mxu0 %v2552
        %v2912 = vpop.f32.mrb[0].mxu0
        %v2913 = vadd.f32 0.0, %v2912
        %v2914 = vpop.f32.mrb[0].mxu0
        %v2915 = vpop.f32.mrb[0].mxu0
        %v2916 = vadd.f32 0.0, %v2915
        %v2917 = vpop.f32.mrb[0].mxu0
        %2918 = vdwg.mxu0
        %2919 = vmatprep.subr.bf16.mxu0 0
        %2920 = vmatpush1.bf16.msra.mxu0 %v2814
        %2921 = vmatprep.subr.bf16.mxu0 0
        %2922 = vmatpush1.bf16.msra.mxu0 %v2815
        %2923 = vmatprep.subr.bf16.mxu0 0
        %2924 = vmatpush1.bf16.msra.mxu0 %v2816
        %2925 = vmatprep.subr.bf16.mxu0 0
        %2926 = vmatpush1.bf16.msra.mxu0 %v2817
        %2927 = vmatprep.subr.bf16.mxu0 0
        %2928 = vmatpush1.bf16.msra.mxu0 %v2818
        %2929 = vmatprep.subr.bf16.mxu0 0
        %2930 = vmatpush1.bf16.msra.mxu0 %v2819
        %2931 = vmatprep.subr.bf16.mxu0 0
        %2932 = vmatpush1.bf16.msra.mxu0 %v2820
        %2933 = vmatprep.subr.bf16.mxu0 0
        %2934 = vmatpush1.bf16.msra.mxu0 %v2821
        %2935 = vmatprep.subr.bf16.mxu0 0
        %2936 = vmatpush1.bf16.msra.mxu0 %v2822
        %2937 = vmatprep.subr.bf16.mxu0 0
        %2938 = vmatpush1.bf16.msra.mxu0 %v2823
        %2939 = vmatprep.subr.bf16.mxu0 0
        %2940 = vmatpush1.bf16.msra.mxu0 %v2824
        %2941 = vmatprep.subr.bf16.mxu0 0
        %2942 = vmatpush1.bf16.msra.mxu0 %v2825
        %2943 = vmatprep.subr.bf16.mxu0 0
        %2944 = vmatpush1.bf16.msra.mxu0 %v2826
        %2945 = vmatprep.subr.bf16.mxu0 0
        %2946 = vmatpush1.bf16.msra.mxu0 %v2827
        %2947 = vmatprep.subr.bf16.mxu0 0
        %2948 = vmatpush1.bf16.msra.mxu0 %v2828
        %2949 = vmatprep.subr.bf16.mxu0 0
        %2950 = vmatpush1.bf16.msra.mxu0 %v2829
        %2951 = vmatprep.mubr.bf16.mxu0 %v2555
        %2952 = vmatmul.mubr.bf16.gmra.mrb[0].mxu0 %v2554
        %v2953 = vpop.f32.mrb[0].mxu0
        %v2954 = vadd.f32 %v2913, %v2953
        %v2955 = vpop.f32.mrb[0].mxu0
        %v2956 = vpop.f32.mrb[0].mxu0
        %v2957 = vadd.f32 %v2916, %v2956
        %v2958 = vpop.f32.mrb[0].mxu0
        %2959 = vdwg.mxu0
        %2960 = vmatprep.subr.bf16.mxu0 0
        %2961 = vmatpush1.bf16.msra.mxu0 %v2830
        %2962 = vmatprep.subr.bf16.mxu0 0
        %2963 = vmatpush1.bf16.msra.mxu0 %v2831
        %2964 = vmatprep.subr.bf16.mxu0 0
        %2965 = vmatpush1.bf16.msra.mxu0 %v2832
        %2966 = vmatprep.subr.bf16.mxu0 0
        %2967 = vmatpush1.bf16.msra.mxu0 %v2833
        %2968 = vmatprep.subr.bf16.mxu0 0
        %2969 = vmatpush1.bf16.msra.mxu0 %v2834
        %2970 = vmatprep.subr.bf16.mxu0 0
        %2971 = vmatpush1.bf16.msra.mxu0 %v2835
        %2972 = vmatprep.subr.bf16.mxu0 0
        %2973 = vmatpush1.bf16.msra.mxu0 %v2836
        %2974 = vmatprep.subr.bf16.mxu0 0
        %2975 = vmatpush1.bf16.msra.mxu0 %v2837
        %2976 = vmatprep.subr.bf16.mxu0 0
        %2977 = vmatpush1.bf16.msra.mxu0 0
        %2978 = vmatprep.subr.bf16.mxu0 0
        %2979 = vmatpush1.bf16.msra.mxu0 0
        %2980 = vmatprep.subr.bf16.mxu0 0
        %2981 = vmatpush1.bf16.msra.mxu0 0
        %2982 = vmatprep.subr.bf16.mxu0 0
        %2983 = vmatpush1.bf16.msra.mxu0 0
        %2984 = vmatprep.subr.bf16.mxu0 0
        %2985 = vmatpush1.bf16.msra.mxu0 0
        %2986 = vmatprep.subr.bf16.mxu0 0
        %2987 = vmatpush1.bf16.msra.mxu0 0
        %2988 = vmatprep.subr.bf16.mxu0 0
        %2989 = vmatpush1.bf16.msra.mxu0 0
        %2990 = vmatprep.subr.bf16.mxu0 0
        %2991 = vmatpush1.bf16.msra.mxu0 0
        %2992 = vmatprep.mubr.bf16.mxu0 0
        %2993 = vmatmul.mubr.bf16.gmra.mrb[0].mxu0 %v2556
        %v2994 = vpop.f32.mrb[0].mxu0
        %v2995 = vadd.f32 %v2954, %v2994
        %v2996 = vpop.f32.mrb[0].mxu0
        %v2997 = vpop.f32.mrb[0].mxu0
        %v2998 = vadd.f32 %v2957, %v2997
        %v2999 = vpop.f32.mrb[0].mxu0
        %3000 = vdwg.mxu0
        %v3001 = vld [vmem:[%s4 + $0x4] sm:$0x1]
        %v3002 = vlaneseq
        %v3003 = vshrl.u32 %v3002, 7
        %v3004 = vsub.s32 0, %v3003
        %v3005 = vrot.slane %v3001, %v3004
        %v3006 = vmul.f32 %v2995, %v3005
        %v3007 = vmul.f32 %v2998, %v3005
        %v3008 = vld [vmem:[%s5 + $0x4] sm:$0x1]
        %v3009 = vlaneseq
        %v3010 = vshrl.u32 %v3009, 7
        %v3011 = vsub.s32 0, %v3010
        %v3012 = vrot.slane %v3008, %v3011
        %v3013 = vadd.f32 %v3006, %v3012
        %v3014 = vadd.f32 %v3007, %v3012
        %v3015 = vld [vmem:[%s6 + $0x4] sm:$0x1]
        %vm3016 = vcmp.ge.f32.partialorder %v3013, 0.0
        %vm3017 = vcmp.ge.f32.partialorder %v3014, 0.0
        %v3018 = vlaneseq
        %v3019 = vshrl.u32 %v3018, 7
        %v3020 = vsub.s32 0, %v3019
        %v3021 = vrot.slane %v3015, %v3020
        %v3022 = vmul.f32 %v3021, %v3013
        %v3023 = vmul.f32 %v3021, %v3014
        %v3024 = vsel %vm3016, %v3013, %v3022
        %v3025 = vsel %vm3017, %v3014, %v3023
        %vm3026 = vcmp.eq.s32.totalorder %v1073, 0
        %vm3027 = vcmp.eq.s32.totalorder %v1074, 0
        %v3028 = vsel %vm3026, %v3024, 0.0
        %v3029 = vsel %vm3027, %v3025, 0.0
        %3030 = vst [vmem:[%s1063] ss:$2 sm:$0xff] %v3028
        %3031 = vst [vmem:[%s1065] ss:$2 sm:$0x3] %v3029
        %vm3032 = vcmp.eq.s32.totalorder %v1073, 1
        %vm3033 = vcmp.eq.s32.totalorder %v1074, 1
        %v3034 = vsel %vm3032, %v3024, 0.0
        %v3035 = vsel %vm3033, %v3025, 0.0
        %3036 = vst [vmem:[%s1067] ss:$2 sm:$0xff] %v3034
        %3037 = vst [vmem:[%s1069] ss:$2 sm:$0x3] %v3035
        %v3038 = vld [vmem:[#allocation2] sm:$0xff]
        %v3039 = vld [vmem:[#allocation2 + $0x8] sm:$0xff]
        %v3040 = vld [vmem:[#allocation2 + $0x10] sm:$0xf]
        %v3041 = vld [vmem:[#allocation2 + $0x1] sm:$0xff]
        %v3042 = vld [vmem:[#allocation2 + $0x9] sm:$0xff]
        %v3043 = vld [vmem:[#allocation2 + $0x11] sm:$0xf]
        %v3044 = vld [vmem:[#allocation2 + $0x2] sm:$0xff]
        %v3045 = vld [vmem:[#allocation2 + $0xa] sm:$0xff]
        %v3046 = vld [vmem:[#allocation2 + $0x12] sm:$0xf]
        %v3047 = vld [vmem:[#allocation2 + $0x3] sm:$0xff]
        %v3048 = vld [vmem:[#allocation2 + $0xb] sm:$0xff]
        %v3049 = vld [vmem:[#allocation2 + $0x13] sm:$0xf]
        %v3050 = vld [vmem:[#allocation2 + $0x4] sm:$0xff]
        %v3051 = vld [vmem:[#allocation2 + $0xc] sm:$0xff]
        %v3052 = vld [vmem:[#allocation2 + $0x14] sm:$0xf]
        %v3053 = vpack.c.bf16 %v3039, %v3038
        %v3054 = vpack.c.bf16 %v3042, %v3041
        %v3055 = vpack.c.bf16 %v3045, %v3044
        %v3056 = vpack.c.bf16 %v3048, %v3047
        %v3057 = vpack.c.bf16 %v3051, %v3050
        %v3058 = vpack.c.bf16 %v3040, %v3040
        %v3059 = vpack.c.bf16 %v3043, %v3043
        %v3060 = vpack.c.bf16 %v3046, %v3046
        %v3061 = vpack.c.bf16 %v3049, %v3049
        %v3062 = vpack.c.bf16 %v3052, %v3052
        %s3063 = scalar_lea.vmem [#allocation5], 1600
        %v3064 = vld [vmem:[%s3063] sm:$0xf]
        %v3065 = vld [vmem:[%s3063 + $0x4] sm:$0xf]
        %v3066 = vld [vmem:[%s3063 + $0x8] sm:$0xf]
        %v3067 = vld [vmem:[%s3063 + $0xc] sm:$0xf]
        %v3068 = vld [vmem:[%s3063 + $0x10] sm:$0xf]
        %v3069 = vld [vmem:[%s3063 + $0x14] sm:$0xf]
        %v3070 = vld [vmem:[%s3063 + $0x18] sm:$0xf]
        %v3071 = vld [vmem:[%s3063 + $0x1c] sm:$0xf]
        %v3072 = vld [vmem:[%s3063 + $0x20] sm:$0xf]
        %v3073 = vld [vmem:[%s3063 + $0x24] sm:$0xf]
        %v3074 = vld [vmem:[%s3063 + $0x28] sm:$0xf]
        %v3075 = vld [vmem:[%s3063 + $0x2c] sm:$0xf]
        %v3076 = vld [vmem:[%s3063 + $0x30] sm:$0xf]
        %v3077 = vld [vmem:[%s3063 + $0x34] sm:$0xf]
        %v3078 = vld [vmem:[%s3063 + $0x38] sm:$0xf]
        %v3079 = vld [vmem:[%s3063 + $0x3c] sm:$0xf]
        %v3080 = vld [vmem:[%s3063 + $0x40] sm:$0xf]
        %v3081 = vld [vmem:[%s3063 + $0x44] sm:$0xf]
        %v3082 = vld [vmem:[%s3063 + $0x48] sm:$0xf]
        %v3083 = vld [vmem:[%s3063 + $0x4c] sm:$0xf]
        %v3084 = vld [vmem:[%s3063 + $0x50] sm:$0xf]
        %v3085 = vld [vmem:[%s3063 + $0x54] sm:$0xf]
        %v3086 = vld [vmem:[%s3063 + $0x58] sm:$0xf]
        %v3087 = vld [vmem:[%s3063 + $0x5c] sm:$0xf]
        %v3088 = vld [vmem:[%s3063 + $0x60] sm:$0xf]
        %v3089 = vld [vmem:[%s3063 + $0x64] sm:$0xf]
        %v3090 = vld [vmem:[%s3063 + $0x68] sm:$0xf]
        %v3091 = vld [vmem:[%s3063 + $0x6c] sm:$0xf]
        %v3092 = vld [vmem:[%s3063 + $0x70] sm:$0xf]
        %v3093 = vld [vmem:[%s3063 + $0x74] sm:$0xf]
        %v3094 = vld [vmem:[%s3063 + $0x78] sm:$0xf]
        %v3095 = vld [vmem:[%s3063 + $0x7c] sm:$0xf]
        %v3096 = vld [vmem:[%s3063 + $0x80] sm:$0xf]
        %v3097 = vld [vmem:[%s3063 + $0x84] sm:$0xf]
        %v3098 = vld [vmem:[%s3063 + $0x88] sm:$0xf]
        %v3099 = vld [vmem:[%s3063 + $0x8c] sm:$0xf]
        %v3100 = vld [vmem:[%s3063 + $0x90] sm:$0xf]
        %v3101 = vld [vmem:[%s3063 + $0x94] sm:$0xf]
        %v3102 = vld [vmem:[%s3063 + $0x98] sm:$0xf]
        %v3103 = vld [vmem:[%s3063 + $0x9c] sm:$0xf]
        %v3104 = vld [vmem:[%s3063 + $0xa0] sm:$0xf]
        %v3105 = vld [vmem:[%s3063 + $0xa4] sm:$0xf]
        %v3106 = vld [vmem:[%s3063 + $0xa8] sm:$0xf]
        %v3107 = vld [vmem:[%s3063 + $0xac] sm:$0xf]
        %v3108 = vld [vmem:[%s3063 + $0xb0] sm:$0xf]
        %v3109 = vld [vmem:[%s3063 + $0xb4] sm:$0xf]
        %v3110 = vld [vmem:[%s3063 + $0xb8] sm:$0xf]
        %v3111 = vld [vmem:[%s3063 + $0xbc] sm:$0xf]
        %v3112 = vld [vmem:[%s3063 + $0xc0] sm:$0xf]
        %v3113 = vld [vmem:[%s3063 + $0xc4] sm:$0xf]
        %v3114 = vld [vmem:[%s3063 + $0xc8] sm:$0xf]
        %v3115 = vld [vmem:[%s3063 + $0xcc] sm:$0xf]
        %v3116 = vld [vmem:[%s3063 + $0xd0] sm:$0xf]
        %v3117 = vld [vmem:[%s3063 + $0xd4] sm:$0xf]
        %v3118 = vld [vmem:[%s3063 + $0xd8] sm:$0xf]
        %v3119 = vld [vmem:[%s3063 + $0xdc] sm:$0xf]
        %v3120 = vld [vmem:[%s3063 + $0xe0] sm:$0xf]
        %v3121 = vld [vmem:[%s3063 + $0xe4] sm:$0xf]
        %v3122 = vld [vmem:[%s3063 + $0xe8] sm:$0xf]
        %v3123 = vld [vmem:[%s3063 + $0xec] sm:$0xf]
        %v3124 = vld [vmem:[%s3063 + $0xf0] sm:$0xf]
        %v3125 = vld [vmem:[%s3063 + $0xf4] sm:$0xf]
        %v3126 = vld [vmem:[%s3063 + $0xf8] sm:$0xf]
        %v3127 = vld [vmem:[%s3063 + $0xfc] sm:$0xf]
        %v3128 = vld [vmem:[%s3063 + $0x100] sm:$0xf]
        %v3129 = vld [vmem:[%s3063 + $0x104] sm:$0xf]
        %v3130 = vld [vmem:[%s3063 + $0x108] sm:$0xf]
        %v3131 = vld [vmem:[%s3063 + $0x10c] sm:$0xf]
        %v3132 = vld [vmem:[%s3063 + $0x110] sm:$0xf]
        %v3133 = vld [vmem:[%s3063 + $0x114] sm:$0xf]
        %v3134 = vld [vmem:[%s3063 + $0x118] sm:$0xf]
        %v3135 = vld [vmem:[%s3063 + $0x11c] sm:$0xf]
        %v3136 = vld [vmem:[%s3063 + $0x120] sm:$0xf]
        %v3137 = vld [vmem:[%s3063 + $0x124] sm:$0xf]
        %v3138 = vld [vmem:[%s3063 + $0x128] sm:$0xf]
        %v3139 = vld [vmem:[%s3063 + $0x12c] sm:$0xf]
        %v3140 = vld [vmem:[%s3063 + $0x130] sm:$0xf]
        %v3141 = vld [vmem:[%s3063 + $0x134] sm:$0xf]
        %v3142 = vld [vmem:[%s3063 + $0x138] sm:$0xf]
        %v3143 = vld [vmem:[%s3063 + $0x13c] sm:$0xf]
        %v3224 = vunpack.c.l.b16 %v3064
        %v3225 = vunpack.c.l.b16 %v3065
        %v3226 = vunpack.c.l.b16 %v3066
        %v3227 = vunpack.c.l.b16 %v3067
        %v3228 = vunpack.c.l.b16 %v3068
        %v3229 = vunpack.c.l.b16 %v3069
        %v3230 = vunpack.c.l.b16 %v3070
        %v3231 = vunpack.c.l.b16 %v3071
        %v3232 = vunpack.c.l.b16 %v3072
        %v3233 = vunpack.c.l.b16 %v3073
        %v3234 = vunpack.c.l.b16 %v3074
        %v3235 = vunpack.c.l.b16 %v3075
        %v3236 = vunpack.c.l.b16 %v3076
        %v3237 = vunpack.c.l.b16 %v3077
        %v3238 = vunpack.c.l.b16 %v3078
        %v3239 = vunpack.c.l.b16 %v3079
        %v3240 = vunpack.c.l.b16 %v3080
        %v3241 = vunpack.c.l.b16 %v3081
        %v3242 = vunpack.c.l.b16 %v3082
        %v3243 = vunpack.c.l.b16 %v3083
        %v3244 = vunpack.c.l.b16 %v3084
        %v3245 = vunpack.c.l.b16 %v3085
        %v3246 = vunpack.c.l.b16 %v3086
        %v3247 = vunpack.c.l.b16 %v3087
        %v3248 = vunpack.c.l.b16 %v3088
        %v3249 = vunpack.c.l.b16 %v3089
        %v3250 = vunpack.c.l.b16 %v3090
        %v3251 = vunpack.c.l.b16 %v3091
        %v3252 = vunpack.c.l.b16 %v3092
        %v3253 = vunpack.c.l.b16 %v3093
        %v3254 = vunpack.c.l.b16 %v3094
        %v3255 = vunpack.c.l.b16 %v3095
        %v3256 = vunpack.c.l.b16 %v3096
        %v3257 = vunpack.c.l.b16 %v3097
        %v3258 = vunpack.c.l.b16 %v3098
        %v3259 = vunpack.c.l.b16 %v3099
        %v3260 = vunpack.c.l.b16 %v3100
        %v3261 = vunpack.c.l.b16 %v3101
        %v3262 = vunpack.c.l.b16 %v3102
        %v3263 = vunpack.c.l.b16 %v3103
        %v3264 = vunpack.c.l.b16 %v3104
        %v3265 = vunpack.c.l.b16 %v3105
        %v3266 = vunpack.c.l.b16 %v3106
        %v3267 = vunpack.c.l.b16 %v3107
        %v3268 = vunpack.c.l.b16 %v3108
        %v3269 = vunpack.c.l.b16 %v3109
        %v3270 = vunpack.c.l.b16 %v3110
        %v3271 = vunpack.c.l.b16 %v3111
        %v3272 = vunpack.c.l.b16 %v3112
        %v3273 = vunpack.c.l.b16 %v3113
        %v3274 = vunpack.c.l.b16 %v3114
        %v3275 = vunpack.c.l.b16 %v3115
        %v3276 = vunpack.c.l.b16 %v3116
        %v3277 = vunpack.c.l.b16 %v3117
        %v3278 = vunpack.c.l.b16 %v3118
        %v3279 = vunpack.c.l.b16 %v3119
        %v3280 = vunpack.c.l.b16 %v3120
        %v3281 = vunpack.c.l.b16 %v3121
        %v3282 = vunpack.c.l.b16 %v3122
        %v3283 = vunpack.c.l.b16 %v3123
        %v3284 = vunpack.c.l.b16 %v3124
        %v3285 = vunpack.c.l.b16 %v3125
        %v3286 = vunpack.c.l.b16 %v3126
        %v3287 = vunpack.c.l.b16 %v3127
        %v3288 = vunpack.c.l.b16 %v3128
        %v3289 = vunpack.c.l.b16 %v3129
        %v3290 = vunpack.c.l.b16 %v3130
        %v3291 = vunpack.c.l.b16 %v3131
        %v3292 = vunpack.c.l.b16 %v3132
        %v3293 = vunpack.c.l.b16 %v3133
        %v3294 = vunpack.c.l.b16 %v3134
        %v3295 = vunpack.c.l.b16 %v3135
        %v3296 = vunpack.c.l.b16 %v3136
        %v3297 = vunpack.c.l.b16 %v3137
        %v3298 = vunpack.c.l.b16 %v3138
        %v3299 = vunpack.c.l.b16 %v3139
        %v3300 = vunpack.c.l.b16 %v3140
        %v3301 = vunpack.c.l.b16 %v3141
        %v3302 = vunpack.c.l.b16 %v3142
        %v3303 = vunpack.c.l.b16 %v3143
        %v3304 = vpack.c.b16 %v3225, %v3224
        %v3305 = vpack.c.b16 %v3227, %v3226
        %v3306 = vpack.c.b16 %v3229, %v3228
        %v3307 = vpack.c.b16 %v3231, %v3230
        %v3308 = vpack.c.b16 %v3233, %v3232
        %v3309 = vpack.c.b16 %v3235, %v3234
        %v3310 = vpack.c.b16 %v3237, %v3236
        %v3311 = vpack.c.b16 %v3239, %v3238
        %v3312 = vpack.c.b16 %v3241, %v3240
        %v3313 = vpack.c.b16 %v3243, %v3242
        %v3314 = vpack.c.b16 %v3245, %v3244
        %v3315 = vpack.c.b16 %v3247, %v3246
        %v3316 = vpack.c.b16 %v3249, %v3248
        %v3317 = vpack.c.b16 %v3251, %v3250
        %v3318 = vpack.c.b16 %v3253, %v3252
        %v3319 = vpack.c.b16 %v3255, %v3254
        %v3320 = vpack.c.b16 %v3257, %v3256
        %v3321 = vpack.c.b16 %v3259, %v3258
        %v3322 = vpack.c.b16 %v3261, %v3260
        %v3323 = vpack.c.b16 %v3263, %v3262
        %v3324 = vpack.c.b16 %v3265, %v3264
        %v3325 = vpack.c.b16 %v3267, %v3266
        %v3326 = vpack.c.b16 %v3269, %v3268
        %v3327 = vpack.c.b16 %v3271, %v3270
        %v3328 = vpack.c.b16 %v3273, %v3272
        %v3329 = vpack.c.b16 %v3275, %v3274
        %v3330 = vpack.c.b16 %v3277, %v3276
        %v3331 = vpack.c.b16 %v3279, %v3278
        %v3332 = vpack.c.b16 %v3281, %v3280
        %v3333 = vpack.c.b16 %v3283, %v3282
        %v3334 = vpack.c.b16 %v3285, %v3284
        %v3335 = vpack.c.b16 %v3287, %v3286
        %v3336 = vpack.c.b16 %v3289, %v3288
        %v3337 = vpack.c.b16 %v3291, %v3290
        %v3338 = vpack.c.b16 %v3293, %v3292
        %v3339 = vpack.c.b16 %v3295, %v3294
        %v3340 = vpack.c.b16 %v3297, %v3296
        %v3341 = vpack.c.b16 %v3299, %v3298
        %v3342 = vpack.c.b16 %v3301, %v3300
        %v3343 = vpack.c.b16 %v3303, %v3302
        %3384 = vmatprep.subr.bf16.mxu0 0
        %3385 = vmatpush1.bf16.msra.mxu0 %v3304
        %3386 = vmatprep.subr.bf16.mxu0 0
        %3387 = vmatpush1.bf16.msra.mxu0 %v3305
        %3388 = vmatprep.subr.bf16.mxu0 0
        %3389 = vmatpush1.bf16.msra.mxu0 %v3306
        %3390 = vmatprep.subr.bf16.mxu0 0
        %3391 = vmatpush1.bf16.msra.mxu0 %v3307
        %3392 = vmatprep.subr.bf16.mxu0 0
        %3393 = vmatpush1.bf16.msra.mxu0 %v3308
        %3394 = vmatprep.subr.bf16.mxu0 0
        %3395 = vmatpush1.bf16.msra.mxu0 %v3309
        %3396 = vmatprep.subr.bf16.mxu0 0
        %3397 = vmatpush1.bf16.msra.mxu0 %v3310
        %3398 = vmatprep.subr.bf16.mxu0 0
        %3399 = vmatpush1.bf16.msra.mxu0 %v3311
        %3400 = vmatprep.subr.bf16.mxu0 0
        %3401 = vmatpush1.bf16.msra.mxu0 %v3312
        %3402 = vmatprep.subr.bf16.mxu0 0
        %3403 = vmatpush1.bf16.msra.mxu0 %v3313
        %3404 = vmatprep.subr.bf16.mxu0 0
        %3405 = vmatpush1.bf16.msra.mxu0 %v3314
        %3406 = vmatprep.subr.bf16.mxu0 0
        %3407 = vmatpush1.bf16.msra.mxu0 %v3315
        %3408 = vmatprep.subr.bf16.mxu0 0
        %3409 = vmatpush1.bf16.msra.mxu0 %v3316
        %3410 = vmatprep.subr.bf16.mxu0 0
        %3411 = vmatpush1.bf16.msra.mxu0 %v3317
        %3412 = vmatprep.subr.bf16.mxu0 0
        %3413 = vmatpush1.bf16.msra.mxu0 %v3318
        %3414 = vmatprep.subr.bf16.mxu0 0
        %3415 = vmatpush1.bf16.msra.mxu0 %v3319
        %3416 = vmatprep.mubr.bf16.mxu0 %v3054
        %3417 = vmatmul.mubr.bf16.gmra.mrb[0].mxu0 %v3053
        %v3418 = vpop.f32.mrb[0].mxu0
        %v3419 = vadd.f32 0.0, %v3418
        %v3420 = vpop.f32.mrb[0].mxu0
        %v3421 = vpop.f32.mrb[0].mxu0
        %v3422 = vadd.f32 0.0, %v3421
        %v3423 = vpop.f32.mrb[0].mxu0
        %3424 = vmatprep.mubr.bf16.mxu0 %v3059
        %3425 = vmatmul.mubr.bf16.gmra.mrb[0].mxu0 %v3058
        %v3426 = vpop.f32.mrb[0].mxu0
        %v3427 = vadd.f32 0.0, %v3426
        %v3428 = vpop.f32.mrb[0].mxu0
        %v3429 = vpop.f32.mrb[0].mxu0
        %v3430 = vpop.f32.mrb[0].mxu0
        %3431 = vdwg.mxu0
        %3432 = vmatprep.subr.bf16.mxu0 0
        %3433 = vmatpush1.bf16.msra.mxu0 %v3320
        %3434 = vmatprep.subr.bf16.mxu0 0
        %3435 = vmatpush1.bf16.msra.mxu0 %v3321
        %3436 = vmatprep.subr.bf16.mxu0 0
        %3437 = vmatpush1.bf16.msra.mxu0 %v3322
        %3438 = vmatprep.subr.bf16.mxu0 0
        %3439 = vmatpush1.bf16.msra.mxu0 %v3323
        %3440 = vmatprep.subr.bf16.mxu0 0
        %3441 = vmatpush1.bf16.msra.mxu0 %v3324
        %3442 = vmatprep.subr.bf16.mxu0 0
        %3443 = vmatpush1.bf16.msra.mxu0 %v3325
        %3444 = vmatprep.subr.bf16.mxu0 0
        %3445 = vmatpush1.bf16.msra.mxu0 %v3326
        %3446 = vmatprep.subr.bf16.mxu0 0
        %3447 = vmatpush1.bf16.msra.mxu0 %v3327
        %3448 = vmatprep.subr.bf16.mxu0 0
        %3449 = vmatpush1.bf16.msra.mxu0 %v3328
        %3450 = vmatprep.subr.bf16.mxu0 0
        %3451 = vmatpush1.bf16.msra.mxu0 %v3329
        %3452 = vmatprep.subr.bf16.mxu0 0
        %3453 = vmatpush1.bf16.msra.mxu0 %v3330
        %3454 = vmatprep.subr.bf16.mxu0 0
        %3455 = vmatpush1.bf16.msra.mxu0 %v3331
        %3456 = vmatprep.subr.bf16.mxu0 0
        %3457 = vmatpush1.bf16.msra.mxu0 %v3332
        %3458 = vmatprep.subr.bf16.mxu0 0
        %3459 = vmatpush1.bf16.msra.mxu0 %v3333
        %3460 = vmatprep.subr.bf16.mxu0 0
        %3461 = vmatpush1.bf16.msra.mxu0 %v3334
        %3462 = vmatprep.subr.bf16.mxu0 0
        %3463 = vmatpush1.bf16.msra.mxu0 %v3335
        %3464 = vmatprep.mubr.bf16.mxu0 %v3056
        %3465 = vmatmul.mubr.bf16.gmra.mrb[0].mxu0 %v3055
        %v3466 = vpop.f32.mrb[0].mxu0
        %v3467 = vadd.f32 %v3419, %v3466
        %v3468 = vpop.f32.mrb[0].mxu0
        %v3469 = vpop.f32.mrb[0].mxu0
        %v3470 = vadd.f32 %v3422, %v3469
        %v3471 = vpop.f32.mrb[0].mxu0
        %3472 = vmatprep.mubr.bf16.mxu0 %v3061
        %3473 = vmatmul.mubr.bf16.gmra.mrb[0].mxu0 %v3060
        %v3474 = vpop.f32.mrb[0].mxu0
        %v3475 = vadd.f32 %v3427, %v3474
        %v3476 = vpop.f32.mrb[0].mxu0
        %v3477 = vpop.f32.mrb[0].mxu0
        %v3478 = vpop.f32.mrb[0].mxu0
        %3479 = vdwg.mxu0
        %3480 = vmatprep.subr.bf16.mxu0 0
        %3481 = vmatpush1.bf16.msra.mxu0 %v3336
        %3482 = vmatprep.subr.bf16.mxu0 0
        %3483 = vmatpush1.bf16.msra.mxu0 %v3337
        %3484 = vmatprep.subr.bf16.mxu0 0
        %3485 = vmatpush1.bf16.msra.mxu0 %v3338
        %3486 = vmatprep.subr.bf16.mxu0 0
        %3487 = vmatpush1.bf16.msra.mxu0 %v3339
        %3488 = vmatprep.subr.bf16.mxu0 0
        %3489 = vmatpush1.bf16.msra.mxu0 %v3340
        %3490 = vmatprep.subr.bf16.mxu0 0
        %3491 = vmatpush1.bf16.msra.mxu0 %v3341
        %3492 = vmatprep.subr.bf16.mxu0 0
        %3493 = vmatpush1.bf16.msra.mxu0 %v3342
        %3494 = vmatprep.subr.bf16.mxu0 0
        %3495 = vmatpush1.bf16.msra.mxu0 %v3343
        %3496 = vmatprep.subr.bf16.mxu0 0
        %3497 = vmatpush1.bf16.msra.mxu0 0
        %3498 = vmatprep.subr.bf16.mxu0 0
        %3499 = vmatpush1.bf16.msra.mxu0 0
        %3500 = vmatprep.subr.bf16.mxu0 0
        %3501 = vmatpush1.bf16.msra.mxu0 0
        %3502 = vmatprep.subr.bf16.mxu0 0
        %3503 = vmatpush1.bf16.msra.mxu0 0
        %3504 = vmatprep.subr.bf16.mxu0 0
        %3505 = vmatpush1.bf16.msra.mxu0 0
        %3506 = vmatprep.subr.bf16.mxu0 0
        %3507 = vmatpush1.bf16.msra.mxu0 0
        %3508 = vmatprep.subr.bf16.mxu0 0
        %3509 = vmatpush1.bf16.msra.mxu0 0
        %3510 = vmatprep.subr.bf16.mxu0 0
        %3511 = vmatpush1.bf16.msra.mxu0 0
        %3512 = vmatprep.mubr.bf16.mxu0 0
        %3513 = vmatmul.mubr.bf16.gmra.mrb[0].mxu0 %v3057
        %v3514 = vpop.f32.mrb[0].mxu0
        %v3515 = vadd.f32 %v3467, %v3514
        %v3516 = vpop.f32.mrb[0].mxu0
        %v3517 = vpop.f32.mrb[0].mxu0
        %v3518 = vadd.f32 %v3470, %v3517
        %v3519 = vpop.f32.mrb[0].mxu0
        %3520 = vmatprep.mubr.bf16.mxu0 0
        %3521 = vmatmul.mubr.bf16.gmra.mrb[0].mxu0 %v3062
        %v3522 = vpop.f32.mrb[0].mxu0
        %v3523 = vadd.f32 %v3475, %v3522
        %v3524 = vpop.f32.mrb[0].mxu0
        %v3525 = vpop.f32.mrb[0].mxu0
        %v3526 = vpop.f32.mrb[0].mxu0
        %3527 = vdwg.mxu0
        %v3528 = vld [vmem:[%s4 + $0x5] sm:$0x1]
        %v3529 = vlaneseq
        %v3530 = vshrl.u32 %v3529, 7
        %v3531 = vsub.s32 0, %v3530
        %v3532 = vrot.slane %v3528, %v3531
        %v3533 = vmul.f32 %v3515, %v3532
        %v3534 = vmul.f32 %v3518, %v3532
        %v3535 = vmul.f32 %v3523, %v3532
        %v3536 = vld [vmem:[%s5 + $0x5] sm:$0x1]
        %v3537 = vlaneseq
        %v3538 = vshrl.u32 %v3537, 7
        %v3539 = vsub.s32 0, %v3538
        %v3540 = vrot.slane %v3536, %v3539
        %v3541 = vadd.f32 %v3533, %v3540
        %v3542 = vadd.f32 %v3534, %v3540
        %v3543 = vadd.f32 %v3535, %v3540
        %v3544 = vld [vmem:[%s6 + $0x5] sm:$0x1]
        %vm3545 = vcmp.ge.f32.partialorder %v3541, 0.0
        %vm3546 = vcmp.ge.f32.partialorder %v3542, 0.0
        %vm3547 = vcmp.ge.f32.partialorder %v3543, 0.0
        %v3548 = vlaneseq
        %v3549 = vshrl.u32 %v3548, 7
        %v3550 = vsub.s32 0, %v3549
        %v3551 = vrot.slane %v3544, %v3550
        %v3552 = vmul.f32 %v3551, %v3541
        %v3553 = vmul.f32 %v3551, %v3542
        %v3554 = vmul.f32 %v3551, %v3543
        %v3555 = vsel %vm3545, %v3541, %v3552
        %v3556 = vsel %vm3546, %v3542, %v3553
        %v3557 = vsel %vm3547, %v3543, %v3554
        %3558 = vst [vmem:[%s436] sm:$0xff] %v3555
        %3559 = vst [vmem:[%s436 + $0x8] sm:$0xff] %v3556
        %3560 = vst [vmem:[%s436 + $0x10] sm:$0xf] %v3557
        %v3562 = vrot.slane %v2052, 1
        %v3564 = vld [vmem:[%s8] sm:$0x1]
        %v3565 = vpack.c.bf16 %v2052, %v2052
        %v3566 = vpack.c.bf16 %v3562, %v3562
        %v3567 = vld [vmem:[#allocation8] sm:$0xf]
        %v3568 = vld [vmem:[#allocation8 + $0x4] sm:$0xf]
        %v3569 = vld [vmem:[#allocation8 + $0x8] sm:$0xf]
        %v3570 = vld [vmem:[#allocation8 + $0xc] sm:$0xf]
        %v3571 = vld [vmem:[#allocation8 + $0x10] sm:$0xf]
        %v3572 = vld [vmem:[#allocation8 + $0x14] sm:$0xf]
        %v3573 = vld [vmem:[#allocation8 + $0x18] sm:$0xf]
        %v3574 = vld [vmem:[#allocation8 + $0x1c] sm:$0xf]
        %v3575 = vld [vmem:[#allocation8 + $0x20] sm:$0xf]
        %v3576 = vld [vmem:[#allocation8 + $0x24] sm:$0xf]
        %v3577 = vld [vmem:[#allocation8 + $0x28] sm:$0xf]
        %v3578 = vld [vmem:[#allocation8 + $0x2c] sm:$0xf]
        %v3579 = vld [vmem:[#allocation8 + $0x30] sm:$0xf]
        %v3580 = vld [vmem:[#allocation8 + $0x34] sm:$0xf]
        %v3581 = vld [vmem:[#allocation8 + $0x38] sm:$0xf]
        %v3582 = vld [vmem:[#allocation8 + $0x3c] sm:$0xf]
        %v3583 = vld [vmem:[#allocation8 + $0x40] sm:$0xf]
        %v3584 = vld [vmem:[#allocation8 + $0x44] sm:$0xf]
        %v3585 = vld [vmem:[#allocation8 + $0x48] sm:$0xf]
        %v3586 = vld [vmem:[#allocation8 + $0x4c] sm:$0xf]
        %v3587 = vld [vmem:[#allocation8 + $0x50] sm:$0xf]
        %v3588 = vld [vmem:[#allocation8 + $0x54] sm:$0xf]
        %v3589 = vld [vmem:[#allocation8 + $0x58] sm:$0xf]
        %v3590 = vld [vmem:[#allocation8 + $0x5c] sm:$0xf]
        %v3591 = vld [vmem:[#allocation8 + $0x60] sm:$0xf]
        %v3592 = vld [vmem:[#allocation8 + $0x64] sm:$0xf]
        %v3593 = vld [vmem:[#allocation8 + $0x68] sm:$0xf]
        %v3594 = vld [vmem:[#allocation8 + $0x6c] sm:$0xf]
        %v3595 = vld [vmem:[#allocation8 + $0x70] sm:$0xf]
        %v3596 = vld [vmem:[#allocation8 + $0x74] sm:$0xf]
        %v3597 = vld [vmem:[#allocation8 + $0x78] sm:$0xf]
        %v3598 = vld [vmem:[#allocation8 + $0x7c] sm:$0xf]
        %v3631 = vunpack.c.l.b16 %v3567
        %v3632 = vunpack.c.l.b16 %v3568
        %v3633 = vunpack.c.l.b16 %v3569
        %v3634 = vunpack.c.l.b16 %v3570
        %v3635 = vunpack.c.l.b16 %v3571
        %v3636 = vunpack.c.l.b16 %v3572
        %v3637 = vunpack.c.l.b16 %v3573
        %v3638 = vunpack.c.l.b16 %v3574
        %v3639 = vunpack.c.l.b16 %v3575
        %v3640 = vunpack.c.l.b16 %v3576
        %v3641 = vunpack.c.l.b16 %v3577
        %v3642 = vunpack.c.l.b16 %v3578
        %v3643 = vunpack.c.l.b16 %v3579
        %v3644 = vunpack.c.l.b16 %v3580
        %v3645 = vunpack.c.l.b16 %v3581
        %v3646 = vunpack.c.l.b16 %v3582
        %v3647 = vunpack.c.l.b16 %v3583
        %v3648 = vunpack.c.l.b16 %v3584
        %v3649 = vunpack.c.l.b16 %v3585
        %v3650 = vunpack.c.l.b16 %v3586
        %v3651 = vunpack.c.l.b16 %v3587
        %v3652 = vunpack.c.l.b16 %v3588
        %v3653 = vunpack.c.l.b16 %v3589
        %v3654 = vunpack.c.l.b16 %v3590
        %v3655 = vunpack.c.l.b16 %v3591
        %v3656 = vunpack.c.l.b16 %v3592
        %v3657 = vunpack.c.l.b16 %v3593
        %v3658 = vunpack.c.l.b16 %v3594
        %v3659 = vunpack.c.l.b16 %v3595
        %v3660 = vunpack.c.l.b16 %v3596
        %v3661 = vunpack.c.l.b16 %v3597
        %v3662 = vunpack.c.l.b16 %v3598
        %v3663 = vpack.c.b16 %v3632, %v3631
        %v3664 = vpack.c.b16 %v3634, %v3633
        %v3665 = vpack.c.b16 %v3636, %v3635
        %v3666 = vpack.c.b16 %v3638, %v3637
        %v3667 = vpack.c.b16 %v3640, %v3639
        %v3668 = vpack.c.b16 %v3642, %v3641
        %v3669 = vpack.c.b16 %v3644, %v3643
        %v3670 = vpack.c.b16 %v3646, %v3645
        %v3671 = vpack.c.b16 %v3648, %v3647
        %v3672 = vpack.c.b16 %v3650, %v3649
        %v3673 = vpack.c.b16 %v3652, %v3651
        %v3674 = vpack.c.b16 %v3654, %v3653
        %v3675 = vpack.c.b16 %v3656, %v3655
        %v3676 = vpack.c.b16 %v3658, %v3657
        %v3677 = vpack.c.b16 %v3660, %v3659
        %v3678 = vpack.c.b16 %v3662, %v3661
        %3695 = vmatprep.subr.bf16.mxu0 0
        %3696 = vmatpush1.bf16.msra.mxu0 %v3663
        %3697 = vmatprep.subr.bf16.mxu0 0
        %3698 = vmatpush1.bf16.msra.mxu0 %v3664
        %3699 = vmatprep.subr.bf16.mxu0 0
        %3700 = vmatpush1.bf16.msra.mxu0 %v3665
        %3701 = vmatprep.subr.bf16.mxu0 0
        %3702 = vmatpush1.bf16.msra.mxu0 %v3666
        %3703 = vmatprep.subr.bf16.mxu0 0
        %3704 = vmatpush1.bf16.msra.mxu0 %v3667
        %3705 = vmatprep.subr.bf16.mxu0 0
        %3706 = vmatpush1.bf16.msra.mxu0 %v3668
        %3707 = vmatprep.subr.bf16.mxu0 0
        %3708 = vmatpush1.bf16.msra.mxu0 %v3669
        %3709 = vmatprep.subr.bf16.mxu0 0
        %3710 = vmatpush1.bf16.msra.mxu0 %v3670
        %3711 = vmatprep.subr.bf16.mxu0 0
        %3712 = vmatpush1.bf16.msra.mxu0 %v3671
        %3713 = vmatprep.subr.bf16.mxu0 0
        %3714 = vmatpush1.bf16.msra.mxu0 %v3672
        %3715 = vmatprep.subr.bf16.mxu0 0
        %3716 = vmatpush1.bf16.msra.mxu0 %v3673
        %3717 = vmatprep.subr.bf16.mxu0 0
        %3718 = vmatpush1.bf16.msra.mxu0 %v3674
        %3719 = vmatprep.subr.bf16.mxu0 0
        %3720 = vmatpush1.bf16.msra.mxu0 %v3675
        %3721 = vmatprep.subr.bf16.mxu0 0
        %3722 = vmatpush1.bf16.msra.mxu0 %v3676
        %3723 = vmatprep.subr.bf16.mxu0 0
        %3724 = vmatpush1.bf16.msra.mxu0 %v3677
        %3725 = vmatprep.subr.bf16.mxu0 0
        %3726 = vmatpush1.bf16.msra.mxu0 %v3678
        %3727 = vmatprep.mubr.bf16.mxu0 %v3566
        %3728 = vmatmul.mubr.bf16.gmra.mrb[0].mxu0 %v3565
        %v3729 = vpop.f32.mrb[0].mxu0
        %v3730 = vadd.f32 0.0, %v3729
        %v3731 = vpop.f32.mrb[0].mxu0
        %v3732 = vpop.f32.mrb[0].mxu0
        %v3733 = vpop.f32.mrb[0].mxu0
        %3734 = vdwg.mxu0
        %v3735 = vadd.f32 %v3564, %v3730
        %3736 = vst [vmem:[%s422] sm:$0x1] %v3735
        %p3737 = scmp.lt.s32.totalorder %s28, 1
        %s3738 = scalar_select %p3737, %s28, 1
        %s3739 = smul.addr %s3738, 2
        %s3740 = scalar_lea.vmem %s9, %s3739
        %p3741 = scmp.lt.s32.totalorder %s28, 1
        %s3742 = scalar_select %p3741, %s28, 1
        %s3743 = smul.addr %s3742, 3
        %s3744 = smul.addr %s3743, 8
        %s3745 = scalar_lea.vmem %s10, %s3744
        %s3746 = sand.u32 %s282, 1
        %s3747 = scalar_lea.sflag [#allocation7], %s3746
        %s3748 = sand.u32 %s282, 1
        %s3749 = scalar_lea.vmem [#allocation10], %s3748
        // Predicated region
        $region65: #{clustering_model_forward.1} parent=55 // pred_check
          %p3750 = pneg %p240
        $region66: #{clustering_model_forward.1} parent=55 // pred_check_branch
          %3752 = sbr.rel (%p3750) target = $region68
        $region67: #{clustering_model_forward.1} parent=55 // pred_region
          _
        $region68: #{clustering_model_forward.1} parent=55 // pred_fallthru
          _
        // Predicated region
        $region69: #{clustering_model_forward.1} parent=55 // pred_check
          %p3753 = pneg %p266
        $region70: #{clustering_model_forward.1} parent=55 // pred_check_branch
          %3755 = sbr.rel (%p3753) target = $region72
        $region71: #{clustering_model_forward.1} parent=55 // pred_region
          _
        $region72: #{clustering_model_forward.1} parent=55 // pred_fallthru
          _
        // Predicated region
        $region73: #{clustering_model_forward.1} parent=55 // pred_check
          %p3756 = pneg %p292
        $region74: #{clustering_model_forward.1} parent=55 // pred_check_branch
          %3758 = sbr.rel (%p3756) target = $region76
        $region75: #{clustering_model_forward.1} parent=55 // pred_region
          %s3760 = ssub.s32 16, 16
          %3761 = vsyncadd %s3747, %s3760
          %s3762 = smul.addr %s28, 16
          %s3763 = scalar_lea.hbm %s11, %s3762
          %s3765 = sshll.u32 %s3749, 4
          %s3766 = int_to_ptr.vmem [resolvable:$true] %s3765
          %3768 = dma.vmem_to_hbm [thread:$0]  %s3766, 16, %s3763, %s3747
        $region76: #{clustering_model_forward.1} parent=55 // pred_fallthru
          _
      $region56: #{clustering_model_forward.1} parent=5 // pred_fallthru
        _
      %p3769 = scmp.le.s32.totalorder 2, %s23
      // Predicated region
      $region77: #{clustering_model_forward.1} parent=5 // pred_check
        %p3770 = pneg %p3769
      $region78: #{clustering_model_forward.1} parent=5 // pred_check_branch
        %3772 = sbr.rel (%p3770) target = $region80
      $region79: #{clustering_model_forward.1} parent=5 // pred_region
        %s3773 = ssub.s32 %s23, 2
        // Predicated region
        $region81: #{clustering_model_forward.1} parent=79 // pred_check
          %p3774 = pneg %p246
        $region82: #{clustering_model_forward.1} parent=79 // pred_check_branch
          %3776 = sbr.rel (%p3774) target = $region84
        $region83: #{clustering_model_forward.1} parent=79 // pred_region
          %p3777 = scmp.lt.s32.totalorder %s29, 1
          %s3778 = scalar_select %p3777, %s29, 1
          %s3779 = smul.addr %s3778, 2
          %s3780 = scalar_lea.vmem %s9, %s3779
        $region84: #{clustering_model_forward.1} parent=79 // pred_fallthru
          _
        // Predicated region
        $region85: #{clustering_model_forward.1} parent=79 // pred_check
          %p3781 = pneg %p272
        $region86: #{clustering_model_forward.1} parent=79 // pred_check_branch
          %3783 = sbr.rel (%p3781) target = $region88
        $region87: #{clustering_model_forward.1} parent=79 // pred_region
          %p3784 = scmp.lt.s32.totalorder %s29, 1
          %s3785 = scalar_select %p3784, %s29, 1
          %s3786 = smul.addr %s3785, 3
          %s3787 = smul.addr %s3786, 8
          %s3788 = scalar_lea.vmem %s10, %s3787
        $region88: #{clustering_model_forward.1} parent=79 // pred_fallthru
          _
        // Predicated region
        $region89: #{clustering_model_forward.1} parent=79 // pred_check
          %p3789 = pneg %p298
        $region90: #{clustering_model_forward.1} parent=79 // pred_check_branch
          %3791 = sbr.rel (%p3789) target = $region92
        $region91: #{clustering_model_forward.1} parent=79 // pred_region
          %s3792 = sand.u32 %s283, 1
          %s3793 = scalar_lea.sflag [#allocation7], %s3792
          %s3794 = sand.u32 %s283, 1
          %s3795 = scalar_lea.vmem [#allocation10], %s3794
          %3796 = dma.done %s3793, 16
        $region92: #{clustering_model_forward.1} parent=79 // pred_fallthru
          _
      $region80: #{clustering_model_forward.1} parent=5 // pred_fallthru
        _
    $region6: #{clustering_model_forward.1} parent=1 // loop_footer
      %s27 = sadd.s32 1, %s23
    $region7: #{clustering_model_forward.1} parent=1 // loop_footer_branch
      %22 = sbr.rel target = $region3
    $region8: #{clustering_model_forward.1} parent=1 // loop_exit
      _
    %3797 = vsyncpa [#allocation6], 1
    %s3798 = scalar_lea.sflag [#allocation6], 1
    %3799 = vsyncpa %s3798, 1
    %3800 = vsyncpa [#allocation9], 1
    %3801 = vsyncpa [#allocation7], 1
    %s3802 = scalar_lea.sflag [#allocation7], 1
    %3803 = vsyncpa %s3802, 1

</llo_original>
